<compile_context>
chip_gen: v6e
topology: v6e:2x2x1
jax: 0.10.0
libtpu: 0.0.40
codegen_flags: <defaults>
</compile_context>

<pallas_src>
import numpy as np
import jax
import jax.numpy as jnp
from jax.experimental import pallas as pl
from jax.experimental.pallas import tpu as pltpu

# ---------------- configuration (scaled-down test sizes) ----------------
C_IN = 3          # input channels
C_MID = 32        # first conv output channels
C_FEAT = 64       # feature channels (real VGG: 512)
HIDDEN = 128      # classifier hidden width (real VGG: 4096)
NUM_CLASSES = 16  # (real VGG default: 1000)
POOL_HW = 7       # AdaptiveAvgPool2d((7, 7))

LANE = 128
NC_PAD = ((NUM_CLASSES + LANE - 1) // LANE) * LANE   # lane-dense logits width


def _vmem_limit_bytes():
    """Per-generation scoped-VMEM budget: ~3/4 of physical, capped at 96 MiB
    (v5e/v6e: 128 MiB physical, v7x: 64 MiB).  Falls back to 32 MiB."""
    try:
        cap = int(pltpu.get_tpu_info().vmem_capacity_bytes)
        return int(min(cap * 3 // 4, 96 * 1024 * 1024))
    except Exception:
        return 32 * 1024 * 1024


# ---------------- fused features kernel ----------------
def _features_kernel(x_ref, w1_ref, b1_ref, w2_ref, b2_ref, pool_ref,
                     o_ref, hp_ref):
    """Fused features path for ONE image (all intermediates stay in VMEM).

    x_ref:   (1, H+2, W+2, Cin)  f32; 1-px zero-padded, padded rows/cols in
                                  even-then-odd order so stride-2 conv1 taps
                                  are contiguous slices.
    w1_ref:  (9, Cin, Cmid)      f32 conv1 weights, tap-major (dy, dx)
    b1_ref:  (1, Cmid)           f32
    w2_ref:  (9, Cmid, Cfeat)    f32 conv2 weights, tap-major (dy, dx)
    b2_ref:  (1, Cfeat)          f32
    pool_ref:(49, H2*W2)         f32 adaptive-avg-pool matrix (kron(Ph, Pw))
    o_ref:   (1, 49, Cfeat)      bf16 pooled features, NHWC flatten order
    hp_ref:  (H2+2, W2+2, Cmid)  f32 VMEM scratch (conv2 halo canvas)
    """
    _, hpad, wpad, c_in = x_ref.shape
    oh, ow = (hpad - 2) // 2, (wpad - 2) // 2         # spatial after subsample
    n_even_h, n_even_w = hpad // 2, wpad // 2          # parity-split sizes
    c_mid = hp_ref.shape[-1]
    c_feat = o_ref.shape[-1]
    n_pool = o_ref.shape[1]

    x = x_ref[0]                                       # (H+2, W+2, Cin)

    # ---- conv1 (3x3, stride-2 subsample fused) + bias + ReLU -------------
    # 9 shifted accumulating dots (K = Cin); no im2col buffer, no channel pad.
    acc1 = jnp.zeros((oh * ow, c_mid), jnp.float32)
    for t in range(9):
        dy, dx = divmod(t, 3)
        rh = (dy % 2) * n_even_h + dy // 2             # parity-reordered start
        rw = (dx % 2) * n_even_w + dx // 2
        col = x[rh:rh + oh, rw:rw + ow, :].reshape(oh * ow, c_in)
        acc1 = acc1 + jnp.dot(col, w1_ref[t],
                              preferred_element_type=jnp.float32)
    h1 = jnp.maximum(acc1 + b1_ref[...], 0.0)          # (oh*ow, Cmid) f32

    # ---- conv2 halo canvas: in-VMEM zero pad (no wrapper-side jnp.pad) ----
    hp_ref[...] = jnp.zeros_like(hp_ref)
    hp_ref[1:oh + 1, 1:ow + 1, :] = h1.reshape(oh, ow, c_mid)
    canvas = hp_ref[...]                               # (oh+2, ow+2, Cmid)

    # ---- conv2 (3x3, stride 1) + bias + ReLU ------------------------------
    acc2 = jnp.zeros((oh * ow, c_feat), jnp.float32)
    for t in range(9):
        dy, dx = divmod(t, 3)
        col = canvas[dy:dy + oh, dx:dx + ow, :].reshape(oh * ow, c_mid)
        acc2 = acc2 + jnp.dot(col, w2_ref[t],
                              preferred_element_type=jnp.float32)
    feat = jnp.maximum(acc2 + b2_ref[...], 0.0)        # (oh*ow, Cfeat) f32

    # ---- AdaptiveAvgPool2d((7,7)) + NHWC flatten: one pooling matmul ------
    pooled = jnp.dot(pool_ref[...], feat, preferred_element_type=jnp.float32)
    o_ref[...] = pooled.reshape(1, n_pool, c_feat).astype(o_ref.dtype)


def features_fused(x_reord, w1, b1, w2, b2, pool_mat):
    """x_reord: (B, H+2, W+2, Cin) f32 padded + parity-reordered input."""
    B, hpad, wpad, c_in = x_reord.shape
    oh, ow = (hpad - 2) // 2, (wpad - 2) // 2
    c_mid = w1.shape[-1]
    c_feat = w2.shape[-1]
    n_pool = POOL_HW * POOL_HW
    flops = 2 * B * (oh * ow) * (9 * c_in * c_mid + 9 * c_mid * c_feat
                                 + n_pool * c_feat)
    bytes_accessed = (B * hpad * wpad * c_in * 4
                      + (9 * c_in * c_mid + 9 * c_mid * c_feat) * 4
                      + (c_mid + c_feat) * 4
                      + n_pool * oh * ow * 4
                      + B * n_pool * c_feat * 2)
    return pl.pallas_call(
        _features_kernel,
        out_shape=jax.ShapeDtypeStruct((B, n_pool, c_feat), jnp.bfloat16),
        grid=(B,),
        in_specs=[
            pl.BlockSpec((1, hpad, wpad, c_in), lambda b: (b, 0, 0, 0)),
            pl.BlockSpec((9, c_in, c_mid), lambda b: (0, 0, 0)),
            pl.BlockSpec((1, c_mid), lambda b: (0, 0)),
            pl.BlockSpec((9, c_mid, c_feat), lambda b: (0, 0, 0)),
            pl.BlockSpec((1, c_feat), lambda b: (0, 0)),
            pl.BlockSpec((n_pool, oh * ow), lambda b: (0, 0)),
        ],
        out_specs=pl.BlockSpec((1, n_pool, c_feat), lambda b: (b, 0, 0)),
        scratch_shapes=[pltpu.VMEM((oh + 2, ow + 2, c_mid), jnp.float32)],
        compiler_params=pltpu.CompilerParams(
            dimension_semantics=("parallel",),     # split images across TCs (v7x)
            vmem_limit_bytes=_vmem_limit_bytes(),
        ),
        cost_estimate=pl.CostEstimate(flops=flops, transcendentals=0,
                                      bytes_accessed=bytes_accessed),
    )(x_reord, w1, b1, w2, b2, pool_mat)


# ---------------- fused classifier kernel ----------------
def _classifier_kernel(x_ref, w1_ref, b1_ref, w2_ref, b2_ref, w3_ref, b3_ref,
                       o_ref):
    """fc1 -> ReLU -> Dropout(id) -> fc2 -> ReLU -> Dropout(id) -> fc3."""
    h = jnp.dot(x_ref[...], w1_ref[...],
                preferred_element_type=jnp.float32) + b1_ref[...]
    h = jnp.maximum(h, 0.0)
    # TODO(synk): nn.Dropout is identity at inference; training-mode stochastic
    # masking (pltpu.prng_*) not implemented.
    h = jnp.dot(h.astype(jnp.bfloat16), w2_ref[...],
                preferred_element_type=jnp.float32) + b2_ref[...]
    h = jnp.maximum(h, 0.0)
    o_ref[...] = jnp.dot(h.astype(jnp.bfloat16), w3_ref[...],
                         preferred_element_type=jnp.float32) + b3_ref[...]


def classifier(x_bf16, p):
    B, K = x_bf16.shape
    hid = p["fc2_w"].shape[0]
    ncp = p["fc3_w"].shape[1]
    flops = 2 * B * (K * hid + hid * hid + hid * ncp)
    bytes_accessed = (B * K * 2 + (K * hid + hid * hid + hid * ncp) * 2
                      + (2 * hid + ncp) * 4 + B * ncp * 4)
    return pl.pallas_call(
        _classifier_kernel,
        out_shape=jax.ShapeDtypeStruct((B, ncp), jnp.float32),
        grid=(1,),          # all weights fit VMEM outright -> no K-tiling
        in_specs=[
            pl.BlockSpec((B, K), lambda i: (0, 0)),
            pl.BlockSpec((K, hid), lambda i: (0, 0)),
            pl.BlockSpec((1, hid), lambda i: (0, 0)),
            pl.BlockSpec((hid, hid), lambda i: (0, 0)),
            pl.BlockSpec((1, hid), lambda i: (0, 0)),
            pl.BlockSpec((hid, ncp), lambda i: (0, 0)),
            pl.BlockSpec((1, ncp), lambda i: (0, 0)),
        ],
        out_specs=pl.BlockSpec((B, ncp), lambda i: (0, 0)),
        compiler_params=pltpu.CompilerParams(
            dimension_semantics=("arbitrary",),
            vmem_limit_bytes=_vmem_limit_bytes(),
        ),
        cost_estimate=pl.CostEstimate(flops=flops, transcendentals=0,
                                      bytes_accessed=bytes_accessed),
    )(x_bf16, p["fc1_w"], p["fc1_b"], p["fc2_w"], p["fc2_b"],
      p["fc3_w"], p["fc3_b"])


# ---------------- forward (tiny wrapper glue only on the raw input) ----------------
def _adaptive_pool_matrix(in_size, out_size):
    """Row i averages input rows [floor(i*in/out), ceil((i+1)*in/out))."""
    P = np.zeros((out_size, in_size), np.float32)
    for i in range(out_size):
        s = (i * in_size) // out_size
        e = -(-((i + 1) * in_size) // out_size)  # ceil
        P[i, s:e] = 1.0 / (e - s)
    return P


def vgg_dwt_forward(x_nchw, packed):
    B, _, H, W = x_nchw.shape
    assert H % 2 == 0 and W % 2 == 0
    oh, ow = H // 2, W // 2
    assert oh >= POOL_HW and ow >= POOL_HW

    # Input prep (one tiny fused XLA op on the raw (B, 3, H, W) input):
    # NCHW -> NHWC, 1-px zero pad, then reorder padded rows/cols into
    # even-then-odd order so the kernel's fused stride-2 conv1 taps are
    # contiguous VMEM slices.
    x = jnp.transpose(x_nchw, (0, 2, 3, 1)).astype(jnp.float32)
    x = jnp.pad(x, ((0, 0), (1, 1), (1, 1), (0, 0)))
    x = jnp.concatenate([x[:, 0::2], x[:, 1::2]], axis=1)
    x = jnp.concatenate([x[:, :, 0::2], x[:, :, 1::2]], axis=2)

    # AdaptiveAvgPool2d((7,7)) as a trace-time-constant (49, oh*ow) matrix,
    # fused into the features kernel epilogue.
    pool_mat = jnp.asarray(np.kron(_adaptive_pool_matrix(oh, POOL_HW),
                                   _adaptive_pool_matrix(ow, POOL_HW)))

    feat = features_fused(x, packed["conv1_w"], packed["conv1_b"],
                          packed["conv2_w"], packed["conv2_b"], pool_mat)

    # NHWC flatten (h, w, c); fc1 rows were permuted to match at pack time,
    # so this equals PyTorch's x.view(B, -1) on the NCHW tensor.
    flat = feat.reshape(B, POOL_HW * POOL_HW * C_FEAT)

    logits = classifier(flat, packed)
    return logits[:, :NUM_CLASSES]


# ---------------- params: PyTorch-equivalent init + one-time packing ----------------
def init_params(key):
    ks = jax.random.split(key, 5)
    # Conv2d: kaiming_normal_(mode='fan_out', nonlinearity='relu'); bias 0.
    conv1_w = jax.random.normal(ks[0], (C_MID, C_IN, 3, 3), jnp.float32) * np.sqrt(2.0 / (C_MID * 9))
    conv2_w = jax.random.normal(ks[1], (C_FEAT, C_MID, 3, 3), jnp.float32) * np.sqrt(2.0 / (C_FEAT * 9))
    flat = C_FEAT * POOL_HW * POOL_HW
    # Linear: normal(0, 0.01), bias 0; stored as (in, out) == x @ W + b with
    # fc1 rows in PyTorch's NCHW (c, h, w) flatten order.
    fc1_w = jax.random.normal(ks[2], (flat, HIDDEN), jnp.float32) * 0.01
    fc2_w = jax.random.normal(ks[3], (HIDDEN, HIDDEN), jnp.float32) * 0.01
    fc3_w = jax.random.normal(ks[4], (HIDDEN, NUM_CLASSES), jnp.float32) * 0.01
    return {
        "conv1_w": conv1_w, "conv1_b": jnp.zeros((C_MID,), jnp.float32),
        "conv2_w": conv2_w, "conv2_b": jnp.zeros((C_FEAT,), jnp.float32),
        "fc1_w": fc1_w, "fc1_b": jnp.zeros((HIDDEN,), jnp.float32),
        "fc2_w": fc2_w, "fc2_b": jnp.zeros((HIDDEN,), jnp.float32),
        "fc3_w": fc3_w, "fc3_b": jnp.zeros((NUM_CLASSES,), jnp.float32),
    }


def pack_params(p):
    """One-time packing (outside the jitted forward):
    * conv weights -> (9, Cin, Cout) tap-major (dy, dx), f32 (real channel
      counts; no 128-padding anywhere on the conv path),
    * fc1 rows permuted from NCHW (c,h,w) to the kernel's NHWC (h,w,c)
      flatten order (zero runtime transpose),
    * fc weights bf16, fc3 columns zero-padded to the 128-lane width."""
    def pack_conv(w_oihw, b):
        cout, cin, kh, kw = w_oihw.shape
        w = jnp.transpose(w_oihw, (2, 3, 1, 0)).reshape(kh * kw, cin, cout)
        return w.astype(jnp.float32), b.reshape(1, cout).astype(jnp.float32)

    c1w, c1b = pack_conv(p["conv1_w"], p["conv1_b"])
    c2w, c2b = pack_conv(p["conv2_w"], p["conv2_b"])

    f1 = p["fc1_w"].reshape(C_FEAT, POOL_HW, POOL_HW, HIDDEN)
    f1 = jnp.transpose(f1, (1, 2, 0, 3)).reshape(POOL_HW * POOL_HW * C_FEAT, HIDDEN)
    f3 = jnp.pad(p["fc3_w"], ((0, 0), (0, NC_PAD - NUM_CLASSES)))
    f3b = jnp.pad(p["fc3_b"], (0, NC_PAD - NUM_CLASSES)).reshape(1, NC_PAD)
    return {
        "conv1_w": c1w, "conv1_b": c1b,
        "conv2_w": c2w, "conv2_b": c2b,
        "fc1_w": f1.astype(jnp.bfloat16),
        "fc1_b": p["fc1_b"].reshape(1, HIDDEN).astype(jnp.float32),
        "fc2_w": p["fc2_w"].astype(jnp.bfloat16),
        "fc2_b": p["fc2_b"].reshape(1, HIDDEN).astype(jnp.float32),
        "fc3_w": f3.astype(jnp.bfloat16),
        "fc3_b": f3b.astype(jnp.float32),
    }


if __name__ == "__main__":
    key = jax.random.PRNGKey(0)
    k_params, k_x = jax.random.split(key)
    params = init_params(k_params)
    packed = pack_params(params)   # one-time packing, outside the jitted forward
    # Small NCHW input (PyTorch convention): batch=2, channels=3, spatial=16.
    x = jax.random.normal(k_x, (2, C_IN, 16, 16), jnp.float32)

    out = jax.jit(vgg_dwt_forward)(x, packed)
    out = jax.block_until_ready(out)
    assert out.shape == (2, NUM_CLASSES), out.shape
    assert bool(jnp.all(jnp.isfinite(out)))
    print("KERNEL_OK")
</pallas_src>

<mosaic_0001>
module attributes {stable_mosaic.version = 11 : i64} {
  func.func @_features_kernel(%arg0: i32, %arg1: memref<1x18x18x3xf32, #tpu.memory_space<vmem>>, %arg2: memref<9x3x32xf32, #tpu.memory_space<vmem>>, %arg3: memref<1x32xf32, #tpu.memory_space<vmem>>, %arg4: memref<9x32x64xf32, #tpu.memory_space<vmem>>, %arg5: memref<1x64xf32, #tpu.memory_space<vmem>>, %arg6: memref<49x64xf32, #tpu.memory_space<vmem>>, %arg7: memref<1x49x64xbf16, #tpu.memory_space<vmem>>, %arg8: memref<10x10x32xf32, #tpu.memory_space<vmem>>) attributes {dimension_semantics = [#tpu.dimension_semantics<parallel>], iteration_bounds = array<i64: 2>, scalar_prefetch = 0 : i64, scratch_operands = 1 : i64, tpu.core_type = #tpu.core_type<tc>, window_params = [{transform_indices = @transform_0, window_bounds = array<i64: 1, 18, 18, 3>}, {pipeline_mode = #tpu.pipeline_mode<synchronous>, transform_indices = @transform_1, window_bounds = array<i64: 9, 3, 32>}, {pipeline_mode = #tpu.pipeline_mode<synchronous>, transform_indices = @transform_2, window_bounds = array<i64: 1, 32>}, {pipeline_mode = #tpu.pipeline_mode<synchronous>, transform_indices = @transform_3, window_bounds = array<i64: 9, 32, 64>}, {pipeline_mode = #tpu.pipeline_mode<synchronous>, transform_indices = @transform_4, window_bounds = array<i64: 1, 64>}, {pipeline_mode = #tpu.pipeline_mode<synchronous>, transform_indices = @transform_5, window_bounds = array<i64: 49, 64>}, {transform_indices = @transform_6, window_bounds = array<i64: 1, 49, 64>}]} {
    %c0 = arith.constant 0 : index
    %c0_0 = arith.constant 0 : index
    %c0_1 = arith.constant 0 : index
    %c0_2 = arith.constant 0 : index
    %0 = vector.load %arg1[%c0, %c0_0, %c0_1, %c0_2] : memref<1x18x18x3xf32, #tpu.memory_space<vmem>>, vector<1x18x18x3xf32>
    %1 = vector.shape_cast %0 : vector<1x18x18x3xf32> to vector<18x18x3xf32>
    %cst = arith.constant 0.000000e+00 : f32
    %2 = vector.broadcast %cst : f32 to vector<64x32xf32>
    %3 = vector.extract_strided_slice %1 {offsets = [0, 0, 0], sizes = [8, 8, 3], strides = [1, 1, 1]} : vector<18x18x3xf32> to vector<8x8x3xf32>
    %4 = vector.shape_cast %3 : vector<8x8x3xf32> to vector<64x3xf32>
    %c0_3 = arith.constant 0 : index
    %c0_4 = arith.constant 0 : index
    %c0_5 = arith.constant 0 : index
    %5 = vector.load %arg2[%c0_3, %c0_4, %c0_5] : memref<9x3x32xf32, #tpu.memory_space<vmem>>, vector<1x3x32xf32>
    %6 = vector.shape_cast %5 : vector<1x3x32xf32> to vector<3x32xf32>
    %cst_6 = arith.constant dense<0.000000e+00> : vector<64x32xf32>
    %7 = tpu.matmul %4, %6, %cst_6 {dimension_numbers = #tpu.dot_dimension_numbers<[1], [0], [0], [1], [0, 0, 1, 1], [], []>} : vector<64x3xf32>, vector<3x32xf32>, vector<64x32xf32> -> vector<64x32xf32>
    %8 = arith.addf %2, %7 : vector<64x32xf32>
    %9 = vector.extract_strided_slice %1 {offsets = [0, 9, 0], sizes = [8, 8, 3], strides = [1, 1, 1]} : vector<18x18x3xf32> to vector<8x8x3xf32>
    %10 = vector.shape_cast %9 : vector<8x8x3xf32> to vector<64x3xf32>
    %c1 = arith.constant 1 : index
    %c0_7 = arith.constant 0 : index
    %c0_8 = arith.constant 0 : index
    %11 = vector.load %arg2[%c1, %c0_7, %c0_8] : memref<9x3x32xf32, #tpu.memory_space<vmem>>, vector<1x3x32xf32>
    %12 = vector.shape_cast %11 : vector<1x3x32xf32> to vector<3x32xf32>
    %cst_9 = arith.constant dense<0.000000e+00> : vector<64x32xf32>
    %13 = tpu.matmul %10, %12, %cst_9 {dimension_numbers = #tpu.dot_dimension_numbers<[1], [0], [0], [1], [0, 0, 1, 1], [], []>} : vector<64x3xf32>, vector<3x32xf32>, vector<64x32xf32> -> vector<64x32xf32>
    %14 = arith.addf %8, %13 : vector<64x32xf32>
    %15 = vector.extract_strided_slice %1 {offsets = [0, 1, 0], sizes = [8, 8, 3], strides = [1, 1, 1]} : vector<18x18x3xf32> to vector<8x8x3xf32>
    %16 = vector.shape_cast %15 : vector<8x8x3xf32> to vector<64x3xf32>
    %c2 = arith.constant 2 : index
    %c0_10 = arith.constant 0 : index
    %c0_11 = arith.constant 0 : index
    %17 = vector.load %arg2[%c2, %c0_10, %c0_11] : memref<9x3x32xf32, #tpu.memory_space<vmem>>, vector<1x3x32xf32>
    %18 = vector.shape_cast %17 : vector<1x3x32xf32> to vector<3x32xf32>
    %cst_12 = arith.constant dense<0.000000e+00> : vector<64x32xf32>
    %19 = tpu.matmul %16, %18, %cst_12 {dimension_numbers = #tpu.dot_dimension_numbers<[1], [0], [0], [1], [0, 0, 1, 1], [], []>} : vector<64x3xf32>, vector<3x32xf32>, vector<64x32xf32> -> vector<64x32xf32>
    %20 = arith.addf %14, %19 : vector<64x32xf32>
    %21 = vector.extract_strided_slice %1 {offsets = [9, 0, 0], sizes = [8, 8, 3], strides = [1, 1, 1]} : vector<18x18x3xf32> to vector<8x8x3xf32>
    %22 = vector.shape_cast %21 : vector<8x8x3xf32> to vector<64x3xf32>
    %c3 = arith.constant 3 : index
    %c0_13 = arith.constant 0 : index
    %c0_14 = arith.constant 0 : index
    %23 = vector.load %arg2[%c3, %c0_13, %c0_14] : memref<9x3x32xf32, #tpu.memory_space<vmem>>, vector<1x3x32xf32>
    %24 = vector.shape_cast %23 : vector<1x3x32xf32> to vector<3x32xf32>
    %cst_15 = arith.constant dense<0.000000e+00> : vector<64x32xf32>
    %25 = tpu.matmul %22, %24, %cst_15 {dimension_numbers = #tpu.dot_dimension_numbers<[1], [0], [0], [1], [0, 0, 1, 1], [], []>} : vector<64x3xf32>, vector<3x32xf32>, vector<64x32xf32> -> vector<64x32xf32>
    %26 = arith.addf %20, %25 : vector<64x32xf32>
    %27 = vector.extract_strided_slice %1 {offsets = [9, 9, 0], sizes = [8, 8, 3], strides = [1, 1, 1]} : vector<18x18x3xf32> to vector<8x8x3xf32>
    %28 = vector.shape_cast %27 : vector<8x8x3xf32> to vector<64x3xf32>
    %c4 = arith.constant 4 : index
    %c0_16 = arith.constant 0 : index
    %c0_17 = arith.constant 0 : index
    %29 = vector.load %arg2[%c4, %c0_16, %c0_17] : memref<9x3x32xf32, #tpu.memory_space<vmem>>, vector<1x3x32xf32>
    %30 = vector.shape_cast %29 : vector<1x3x32xf32> to vector<3x32xf32>
    %cst_18 = arith.constant dense<0.000000e+00> : vector<64x32xf32>
    %31 = tpu.matmul %28, %30, %cst_18 {dimension_numbers = #tpu.dot_dimension_numbers<[1], [0], [0], [1], [0, 0, 1, 1], [], []>} : vector<64x3xf32>, vector<3x32xf32>, vector<64x32xf32> -> vector<64x32xf32>
    %32 = arith.addf %26, %31 : vector<64x32xf32>
    %33 = vector.extract_strided_slice %1 {offsets = [9, 1, 0], sizes = [8, 8, 3], strides = [1, 1, 1]} : vector<18x18x3xf32> to vector<8x8x3xf32>
    %34 = vector.shape_cast %33 : vector<8x8x3xf32> to vector<64x3xf32>
    %c5 = arith.constant 5 : index
    %c0_19 = arith.constant 0 : index
    %c0_20 = arith.constant 0 : index
    %35 = vector.load %arg2[%c5, %c0_19, %c0_20] : memref<9x3x32xf32, #tpu.memory_space<vmem>>, vector<1x3x32xf32>
    %36 = vector.shape_cast %35 : vector<1x3x32xf32> to vector<3x32xf32>
    %cst_21 = arith.constant dense<0.000000e+00> : vector<64x32xf32>
    %37 = tpu.matmul %34, %36, %cst_21 {dimension_numbers = #tpu.dot_dimension_numbers<[1], [0], [0], [1], [0, 0, 1, 1], [], []>} : vector<64x3xf32>, vector<3x32xf32>, vector<64x32xf32> -> vector<64x32xf32>
    %38 = arith.addf %32, %37 : vector<64x32xf32>
    %39 = vector.extract_strided_slice %1 {offsets = [1, 0, 0], sizes = [8, 8, 3], strides = [1, 1, 1]} : vector<18x18x3xf32> to vector<8x8x3xf32>
    %40 = vector.shape_cast %39 : vector<8x8x3xf32> to vector<64x3xf32>
    %c6 = arith.constant 6 : index
    %c0_22 = arith.constant 0 : index
    %c0_23 = arith.constant 0 : index
    %41 = vector.load %arg2[%c6, %c0_22, %c0_23] : memref<9x3x32xf32, #tpu.memory_space<vmem>>, vector<1x3x32xf32>
    %42 = vector.shape_cast %41 : vector<1x3x32xf32> to vector<3x32xf32>
    %cst_24 = arith.constant dense<0.000000e+00> : vector<64x32xf32>
    %43 = tpu.matmul %40, %42, %cst_24 {dimension_numbers = #tpu.dot_dimension_numbers<[1], [0], [0], [1], [0, 0, 1, 1], [], []>} : vector<64x3xf32>, vector<3x32xf32>, vector<64x32xf32> -> vector<64x32xf32>
    %44 = arith.addf %38, %43 : vector<64x32xf32>
    %45 = vector.extract_strided_slice %1 {offsets = [1, 9, 0], sizes = [8, 8, 3], strides = [1, 1, 1]} : vector<18x18x3xf32> to vector<8x8x3xf32>
    %46 = vector.shape_cast %45 : vector<8x8x3xf32> to vector<64x3xf32>
    %c7 = arith.constant 7 : index
    %c0_25 = arith.constant 0 : index
    %c0_26 = arith.constant 0 : index
    %47 = vector.load %arg2[%c7, %c0_25, %c0_26] : memref<9x3x32xf32, #tpu.memory_space<vmem>>, vector<1x3x32xf32>
    %48 = vector.shape_cast %47 : vector<1x3x32xf32> to vector<3x32xf32>
    %cst_27 = arith.constant dense<0.000000e+00> : vector<64x32xf32>
    %49 = tpu.matmul %46, %48, %cst_27 {dimension_numbers = #tpu.dot_dimension_numbers<[1], [0], [0], [1], [0, 0, 1, 1], [], []>} : vector<64x3xf32>, vector<3x32xf32>, vector<64x32xf32> -> vector<64x32xf32>
    %50 = arith.addf %44, %49 : vector<64x32xf32>
    %51 = vector.extract_strided_slice %1 {offsets = [1, 1, 0], sizes = [8, 8, 3], strides = [1, 1, 1]} : vector<18x18x3xf32> to vector<8x8x3xf32>
    %52 = vector.shape_cast %51 : vector<8x8x3xf32> to vector<64x3xf32>
    %c8 = arith.constant 8 : index
    %c0_28 = arith.constant 0 : index
    %c0_29 = arith.constant 0 : index
    %53 = vector.load %arg2[%c8, %c0_28, %c0_29] : memref<9x3x32xf32, #tpu.memory_space<vmem>>, vector<1x3x32xf32>
    %54 = vector.shape_cast %53 : vector<1x3x32xf32> to vector<3x32xf32>
    %cst_30 = arith.constant dense<0.000000e+00> : vector<64x32xf32>
    %55 = tpu.matmul %52, %54, %cst_30 {dimension_numbers = #tpu.dot_dimension_numbers<[1], [0], [0], [1], [0, 0, 1, 1], [], []>} : vector<64x3xf32>, vector<3x32xf32>, vector<64x32xf32> -> vector<64x32xf32>
    %56 = arith.addf %50, %55 : vector<64x32xf32>
    %c0_31 = arith.constant 0 : index
    %c0_32 = arith.constant 0 : index
    %57 = vector.load %arg3[%c0_31, %c0_32] : memref<1x32xf32, #tpu.memory_space<vmem>>, vector<1x32xf32>
    %58 = vector.broadcast %57 : vector<1x32xf32> to vector<64x32xf32>
    %59 = arith.addf %56, %58 : vector<64x32xf32>
    %cst_33 = arith.constant 0.000000e+00 : f32
    %60 = vector.broadcast %cst_33 : f32 to vector<64x32xf32>
    %61 = arith.maximumf %59, %60 : vector<64x32xf32>
    %cst_34 = arith.constant 0.000000e+00 : f32
    %62 = vector.broadcast %cst_34 : f32 to vector<10x10x32xf32>
    %c0_35 = arith.constant 0 : index
    %c0_36 = arith.constant 0 : index
    %c0_37 = arith.constant 0 : index
    %63 = vector.load %arg8[%c0_35, %c0_36, %c0_37] : memref<10x10x32xf32, #tpu.memory_space<vmem>>, vector<10x10x32xf32>
    tpu.vector_store %arg8[%c0_35, %c0_36, %c0_37], %62 {strides = array<i32>} : memref<10x10x32xf32, #tpu.memory_space<vmem>>, vector<10x10x32xf32>,
    %64 = vector.shape_cast %61 : vector<64x32xf32> to vector<8x8x32xf32>
    %c1_38 = arith.constant 1 : index
    %c1_39 = arith.constant 1 : index
    %c0_40 = arith.constant 0 : index
    %65 = vector.load %arg8[%c1_38, %c1_39, %c0_40] : memref<10x10x32xf32, #tpu.memory_space<vmem>>, vector<8x8x32xf32>
    tpu.vector_store %arg8[%c1_38, %c1_39, %c0_40], %64 {strides = array<i32>} : memref<10x10x32xf32, #tpu.memory_space<vmem>>, vector<8x8x32xf32>,
    %c0_41 = arith.constant 0 : index
    %c0_42 = arith.constant 0 : index
    %c0_43 = arith.constant 0 : index
    %66 = vector.load %arg8[%c0_41, %c0_42, %c0_43] : memref<10x10x32xf32, #tpu.memory_space<vmem>>, vector<10x10x32xf32>
    %cst_44 = arith.constant 0.000000e+00 : f32
    %67 = vector.broadcast %cst_44 : f32 to vector<64x64xf32>
    %68 = vector.extract_strided_slice %66 {offsets = [0, 0, 0], sizes = [8, 8, 32], strides = [1, 1, 1]} : vector<10x10x32xf32> to vector<8x8x32xf32>
    %69 = vector.shape_cast %68 : vector<8x8x32xf32> to vector<64x32xf32>
    %c0_45 = arith.constant 0 : index
    %c0_46 = arith.constant 0 : index
    %c0_47 = arith.constant 0 : index
    %70 = vector.load %arg4[%c0_45, %c0_46, %c0_47] : memref<9x32x64xf32, #tpu.memory_space<vmem>>, vector<1x32x64xf32>
    %71 = vector.shape_cast %70 : vector<1x32x64xf32> to vector<32x64xf32>
    %cst_48 = arith.constant dense<0.000000e+00> : vector<64x64xf32>
    %72 = tpu.matmul %69, %71, %cst_48 {dimension_numbers = #tpu.dot_dimension_numbers<[1], [0], [0], [1], [0, 0, 1, 1], [], []>} : vector<64x32xf32>, vector<32x64xf32>, vector<64x64xf32> -> vector<64x64xf32>
    %73 = arith.addf %67, %72 : vector<64x64xf32>
    %74 = vector.extract_strided_slice %66 {offsets = [0, 1, 0], sizes = [8, 8, 32], strides = [1, 1, 1]} : vector<10x10x32xf32> to vector<8x8x32xf32>
    %75 = vector.shape_cast %74 : vector<8x8x32xf32> to vector<64x32xf32>
    %c1_49 = arith.constant 1 : index
    %c0_50 = arith.constant 0 : index
    %c0_51 = arith.constant 0 : index
    %76 = vector.load %arg4[%c1_49, %c0_50, %c0_51] : memref<9x32x64xf32, #tpu.memory_space<vmem>>, vector<1x32x64xf32>
    %77 = vector.shape_cast %76 : vector<1x32x64xf32> to vector<32x64xf32>
    %cst_52 = arith.constant dense<0.000000e+00> : vector<64x64xf32>
    %78 = tpu.matmul %75, %77, %cst_52 {dimension_numbers = #tpu.dot_dimension_numbers<[1], [0], [0], [1], [0, 0, 1, 1], [], []>} : vector<64x32xf32>, vector<32x64xf32>, vector<64x64xf32> -> vector<64x64xf32>
    %79 = arith.addf %73, %78 : vector<64x64xf32>
    %80 = vector.extract_strided_slice %66 {offsets = [0, 2, 0], sizes = [8, 8, 32], strides = [1, 1, 1]} : vector<10x10x32xf32> to vector<8x8x32xf32>
    %81 = vector.shape_cast %80 : vector<8x8x32xf32> to vector<64x32xf32>
    %c2_53 = arith.constant 2 : index
    %c0_54 = arith.constant 0 : index
    %c0_55 = arith.constant 0 : index
    %82 = vector.load %arg4[%c2_53, %c0_54, %c0_55] : memref<9x32x64xf32, #tpu.memory_space<vmem>>, vector<1x32x64xf32>
    %83 = vector.shape_cast %82 : vector<1x32x64xf32> to vector<32x64xf32>
    %cst_56 = arith.constant dense<0.000000e+00> : vector<64x64xf32>
    %84 = tpu.matmul %81, %83, %cst_56 {dimension_numbers = #tpu.dot_dimension_numbers<[1], [0], [0], [1], [0, 0, 1, 1], [], []>} : vector<64x32xf32>, vector<32x64xf32>, vector<64x64xf32> -> vector<64x64xf32>
    %85 = arith.addf %79, %84 : vector<64x64xf32>
    %86 = vector.extract_strided_slice %66 {offsets = [1, 0, 0], sizes = [8, 8, 32], strides = [1, 1, 1]} : vector<10x10x32xf32> to vector<8x8x32xf32>
    %87 = vector.shape_cast %86 : vector<8x8x32xf32> to vector<64x32xf32>
    %c3_57 = arith.constant 3 : index
    %c0_58 = arith.constant 0 : index
    %c0_59 = arith.constant 0 : index
    %88 = vector.load %arg4[%c3_57, %c0_58, %c0_59] : memref<9x32x64xf32, #tpu.memory_space<vmem>>, vector<1x32x64xf32>
    %89 = vector.shape_cast %88 : vector<1x32x64xf32> to vector<32x64xf32>
    %cst_60 = arith.constant dense<0.000000e+00> : vector<64x64xf32>
    %90 = tpu.matmul %87, %89, %cst_60 {dimension_numbers = #tpu.dot_dimension_numbers<[1], [0], [0], [1], [0, 0, 1, 1], [], []>} : vector<64x32xf32>, vector<32x64xf32>, vector<64x64xf32> -> vector<64x64xf32>
    %91 = arith.addf %85, %90 : vector<64x64xf32>
    %92 = vector.extract_strided_slice %66 {offsets = [1, 1, 0], sizes = [8, 8, 32], strides = [1, 1, 1]} : vector<10x10x32xf32> to vector<8x8x32xf32>
    %93 = vector.shape_cast %92 : vector<8x8x32xf32> to vector<64x32xf32>
    %c4_61 = arith.constant 4 : index
    %c0_62 = arith.constant 0 : index
    %c0_63 = arith.constant 0 : index
    %94 = vector.load %arg4[%c4_61, %c0_62, %c0_63] : memref<9x32x64xf32, #tpu.memory_space<vmem>>, vector<1x32x64xf32>
    %95 = vector.shape_cast %94 : vector<1x32x64xf32> to vector<32x64xf32>
    %cst_64 = arith.constant dense<0.000000e+00> : vector<64x64xf32>
    %96 = tpu.matmul %93, %95, %cst_64 {dimension_numbers = #tpu.dot_dimension_numbers<[1], [0], [0], [1], [0, 0, 1, 1], [], []>} : vector<64x32xf32>, vector<32x64xf32>, vector<64x64xf32> -> vector<64x64xf32>
    %97 = arith.addf %91, %96 : vector<64x64xf32>
    %98 = vector.extract_strided_slice %66 {offsets = [1, 2, 0], sizes = [8, 8, 32], strides = [1, 1, 1]} : vector<10x10x32xf32> to vector<8x8x32xf32>
    %99 = vector.shape_cast %98 : vector<8x8x32xf32> to vector<64x32xf32>
    %c5_65 = arith.constant 5 : index
    %c0_66 = arith.constant 0 : index
    %c0_67 = arith.constant 0 : index
    %100 = vector.load %arg4[%c5_65, %c0_66, %c0_67] : memref<9x32x64xf32, #tpu.memory_space<vmem>>, vector<1x32x64xf32>
    %101 = vector.shape_cast %100 : vector<1x32x64xf32> to vector<32x64xf32>
    %cst_68 = arith.constant dense<0.000000e+00> : vector<64x64xf32>
    %102 = tpu.matmul %99, %101, %cst_68 {dimension_numbers = #tpu.dot_dimension_numbers<[1], [0], [0], [1], [0, 0, 1, 1], [], []>} : vector<64x32xf32>, vector<32x64xf32>, vector<64x64xf32> -> vector<64x64xf32>
    %103 = arith.addf %97, %102 : vector<64x64xf32>
    %104 = vector.extract_strided_slice %66 {offsets = [2, 0, 0], sizes = [8, 8, 32], strides = [1, 1, 1]} : vector<10x10x32xf32> to vector<8x8x32xf32>
    %105 = vector.shape_cast %104 : vector<8x8x32xf32> to vector<64x32xf32>
    %c6_69 = arith.constant 6 : index
    %c0_70 = arith.constant 0 : index
    %c0_71 = arith.constant 0 : index
    %106 = vector.load %arg4[%c6_69, %c0_70, %c0_71] : memref<9x32x64xf32, #tpu.memory_space<vmem>>, vector<1x32x64xf32>
    %107 = vector.shape_cast %106 : vector<1x32x64xf32> to vector<32x64xf32>
    %cst_72 = arith.constant dense<0.000000e+00> : vector<64x64xf32>
    %108 = tpu.matmul %105, %107, %cst_72 {dimension_numbers = #tpu.dot_dimension_numbers<[1], [0], [0], [1], [0, 0, 1, 1], [], []>} : vector<64x32xf32>, vector<32x64xf32>, vector<64x64xf32> -> vector<64x64xf32>
    %109 = arith.addf %103, %108 : vector<64x64xf32>
    %110 = vector.extract_strided_slice %66 {offsets = [2, 1, 0], sizes = [8, 8, 32], strides = [1, 1, 1]} : vector<10x10x32xf32> to vector<8x8x32xf32>
    %111 = vector.shape_cast %110 : vector<8x8x32xf32> to vector<64x32xf32>
    %c7_73 = arith.constant 7 : index
    %c0_74 = arith.constant 0 : index
    %c0_75 = arith.constant 0 : index
    %112 = vector.load %arg4[%c7_73, %c0_74, %c0_75] : memref<9x32x64xf32, #tpu.memory_space<vmem>>, vector<1x32x64xf32>
    %113 = vector.shape_cast %112 : vector<1x32x64xf32> to vector<32x64xf32>
    %cst_76 = arith.constant dense<0.000000e+00> : vector<64x64xf32>
    %114 = tpu.matmul %111, %113, %cst_76 {dimension_numbers = #tpu.dot_dimension_numbers<[1], [0], [0], [1], [0, 0, 1, 1], [], []>} : vector<64x32xf32>, vector<32x64xf32>, vector<64x64xf32> -> vector<64x64xf32>
    %115 = arith.addf %109, %114 : vector<64x64xf32>
    %116 = vector.extract_strided_slice %66 {offsets = [2, 2, 0], sizes = [8, 8, 32], strides = [1, 1, 1]} : vector<10x10x32xf32> to vector<8x8x32xf32>
    %117 = vector.shape_cast %116 : vector<8x8x32xf32> to vector<64x32xf32>
    %c8_77 = arith.constant 8 : index
    %c0_78 = arith.constant 0 : index
    %c0_79 = arith.constant 0 : index
    %118 = vector.load %arg4[%c8_77, %c0_78, %c0_79] : memref<9x32x64xf32, #tpu.memory_space<vmem>>, vector<1x32x64xf32>
    %119 = vector.shape_cast %118 : vector<1x32x64xf32> to vector<32x64xf32>
    %cst_80 = arith.constant dense<0.000000e+00> : vector<64x64xf32>
    %120 = tpu.matmul %117, %119, %cst_80 {dimension_numbers = #tpu.dot_dimension_numbers<[1], [0], [0], [1], [0, 0, 1, 1], [], []>} : vector<64x32xf32>, vector<32x64xf32>, vector<64x64xf32> -> vector<64x64xf32>
    %121 = arith.addf %115, %120 : vector<64x64xf32>
    %c0_81 = arith.constant 0 : index
    %c0_82 = arith.constant 0 : index
    %122 = vector.load %arg5[%c0_81, %c0_82] : memref<1x64xf32, #tpu.memory_space<vmem>>, vector<1x64xf32>
    %123 = vector.broadcast %122 : vector<1x64xf32> to vector<64x64xf32>
    %124 = arith.addf %121, %123 : vector<64x64xf32>
    %cst_83 = arith.constant 0.000000e+00 : f32
    %125 = vector.broadcast %cst_83 : f32 to vector<64x64xf32>
    %126 = arith.maximumf %124, %125 : vector<64x64xf32>
    %c0_84 = arith.constant 0 : index
    %c0_85 = arith.constant 0 : index
    %127 = vector.load %arg6[%c0_84, %c0_85] : memref<49x64xf32, #tpu.memory_space<vmem>>, vector<49x64xf32>
    %cst_86 = arith.constant dense<0.000000e+00> : vector<49x64xf32>
    %128 = tpu.matmul %127, %126, %cst_86 {dimension_numbers = #tpu.dot_dimension_numbers<[1], [0], [0], [1], [0, 0, 1, 1], [], []>} : vector<49x64xf32>, vector<64x64xf32>, vector<49x64xf32> -> vector<49x64xf32>
    %129 = vector.shape_cast %128 : vector<49x64xf32> to vector<1x49x64xf32>
    %130 = arith.truncf %129 : vector<1x49x64xf32> to vector<1x49x64xbf16>
    %c0_87 = arith.constant 0 : index
    %c0_88 = arith.constant 0 : index
    %c0_89 = arith.constant 0 : index
    %131 = vector.load %arg7[%c0_87, %c0_88, %c0_89] : memref<1x49x64xbf16, #tpu.memory_space<vmem>>, vector<1x49x64xbf16>
    tpu.vector_store %arg7[%c0_87, %c0_88, %c0_89], %130 {strides = array<i32>} : memref<1x49x64xbf16, #tpu.memory_space<vmem>>, vector<1x49x64xbf16>,
    return
  }
  func.func @transform_0(%arg0: i32) -> (i32, i32, i32, i32) {
    %c0_i32 = arith.constant 0 : i32
    %c0_i32_0 = arith.constant 0 : i32
    %c0_i32_1 = arith.constant 0 : i32
    %c0_i32_2 = arith.constant 0 : i32
    return %arg0, %c0_i32, %c0_i32_0, %c0_i32_1 : i32, i32, i32, i32
  }
  func.func @transform_1(%arg0: i32) -> (i32, i32, i32) {
    %c0_i32 = arith.constant 0 : i32
    %c0_i32_0 = arith.constant 0 : i32
    %c0_i32_1 = arith.constant 0 : i32
    %c0_i32_2 = arith.constant 0 : i32
    return %c0_i32, %c0_i32_0, %c0_i32_1 : i32, i32, i32
  }
  func.func @transform_2(%arg0: i32) -> (i32, i32) {
    %c0_i32 = arith.constant 0 : i32
    %c0_i32_0 = arith.constant 0 : i32
    %c0_i32_1 = arith.constant 0 : i32
    return %c0_i32, %c0_i32_0 : i32, i32
  }
  func.func @transform_3(%arg0: i32) -> (i32, i32, i32) {
    %c0_i32 = arith.constant 0 : i32
    %c0_i32_0 = arith.constant 0 : i32
    %c0_i32_1 = arith.constant 0 : i32
    %c0_i32_2 = arith.constant 0 : i32
    return %c0_i32, %c0_i32_0, %c0_i32_1 : i32, i32, i32
  }
  func.func @transform_4(%arg0: i32) -> (i32, i32) {
    %c0_i32 = arith.constant 0 : i32
    %c0_i32_0 = arith.constant 0 : i32
    %c0_i32_1 = arith.constant 0 : i32
    return %c0_i32, %c0_i32_0 : i32, i32
  }
  func.func @transform_5(%arg0: i32) -> (i32, i32) {
    %c0_i32 = arith.constant 0 : i32
    %c0_i32_0 = arith.constant 0 : i32
    %c0_i32_1 = arith.constant 0 : i32
    return %c0_i32, %c0_i32_0 : i32, i32
  }
  func.func @transform_6(%arg0: i32) -> (i32, i32, i32) {
    %c0_i32 = arith.constant 0 : i32
    %c0_i32_0 = arith.constant 0 : i32
    %c0_i32_1 = arith.constant 0 : i32
    return %arg0, %c0_i32, %c0_i32_0 : i32, i32, i32
  }
}

module attributes {stable_mosaic.version = 11 : i64} {
  func.func @_classifier_kernel(%arg0: i32, %arg1: memref<2x3136xbf16, #tpu.memory_space<vmem>>, %arg2: memref<3136x128xbf16, #tpu.memory_space<vmem>>, %arg3: memref<1x128xf32, #tpu.memory_space<vmem>>, %arg4: memref<128x128xbf16, #tpu.memory_space<vmem>>, %arg5: memref<1x128xf32, #tpu.memory_space<vmem>>, %arg6: memref<128x128xbf16, #tpu.memory_space<vmem>>, %arg7: memref<1x128xf32, #tpu.memory_space<vmem>>, %arg8: memref<2x128xf32, #tpu.memory_space<vmem>>) attributes {dimension_semantics = [#tpu.dimension_semantics<arbitrary>], iteration_bounds = array<i64: 1>, scalar_prefetch = 0 : i64, scratch_operands = 0 : i64, tpu.core_type = #tpu.core_type<tc>, window_params = [{pipeline_mode = #tpu.pipeline_mode<synchronous>, transform_indices = @transform_0, window_bounds = array<i64: 2, 3136>}, {pipeline_mode = #tpu.pipeline_mode<synchronous>, transform_indices = @transform_1, window_bounds = array<i64: 3136, 128>}, {pipeline_mode = #tpu.pipeline_mode<synchronous>, transform_indices = @transform_2, window_bounds = array<i64: 1, 128>}, {pipeline_mode = #tpu.pipeline_mode<synchronous>, transform_indices = @transform_3, window_bounds = array<i64: 128, 128>}, {pipeline_mode = #tpu.pipeline_mode<synchronous>, transform_indices = @transform_4, window_bounds = array<i64: 1, 128>}, {pipeline_mode = #tpu.pipeline_mode<synchronous>, transform_indices = @transform_5, window_bounds = array<i64: 128, 128>}, {pipeline_mode = #tpu.pipeline_mode<synchronous>, transform_indices = @transform_6, window_bounds = array<i64: 1, 128>}, {pipeline_mode = #tpu.pipeline_mode<synchronous>, transform_indices = @transform_7, window_bounds = array<i64: 2, 128>}]} {
    %c0 = arith.constant 0 : index
    %c0_0 = arith.constant 0 : index
    %0 = vector.load %arg1[%c0, %c0_0] : memref<2x3136xbf16, #tpu.memory_space<vmem>>, vector<2x3136xbf16>
    %c0_1 = arith.constant 0 : index
    %c0_2 = arith.constant 0 : index
    %1 = vector.load %arg2[%c0_1, %c0_2] : memref<3136x128xbf16, #tpu.memory_space<vmem>>, vector<3136x128xbf16>
    %cst = arith.constant dense<0.000000e+00> : vector<2x128xf32>
    %2 = tpu.matmul %0, %1, %cst {dimension_numbers = #tpu.dot_dimension_numbers<[1], [0], [0], [1], [0, 0, 1, 1], [], []>} : vector<2x3136xbf16>, vector<3136x128xbf16>, vector<2x128xf32> -> vector<2x128xf32>
    %c0_3 = arith.constant 0 : index
    %c0_4 = arith.constant 0 : index
    %3 = vector.load %arg3[%c0_3, %c0_4] : memref<1x128xf32, #tpu.memory_space<vmem>>, vector<1x128xf32>
    %4 = vector.broadcast %3 : vector<1x128xf32> to vector<2x128xf32>
    %5 = arith.addf %2, %4 : vector<2x128xf32>
    %cst_5 = arith.constant 0.000000e+00 : f32
    %6 = vector.broadcast %cst_5 : f32 to vector<2x128xf32>
    %7 = arith.maximumf %5, %6 : vector<2x128xf32>
    %8 = arith.truncf %7 : vector<2x128xf32> to vector<2x128xbf16>
    %c0_6 = arith.constant 0 : index
    %c0_7 = arith.constant 0 : index
    %9 = vector.load %arg4[%c0_6, %c0_7] : memref<128x128xbf16, #tpu.memory_space<vmem>>, vector<128x128xbf16>
    %cst_8 = arith.constant dense<0.000000e+00> : vector<2x128xf32>
    %10 = tpu.matmul %8, %9, %cst_8 {dimension_numbers = #tpu.dot_dimension_numbers<[1], [0], [0], [1], [0, 0, 1, 1], [], []>} : vector<2x128xbf16>, vector<128x128xbf16>, vector<2x128xf32> -> vector<2x128xf32>
    %c0_9 = arith.constant 0 : index
    %c0_10 = arith.constant 0 : index
    %11 = vector.load %arg5[%c0_9, %c0_10] : memref<1x128xf32, #tpu.memory_space<vmem>>, vector<1x128xf32>
    %12 = vector.broadcast %11 : vector<1x128xf32> to vector<2x128xf32>
    %13 = arith.addf %10, %12 : vector<2x128xf32>
    %cst_11 = arith.constant 0.000000e+00 : f32
    %14 = vector.broadcast %cst_11 : f32 to vector<2x128xf32>
    %15 = arith.maximumf %13, %14 : vector<2x128xf32>
    %16 = arith.truncf %15 : vector<2x128xf32> to vector<2x128xbf16>
    %c0_12 = arith.constant 0 : index
    %c0_13 = arith.constant 0 : index
    %17 = vector.load %arg6[%c0_12, %c0_13] : memref<128x128xbf16, #tpu.memory_space<vmem>>, vector<128x128xbf16>
    %cst_14 = arith.constant dense<0.000000e+00> : vector<2x128xf32>
    %18 = tpu.matmul %16, %17, %cst_14 {dimension_numbers = #tpu.dot_dimension_numbers<[1], [0], [0], [1], [0, 0, 1, 1], [], []>} : vector<2x128xbf16>, vector<128x128xbf16>, vector<2x128xf32> -> vector<2x128xf32>
    %c0_15 = arith.constant 0 : index
    %c0_16 = arith.constant 0 : index
    %19 = vector.load %arg7[%c0_15, %c0_16] : memref<1x128xf32, #tpu.memory_space<vmem>>, vector<1x128xf32>
    %20 = vector.broadcast %19 : vector<1x128xf32> to vector<2x128xf32>
    %21 = arith.addf %18, %20 : vector<2x128xf32>
    %c0_17 = arith.constant 0 : index
    %c0_18 = arith.constant 0 : index
    %22 = vector.load %arg8[%c0_17, %c0_18] : memref<2x128xf32, #tpu.memory_space<vmem>>, vector<2x128xf32>
    tpu.vector_store %arg8[%c0_17, %c0_18], %21 {strides = array<i32>} : memref<2x128xf32, #tpu.memory_space<vmem>>, vector<2x128xf32>,
    return
  }
  func.func @transform_0(%arg0: i32) -> (i32, i32) {
    %c0_i32 = arith.constant 0 : i32
    %c0_i32_0 = arith.constant 0 : i32
    %c0_i32_1 = arith.constant 0 : i32
    return %c0_i32, %c0_i32_0 : i32, i32
  }
  func.func @transform_1(%arg0: i32) -> (i32, i32) {
    %c0_i32 = arith.constant 0 : i32
    %c0_i32_0 = arith.constant 0 : i32
    %c0_i32_1 = arith.constant 0 : i32
    return %c0_i32, %c0_i32_0 : i32, i32
  }
  func.func @transform_2(%arg0: i32) -> (i32, i32) {
    %c0_i32 = arith.constant 0 : i32
    %c0_i32_0 = arith.constant 0 : i32
    %c0_i32_1 = arith.constant 0 : i32
    return %c0_i32, %c0_i32_0 : i32, i32
  }
  func.func @transform_3(%arg0: i32) -> (i32, i32) {
    %c0_i32 = arith.constant 0 : i32
    %c0_i32_0 = arith.constant 0 : i32
    %c0_i32_1 = arith.constant 0 : i32
    return %c0_i32, %c0_i32_0 : i32, i32
  }
  func.func @transform_4(%arg0: i32) -> (i32, i32) {
    %c0_i32 = arith.constant 0 : i32
    %c0_i32_0 = arith.constant 0 : i32
    %c0_i32_1 = arith.constant 0 : i32
    return %c0_i32, %c0_i32_0 : i32, i32
  }
  func.func @transform_5(%arg0: i32) -> (i32, i32) {
    %c0_i32 = arith.constant 0 : i32
    %c0_i32_0 = arith.constant 0 : i32
    %c0_i32_1 = arith.constant 0 : i32
    return %c0_i32, %c0_i32_0 : i32, i32
  }
  func.func @transform_6(%arg0: i32) -> (i32, i32) {
    %c0_i32 = arith.constant 0 : i32
    %c0_i32_0 = arith.constant 0 : i32
    %c0_i32_1 = arith.constant 0 : i32
    return %c0_i32, %c0_i32_0 : i32, i32
  }
  func.func @transform_7(%arg0: i32) -> (i32, i32) {
    %c0_i32 = arith.constant 0 : i32
    %c0_i32_0 = arith.constant 0 : i32
    %c0_i32_1 = arith.constant 0 : i32
    return %c0_i32, %c0_i32_0 : i32, i32
  }
}

</mosaic_0001>

<llo_original>
// kernel: vgg_dwt_forward.2
$region0: #{vgg_dwt_forward.2}
  #allocation0 [shape = 'u32[]', space=smem, size = 0x4, offset = 0x4, fixed_abs, tag = 'smem constant byte address 0x4 - core index']
  #allocation1 [shape = 'u32[144,128]{1,0:T(1,128)}', space=vmem, size = 0x12000, scoped, tag = 'internal scratch']
  #allocation2 [shape = 'f32[10,10,32]{2,1,0:T(8,128)}', space=vmem, size = 0x14000, scoped, tag = 'scratch operand']
  %s0 = inlined_call_operand.vmem [shape: f32[2,18,18,3], index: 0, kind: input, shape index: {}]
  %s1 = inlined_call_operand.vmem [shape: f32[9,3,32], index: 1, kind: input, shape index: {}]
  %s2 = inlined_call_operand.vmem [shape: f32[1,32], index: 2, kind: input, shape index: {}]
  %s3 = inlined_call_operand.vmem [shape: f32[9,32,64], index: 3, kind: input, shape index: {}]
  %s4 = inlined_call_operand.vmem [shape: f32[1,64], index: 4, kind: input, shape index: {}]
  %s5 = inlined_call_operand.vmem [shape: f32[49,64], index: 5, kind: input, shape index: {}]
  %s6 = inlined_call_operand.vmem [shape: bf16[2,49,64], index: 6, kind: output, shape index: {}]
  %s7 = sld [smem:[#allocation0]]
  $region57: #{vgg_dwt_forward.2} parent=0
    _
  %s9 = ssub.s32 1, %s7
  %s10 = scalar_select 0, %s9, %s7
  loop: start=0, step=1, limit=4
  $region2: #{vgg_dwt_forward.2} parent=0 // loop_pre_header
    _
  $region3: #{vgg_dwt_forward.2} parent=0 // loop_header
    %s12 = sphi 0, %s16
    %p13 = scmp.ge.s32.totalorder %s12, 4
    %s22 = sphi 0, %s24
    %s25 = sphi 0, %s22
    %s26 = sphi 0, %s25
    %s42 = sphi 0, %s26
    %s46 = sphi 0, %s46
    %s48 = sphi 0, %s46
    %s49 = sphi 0, %s48
    %s63 = sphi 0, %s49
    %s67 = sphi 0, %s67
    %s69 = sphi 0, %s67
    %s70 = sphi 0, %s69
    %s84 = sphi 0, %s70
    %s88 = sphi 0, %s88
    %s90 = sphi 0, %s88
    %s91 = sphi 0, %s90
    %s105 = sphi 0, %s91
    %s109 = sphi 0, %s109
    %s111 = sphi 0, %s109
    %s112 = sphi 0, %s111
    %s126 = sphi 0, %s112
    %s130 = sphi 0, %s130
    %s132 = sphi 0, %s130
    %s133 = sphi 0, %s132
    %s147 = sphi 0, %s133
    %s153 = sphi 0, %s155
    %s156 = sphi 0, %s153
    %s157 = sphi 0, %s156
    %s173 = sphi 0, %s157
  $region4: #{vgg_dwt_forward.2} parent=0 // loop_header_branch
    %15 = sbr.rel (%p13) target = $region8
  $region5: #{vgg_dwt_forward.2} parent=0 // loop_body
    %s17 = ssub.s32 %s12, 1
    %s18 = ssub.s32 %s12, 2
    %s19 = sadd.s32 %s12, 1
    %s20 = ssub.s32 %s12, %s19
    %p21 = scmp.eq.s32.totalorder %s20, 0
    %s23 = sadd.s32 %s22, 1
    %s24 = scalar_select %p21, %s22, %s23
    %p27 = pneg %p21
    %p28 = scmp.eq.s32.totalorder %s12, 1
    %p29 = por %p27, %p28
    %p30 = scmp.ne.s32.totalorder %s22, %s25
    %p31 = scmp.eq.s32.totalorder %s12, 0
    %p32 = por %p30, %p31
    %p33 = scmp.ne.s32.totalorder %s22, %s25
    %p34 = scmp.eq.s32.totalorder %s17, 1
    %p35 = por %p33, %p34
    %p36 = scmp.ne.s32.totalorder %s25, %s26
    %p37 = scmp.eq.s32.totalorder %s17, 0
    %p38 = por %p36, %p37
    %p39 = scmp.ne.s32.totalorder %s25, %s26
    %p40 = scmp.eq.s32.totalorder %s18, 1
    %p41 = por %p39, %p40
    %p43 = scmp.ne.s32.totalorder %s26, %s42
    %p44 = scmp.eq.s32.totalorder %s18, 0
    %p45 = por %p43, %p44
    %s47 = sadd.s32 %s46, 1
    %p50 = scmp.eq.s32.totalorder %s12, 1
    %p51 = scmp.ne.s32.totalorder %s46, %s48
    %p52 = scmp.eq.s32.totalorder %s12, 0
    %p53 = por %p51, %p52
    %p54 = scmp.ne.s32.totalorder %s46, %s48
    %p55 = scmp.eq.s32.totalorder %s17, 1
    %p56 = por %p54, %p55
    %p57 = scmp.ne.s32.totalorder %s48, %s49
    %p58 = scmp.eq.s32.totalorder %s17, 0
    %p59 = por %p57, %p58
    %p60 = scmp.ne.s32.totalorder %s48, %s49
    %p61 = scmp.eq.s32.totalorder %s18, 1
    %p62 = por %p60, %p61
    %p64 = scmp.ne.s32.totalorder %s49, %s63
    %p65 = scmp.eq.s32.totalorder %s18, 0
    %p66 = por %p64, %p65
    %s68 = sadd.s32 %s67, 1
    %p71 = scmp.eq.s32.totalorder %s12, 1
    %p72 = scmp.ne.s32.totalorder %s67, %s69
    %p73 = scmp.eq.s32.totalorder %s12, 0
    %p74 = por %p72, %p73
    %p75 = scmp.ne.s32.totalorder %s67, %s69
    %p76 = scmp.eq.s32.totalorder %s17, 1
    %p77 = por %p75, %p76
    %p78 = scmp.ne.s32.totalorder %s69, %s70
    %p79 = scmp.eq.s32.totalorder %s17, 0
    %p80 = por %p78, %p79
    %p81 = scmp.ne.s32.totalorder %s69, %s70
    %p82 = scmp.eq.s32.totalorder %s18, 1
    %p83 = por %p81, %p82
    %p85 = scmp.ne.s32.totalorder %s70, %s84
    %p86 = scmp.eq.s32.totalorder %s18, 0
    %p87 = por %p85, %p86
    %s89 = sadd.s32 %s88, 1
    %p92 = scmp.eq.s32.totalorder %s12, 1
    %p93 = scmp.ne.s32.totalorder %s88, %s90
    %p94 = scmp.eq.s32.totalorder %s12, 0
    %p95 = por %p93, %p94
    %p96 = scmp.ne.s32.totalorder %s88, %s90
    %p97 = scmp.eq.s32.totalorder %s17, 1
    %p98 = por %p96, %p97
    %p99 = scmp.ne.s32.totalorder %s90, %s91
    %p100 = scmp.eq.s32.totalorder %s17, 0
    %p101 = por %p99, %p100
    %p102 = scmp.ne.s32.totalorder %s90, %s91
    %p103 = scmp.eq.s32.totalorder %s18, 1
    %p104 = por %p102, %p103
    %p106 = scmp.ne.s32.totalorder %s91, %s105
    %p107 = scmp.eq.s32.totalorder %s18, 0
    %p108 = por %p106, %p107
    %s110 = sadd.s32 %s109, 1
    %p113 = scmp.eq.s32.totalorder %s12, 1
    %p114 = scmp.ne.s32.totalorder %s109, %s111
    %p115 = scmp.eq.s32.totalorder %s12, 0
    %p116 = por %p114, %p115
    %p117 = scmp.ne.s32.totalorder %s109, %s111
    %p118 = scmp.eq.s32.totalorder %s17, 1
    %p119 = por %p117, %p118
    %p120 = scmp.ne.s32.totalorder %s111, %s112
    %p121 = scmp.eq.s32.totalorder %s17, 0
    %p122 = por %p120, %p121
    %p123 = scmp.ne.s32.totalorder %s111, %s112
    %p124 = scmp.eq.s32.totalorder %s18, 1
    %p125 = por %p123, %p124
    %p127 = scmp.ne.s32.totalorder %s112, %s126
    %p128 = scmp.eq.s32.totalorder %s18, 0
    %p129 = por %p127, %p128
    %s131 = sadd.s32 %s130, 1
    %p134 = scmp.eq.s32.totalorder %s12, 1
    %p135 = scmp.ne.s32.totalorder %s130, %s132
    %p136 = scmp.eq.s32.totalorder %s12, 0
    %p137 = por %p135, %p136
    %p138 = scmp.ne.s32.totalorder %s130, %s132
    %p139 = scmp.eq.s32.totalorder %s17, 1
    %p140 = por %p138, %p139
    %p141 = scmp.ne.s32.totalorder %s132, %s133
    %p142 = scmp.eq.s32.totalorder %s17, 0
    %p143 = por %p141, %p142
    %p144 = scmp.ne.s32.totalorder %s132, %s133
    %p145 = scmp.eq.s32.totalorder %s18, 1
    %p146 = por %p144, %p145
    %p148 = scmp.ne.s32.totalorder %s133, %s147
    %p149 = scmp.eq.s32.totalorder %s18, 0
    %p150 = por %p148, %p149
    %s151 = ssub.s32 %s12, %s19
    %p152 = scmp.eq.s32.totalorder %s151, 0
    %s154 = sadd.s32 %s153, 1
    %s155 = scalar_select %p152, %s153, %s154
    %p158 = pneg %p152
    %p159 = scmp.eq.s32.totalorder %s12, 1
    %p160 = por %p158, %p159
    %p161 = scmp.ne.s32.totalorder %s153, %s156
    %p162 = scmp.eq.s32.totalorder %s12, 0
    %p163 = por %p161, %p162
    %p164 = scmp.ne.s32.totalorder %s153, %s156
    %p165 = scmp.eq.s32.totalorder %s17, 1
    %p166 = por %p164, %p165
    %p167 = scmp.ne.s32.totalorder %s156, %s157
    %p168 = scmp.eq.s32.totalorder %s17, 0
    %p169 = por %p167, %p168
    %p170 = scmp.ne.s32.totalorder %s156, %s157
    %p171 = scmp.eq.s32.totalorder %s18, 1
    %p172 = por %p170, %p171
    %p174 = scmp.ne.s32.totalorder %s157, %s173
    %p175 = scmp.eq.s32.totalorder %s18, 0
    %p176 = por %p174, %p175
    %p177 = scmp.le.s32.totalorder 1, %s12
    %p178 = scmp.lt.s32.totalorder %s12, 3
    %p179 = pnand %p177, %p178
    %p180 = pneg %p179
    // Predicated region
    $region9: #{vgg_dwt_forward.2} parent=5 // pred_check
      _
    $region10: #{vgg_dwt_forward.2} parent=5 // pred_check_branch
      %182 = sbr.rel (%p179) target = $region12
    $region11: #{vgg_dwt_forward.2} parent=5 // pred_region
      %s183 = ssub.s32 %s12, 1
      // Predicated region
      $region13: #{vgg_dwt_forward.2} parent=11 // pred_check
        %p184 = pneg %p59
      $region14: #{vgg_dwt_forward.2} parent=11 // pred_check_branch
        %186 = sbr.rel (%p184) target = $region16
      $region15: #{vgg_dwt_forward.2} parent=11 // pred_region
        _
      $region16: #{vgg_dwt_forward.2} parent=11 // pred_fallthru
        _
      // Predicated region
      $region17: #{vgg_dwt_forward.2} parent=11 // pred_check
        %p187 = pneg %p80
      $region18: #{vgg_dwt_forward.2} parent=11 // pred_check_branch
        %189 = sbr.rel (%p187) target = $region20
      $region19: #{vgg_dwt_forward.2} parent=11 // pred_region
        _
      $region20: #{vgg_dwt_forward.2} parent=11 // pred_fallthru
        _
      // Predicated region
      $region21: #{vgg_dwt_forward.2} parent=11 // pred_check
        %p190 = pneg %p101
      $region22: #{vgg_dwt_forward.2} parent=11 // pred_check_branch
        %192 = sbr.rel (%p190) target = $region24
      $region23: #{vgg_dwt_forward.2} parent=11 // pred_region
        _
      $region24: #{vgg_dwt_forward.2} parent=11 // pred_fallthru
        _
      // Predicated region
      $region25: #{vgg_dwt_forward.2} parent=11 // pred_check
        %p193 = pneg %p122
      $region26: #{vgg_dwt_forward.2} parent=11 // pred_check_branch
        %195 = sbr.rel (%p193) target = $region28
      $region27: #{vgg_dwt_forward.2} parent=11 // pred_region
        _
      $region28: #{vgg_dwt_forward.2} parent=11 // pred_fallthru
        _
      // Predicated region
      $region29: #{vgg_dwt_forward.2} parent=11 // pred_check
        %p196 = pneg %p143
      $region30: #{vgg_dwt_forward.2} parent=11 // pred_check_branch
        %198 = sbr.rel (%p196) target = $region32
      $region31: #{vgg_dwt_forward.2} parent=11 // pred_region
        _
      $region32: #{vgg_dwt_forward.2} parent=11 // pred_fallthru
        _
    $region12: #{vgg_dwt_forward.2} parent=5 // pred_fallthru
      _
    %p199 = scmp.lt.s32.totalorder %s12, 2
    // Predicated region
    $region33: #{vgg_dwt_forward.2} parent=5 // pred_check
      %p200 = pneg %p199
    $region34: #{vgg_dwt_forward.2} parent=5 // pred_check_branch
      %202 = sbr.rel (%p200) target = $region36
    $region35: #{vgg_dwt_forward.2} parent=5 // pred_region
      // Predicated region
      $region37: #{vgg_dwt_forward.2} parent=35 // pred_check
        %p203 = pneg %p32
      $region38: #{vgg_dwt_forward.2} parent=35 // pred_check_branch
        %205 = sbr.rel (%p203) target = $region40
      $region39: #{vgg_dwt_forward.2} parent=35 // pred_region
        %p206 = scmp.lt.s32.totalorder %s12, 1
        %s207 = scalar_select %p206, %s12, 1
        %s208 = smul.addr %s207, 54
        %s209 = smul.addr %s208, 8
        %s210 = scalar_lea.vmem %s0, %s209
      $region40: #{vgg_dwt_forward.2} parent=35 // pred_fallthru
        _
    $region36: #{vgg_dwt_forward.2} parent=5 // pred_fallthru
      _
    %p211 = scmp.le.s32.totalorder 1, %s12
    %p212 = scmp.lt.s32.totalorder %s12, 3
    %p213 = pnand %p211, %p212
    %p214 = pneg %p213
    // Predicated region
    $region41: #{vgg_dwt_forward.2} parent=5 // pred_check
      _
    $region42: #{vgg_dwt_forward.2} parent=5 // pred_check_branch
      %216 = sbr.rel (%p213) target = $region44
    $region43: #{vgg_dwt_forward.2} parent=5 // pred_region
      %s217 = ssub.s32 %s12, 1
      %p218 = scmp.lt.s32.totalorder %s17, 1
      %s219 = scalar_select %p218, %s17, 1
      %s220 = smul.addr %s219, 54
      %s221 = smul.addr %s220, 8
      %s222 = scalar_lea.vmem %s0, %s221
      %p223 = pneg %p38
      %p224 = pneg %p35
      %p225 = pneg %p59
      %p226 = pneg %p56
      %p227 = pneg %p80
      %p228 = pneg %p77
      %p229 = pneg %p101
      %p230 = pneg %p98
      %p231 = pneg %p122
      %p232 = pneg %p119
      %p233 = pneg %p143
      %p234 = pneg %p140
      %p235 = pneg %p169
      %p236 = pneg %p166
      %p237 = scmp.lt.s32.totalorder %s17, 1
      %s238 = scalar_select %p237, %s17, 1
      %s239 = smul.addr %s238, 7
      %s240 = smul.addr %s239, 4
      %s241 = scalar_lea.vmem %s6, %s240
      %p242 = scmp.lt.s32.totalorder %s17, 1
      %s243 = scalar_select %p242, %s17, 1
      %s244 = smul.addr %s243, 54
      %s245 = smul.addr %s244, 8
      %s246 = scalar_lea.vmem %s0, %s245
      %p247 = scmp.lt.s32.totalorder %s17, 1
      %s248 = scalar_select %p247, %s17, 1
      %s249 = smul.addr %s248, 7
      %s250 = smul.addr %s249, 4
      %s251 = scalar_lea.vmem %s6, %s250
      %v252 = vld [vmem:[%s246] sm:$0xff]
      %v253 = vld [vmem:[%s246 + $0x8] sm:$0xff]
      %v254 = vld [vmem:[%s246 + $0x10] sm:$0x3]
      %v255 = vld [vmem:[%s246 + $0x18] sm:$0xff]
      %v256 = vld [vmem:[%s246 + $0x20] sm:$0xff]
      %v257 = vld [vmem:[%s246 + $0x28] sm:$0x3]
      %v258 = vld [vmem:[%s246 + $0x30] sm:$0xff]
      %v259 = vld [vmem:[%s246 + $0x38] sm:$0xff]
      %v260 = vld [vmem:[%s246 + $0x40] sm:$0x3]
      %v261 = vld [vmem:[%s246 + $0x48] sm:$0xff]
      %v262 = vld [vmem:[%s246 + $0x50] sm:$0xff]
      %v263 = vld [vmem:[%s246 + $0x58] sm:$0x3]
      %v264 = vld [vmem:[%s246 + $0x60] sm:$0xff]
      %v265 = vld [vmem:[%s246 + $0x68] sm:$0xff]
      %v266 = vld [vmem:[%s246 + $0x70] sm:$0x3]
      %v267 = vld [vmem:[%s246 + $0x78] sm:$0xff]
      %v268 = vld [vmem:[%s246 + $0x80] sm:$0xff]
      %v269 = vld [vmem:[%s246 + $0x88] sm:$0x3]
      %v270 = vld [vmem:[%s246 + $0x90] sm:$0xff]
      %v271 = vld [vmem:[%s246 + $0x98] sm:$0xff]
      %v272 = vld [vmem:[%s246 + $0xa0] sm:$0x3]
      %v273 = vld [vmem:[%s246 + $0xa8] sm:$0xff]
      %v274 = vld [vmem:[%s246 + $0xb0] sm:$0xff]
      %v275 = vld [vmem:[%s246 + $0xb8] sm:$0x3]
      %v276 = vld [vmem:[%s246 + $0xc0] sm:$0xff]
      %v277 = vld [vmem:[%s246 + $0xc8] sm:$0xff]
      %v278 = vld [vmem:[%s246 + $0xd0] sm:$0x3]
      %v279 = vld [vmem:[%s246 + $0xd8] sm:$0xff]
      %v280 = vld [vmem:[%s246 + $0xe0] sm:$0xff]
      %v281 = vld [vmem:[%s246 + $0xe8] sm:$0x3]
      %v282 = vld [vmem:[%s246 + $0xf0] sm:$0xff]
      %v283 = vld [vmem:[%s246 + $0xf8] sm:$0xff]
      %v284 = vld [vmem:[%s246 + $0x100] sm:$0x3]
      %v285 = vld [vmem:[%s246 + $0x108] sm:$0xff]
      %v286 = vld [vmem:[%s246 + $0x110] sm:$0xff]
      %v287 = vld [vmem:[%s246 + $0x118] sm:$0x3]
      %v288 = vld [vmem:[%s246 + $0x120] sm:$0xff]
      %v289 = vld [vmem:[%s246 + $0x128] sm:$0xff]
      %v290 = vld [vmem:[%s246 + $0x130] sm:$0x3]
      %v291 = vld [vmem:[%s246 + $0x138] sm:$0xff]
      %v292 = vld [vmem:[%s246 + $0x140] sm:$0xff]
      %v293 = vld [vmem:[%s246 + $0x148] sm:$0x3]
      %v294 = vld [vmem:[%s246 + $0x150] sm:$0xff]
      %v295 = vld [vmem:[%s246 + $0x158] sm:$0xff]
      %v296 = vld [vmem:[%s246 + $0x160] sm:$0x3]
      %v297 = vld [vmem:[%s246 + $0x168] sm:$0xff]
      %v298 = vld [vmem:[%s246 + $0x170] sm:$0xff]
      %v299 = vld [vmem:[%s246 + $0x178] sm:$0x3]
      %v300 = vld [vmem:[%s246 + $0x180] sm:$0xff]
      %v301 = vld [vmem:[%s246 + $0x188] sm:$0xff]
      %v302 = vld [vmem:[%s246 + $0x190] sm:$0x3]
      %v303 = vld [vmem:[%s1] sm:$0x7]
      %vm320 = vcmask 1046528
      %v321 = vrot.slane %v253, 1
      %v322 = vrot.slane %v254, 1
      %v323 = vsel %vm320, %v321, %v322
      %v324 = vrot.slane %v256, 1
      %v325 = vrot.slane %v257, 1
      %v326 = vsel %vm320, %v324, %v325
      %v327 = vrot.slane %v259, 1
      %v328 = vrot.slane %v260, 1
      %v329 = vsel %vm320, %v327, %v328
      %v330 = vrot.slane %v262, 1
      %v331 = vrot.slane %v263, 1
      %v332 = vsel %vm320, %v330, %v331
      %v333 = vrot.slane %v265, 1
      %v334 = vrot.slane %v266, 1
      %v335 = vsel %vm320, %v333, %v334
      %v336 = vrot.slane %v268, 1
      %v337 = vrot.slane %v269, 1
      %v338 = vsel %vm320, %v336, %v337
      %v339 = vrot.slane %v271, 1
      %v340 = vrot.slane %v272, 1
      %v341 = vsel %vm320, %v339, %v340
      %v342 = vrot.slane %v274, 1
      %v343 = vrot.slane %v275, 1
      %v344 = vsel %vm320, %v342, %v343
      %s345 = scalar_lea.vmem %s1, 4
      %v346 = vld [vmem:[%s345] sm:$0x7]
      %vm347 = vcmask 23552
      %v348 = vsel %vm347, %v323, 0
      %v350 = vsel %vm347, %v326, 0
      %v352 = vsel %vm347, %v329, 0
      %v354 = vsel %vm347, %v332, 0
      %v356 = vsel %vm347, %v335, 0
      %v358 = vsel %vm347, %v338, 0
      %v360 = vsel %vm347, %v341, 0
      %v362 = vsel %vm347, %v344, 0
      %vm364 = vcmask 1042432
      %v366 = vsel %vm364, %v346, 0
      %368 = vmatprep.subr.mxu0 0.0
      %369 = vmatpush1.msra.mxu0 0.0
      %370 = vmatprep.subr.mxu0 0.0
      %371 = vmatpush1.msra.mxu0 0.0
      %372 = vmatprep.subr.mxu0 0.0
      %373 = vmatpush1.msra.mxu0 0.0
      %374 = vmatprep.subr.mxu0 0.0
      %375 = vmatpush1.msra.mxu0 0.0
      %376 = vmatprep.subr.mxu0 0.0
      %377 = vmatpush1.msra.mxu0 0.0
      %378 = vmatprep.subr.mxu0 0.0
      %379 = vmatpush1.msra.mxu0 0.0
      %380 = vmatprep.subr.mxu0 0.0
      %381 = vmatpush1.msra.mxu0 0.0
      %382 = vmatprep.subr.mxu0 0.0
      %383 = vmatpush1.msra.mxu0 0.0
      %384 = vmatprep.subr.mxu0 0.0
      %385 = vmatpush1.msra.mxu0 0.0
      %386 = vmatprep.subr.mxu0 0.0
      %387 = vmatpush1.msra.mxu0 0.0
      %388 = vmatprep.subr.mxu0 0.0
      %389 = vmatpush1.msra.mxu0 0.0
      %390 = vmatprep.subr.mxu0 0.0
      %391 = vmatpush1.msra.mxu0 0.0
      %392 = vmatprep.subr.mxu0 0.0
      %393 = vmatpush1.msra.mxu0 0.0
      %394 = vmatprep.subr.mxu0 0.0
      %395 = vmatpush1.msra.mxu0 0.0
      %396 = vmatprep.subr.mxu0 0.0
      %397 = vmatpush1.msra.mxu0 0.0
      %398 = vmatprep.subr.mxu0 0.0
      %399 = vmatpush1.msra.mxu0 %v366
      %400 = vmatprep.subr.mxu0 0.0
      %401 = vmatpush2.msra.mxu0 0.0
      %402 = vmatprep.subr.mxu0 0.0
      %403 = vmatpush2.msra.mxu0 0.0
      %404 = vmatprep.subr.mxu0 0.0
      %405 = vmatpush2.msra.mxu0 0.0
      %406 = vmatprep.subr.mxu0 0.0
      %407 = vmatpush2.msra.mxu0 0.0
      %408 = vmatprep.subr.mxu0 0.0
      %409 = vmatpush2.msra.mxu0 0.0
      %410 = vmatprep.subr.mxu0 0.0
      %411 = vmatpush2.msra.mxu0 0.0
      %412 = vmatprep.subr.mxu0 0.0
      %413 = vmatpush2.msra.mxu0 0.0
      %414 = vmatprep.subr.mxu0 0.0
      %415 = vmatpush2.msra.mxu0 0.0
      %416 = vmatprep.subr.mxu0 0.0
      %417 = vmatpush2.msra.mxu0 0.0
      %418 = vmatprep.subr.mxu0 0.0
      %419 = vmatpush2.msra.mxu0 0.0
      %420 = vmatprep.subr.mxu0 0.0
      %421 = vmatpush2.msra.mxu0 0.0
      %422 = vmatprep.subr.mxu0 0.0
      %423 = vmatpush2.msra.mxu0 0.0
      %424 = vmatprep.subr.mxu0 0.0
      %425 = vmatpush2.msra.mxu0 0.0
      %426 = vmatprep.subr.mxu0 0.0
      %427 = vmatpush2.msra.mxu0 0.0
      %428 = vmatprep.subr.mxu0 0.0
      %429 = vmatpush2.msra.mxu0 0.0
      %430 = vmatprep.subr.mxu0 0.0
      %431 = vmatpush2.msra.mxu0 0.0
      %432 = vmatprep.mubr.f32.mxu0 0.0
      %433 = vmatmul.mubr.f32.gmra.mxu0 %v348
      %v434 = vpop.f32.mrf.mxu0
      %v435 = vadd.f32 0.0, %v434
      %v436 = vpop.f32.mrf.mxu0
      %437 = vmatprep.mubr.f32.mxu0 0.0
      %438 = vmatmul.mubr.f32.gmra.mxu0 %v350
      %v439 = vpop.f32.mrf.mxu0
      %v440 = vadd.f32 0.0, %v439
      %v441 = vpop.f32.mrf.mxu0
      %442 = vmatprep.mubr.f32.mxu0 0.0
      %443 = vmatmul.mubr.f32.gmra.mxu0 %v352
      %v444 = vpop.f32.mrf.mxu0
      %v445 = vadd.f32 0.0, %v444
      %v446 = vpop.f32.mrf.mxu0
      %447 = vmatprep.mubr.f32.mxu0 0.0
      %448 = vmatmul.mubr.f32.gmra.mxu0 %v354
      %v449 = vpop.f32.mrf.mxu0
      %v450 = vadd.f32 0.0, %v449
      %v451 = vpop.f32.mrf.mxu0
      %452 = vmatprep.mubr.f32.mxu0 0.0
      %453 = vmatmul.mubr.f32.gmra.mxu0 %v356
      %v454 = vpop.f32.mrf.mxu0
      %v455 = vadd.f32 0.0, %v454
      %v456 = vpop.f32.mrf.mxu0
      %457 = vmatprep.mubr.f32.mxu0 0.0
      %458 = vmatmul.mubr.f32.gmra.mxu0 %v358
      %v459 = vpop.f32.mrf.mxu0
      %v460 = vadd.f32 0.0, %v459
      %v461 = vpop.f32.mrf.mxu0
      %462 = vmatprep.mubr.f32.mxu0 0.0
      %463 = vmatmul.mubr.f32.gmra.mxu0 %v360
      %v464 = vpop.f32.mrf.mxu0
      %v465 = vadd.f32 0.0, %v464
      %v466 = vpop.f32.mrf.mxu0
      %467 = vmatprep.mubr.f32.mxu0 0.0
      %468 = vmatmul.mubr.f32.gmra.mxu0 %v362
      %v469 = vpop.f32.mrf.mxu0
      %v470 = vadd.f32 0.0, %v469
      %v471 = vpop.f32.mrf.mxu0
      %472 = vdwg.mxu0
      %v474 = vsel %vm347, %v252, 0
      %v477 = vsel %vm347, %v255, 0
      %v480 = vsel %vm347, %v258, 0
      %v483 = vsel %vm347, %v261, 0
      %v486 = vsel %vm347, %v264, 0
      %v489 = vsel %vm347, %v267, 0
      %v492 = vsel %vm347, %v270, 0
      %v495 = vsel %vm347, %v273, 0
      %v498 = vsel %vm364, %v303, 0
      %500 = vmatprep.subr.mxu0 0.0
      %501 = vmatpush1.msra.mxu0 0.0
      %502 = vmatprep.subr.mxu0 0.0
      %503 = vmatpush1.msra.mxu0 0.0
      %504 = vmatprep.subr.mxu0 0.0
      %505 = vmatpush1.msra.mxu0 0.0
      %506 = vmatprep.subr.mxu0 0.0
      %507 = vmatpush1.msra.mxu0 0.0
      %508 = vmatprep.subr.mxu0 0.0
      %509 = vmatpush1.msra.mxu0 0.0
      %510 = vmatprep.subr.mxu0 0.0
      %511 = vmatpush1.msra.mxu0 0.0
      %512 = vmatprep.subr.mxu0 0.0
      %513 = vmatpush1.msra.mxu0 0.0
      %514 = vmatprep.subr.mxu0 0.0
      %515 = vmatpush1.msra.mxu0 0.0
      %516 = vmatprep.subr.mxu0 0.0
      %517 = vmatpush1.msra.mxu0 0.0
      %518 = vmatprep.subr.mxu0 0.0
      %519 = vmatpush1.msra.mxu0 0.0
      %520 = vmatprep.subr.mxu0 0.0
      %521 = vmatpush1.msra.mxu0 0.0
      %522 = vmatprep.subr.mxu0 0.0
      %523 = vmatpush1.msra.mxu0 0.0
      %524 = vmatprep.subr.mxu0 0.0
      %525 = vmatpush1.msra.mxu0 0.0
      %526 = vmatprep.subr.mxu0 0.0
      %527 = vmatpush1.msra.mxu0 0.0
      %528 = vmatprep.subr.mxu0 0.0
      %529 = vmatpush1.msra.mxu0 0.0
      %530 = vmatprep.subr.mxu0 0.0
      %531 = vmatpush1.msra.mxu0 %v498
      %532 = vmatprep.subr.mxu0 0.0
      %533 = vmatpush2.msra.mxu0 0.0
      %534 = vmatprep.subr.mxu0 0.0
      %535 = vmatpush2.msra.mxu0 0.0
      %536 = vmatprep.subr.mxu0 0.0
      %537 = vmatpush2.msra.mxu0 0.0
      %538 = vmatprep.subr.mxu0 0.0
      %539 = vmatpush2.msra.mxu0 0.0
      %540 = vmatprep.subr.mxu0 0.0
      %541 = vmatpush2.msra.mxu0 0.0
      %542 = vmatprep.subr.mxu0 0.0
      %543 = vmatpush2.msra.mxu0 0.0
      %544 = vmatprep.subr.mxu0 0.0
      %545 = vmatpush2.msra.mxu0 0.0
      %546 = vmatprep.subr.mxu0 0.0
      %547 = vmatpush2.msra.mxu0 0.0
      %548 = vmatprep.subr.mxu0 0.0
      %549 = vmatpush2.msra.mxu0 0.0
      %550 = vmatprep.subr.mxu0 0.0
      %551 = vmatpush2.msra.mxu0 0.0
      %552 = vmatprep.subr.mxu0 0.0
      %553 = vmatpush2.msra.mxu0 0.0
      %554 = vmatprep.subr.mxu0 0.0
      %555 = vmatpush2.msra.mxu0 0.0
      %556 = vmatprep.subr.mxu0 0.0
      %557 = vmatpush2.msra.mxu0 0.0
      %558 = vmatprep.subr.mxu0 0.0
      %559 = vmatpush2.msra.mxu0 0.0
      %560 = vmatprep.subr.mxu0 0.0
      %561 = vmatpush2.msra.mxu0 0.0
      %562 = vmatprep.subr.mxu0 0.0
      %563 = vmatpush2.msra.mxu0 0.0
      %564 = vmatprep.mubr.f32.mxu0 0.0
      %565 = vmatmul.mubr.f32.gmra.mxu0 %v474
      %v566 = vpop.f32.mrf.mxu0
      %v567 = vadd.f32 %v435, %v566
      %v568 = vpop.f32.mrf.mxu0
      %569 = vmatprep.mubr.f32.mxu0 0.0
      %570 = vmatmul.mubr.f32.gmra.mxu0 %v477
      %v571 = vpop.f32.mrf.mxu0
      %v572 = vadd.f32 %v440, %v571
      %v573 = vpop.f32.mrf.mxu0
      %574 = vmatprep.mubr.f32.mxu0 0.0
      %575 = vmatmul.mubr.f32.gmra.mxu0 %v480
      %v576 = vpop.f32.mrf.mxu0
      %v577 = vadd.f32 %v445, %v576
      %v578 = vpop.f32.mrf.mxu0
      %579 = vmatprep.mubr.f32.mxu0 0.0
      %580 = vmatmul.mubr.f32.gmra.mxu0 %v483
      %v581 = vpop.f32.mrf.mxu0
      %v582 = vadd.f32 %v450, %v581
      %v583 = vpop.f32.mrf.mxu0
      %584 = vmatprep.mubr.f32.mxu0 0.0
      %585 = vmatmul.mubr.f32.gmra.mxu0 %v486
      %v586 = vpop.f32.mrf.mxu0
      %v587 = vadd.f32 %v455, %v586
      %v588 = vpop.f32.mrf.mxu0
      %589 = vmatprep.mubr.f32.mxu0 0.0
      %590 = vmatmul.mubr.f32.gmra.mxu0 %v489
      %v591 = vpop.f32.mrf.mxu0
      %v592 = vadd.f32 %v460, %v591
      %v593 = vpop.f32.mrf.mxu0
      %594 = vmatprep.mubr.f32.mxu0 0.0
      %595 = vmatmul.mubr.f32.gmra.mxu0 %v492
      %v596 = vpop.f32.mrf.mxu0
      %v597 = vadd.f32 %v465, %v596
      %v598 = vpop.f32.mrf.mxu0
      %599 = vmatprep.mubr.f32.mxu0 0.0
      %600 = vmatmul.mubr.f32.gmra.mxu0 %v495
      %v601 = vpop.f32.mrf.mxu0
      %v602 = vadd.f32 %v470, %v601
      %v603 = vpop.f32.mrf.mxu0
      %604 = vdwg.mxu0
      %v605 = vrot.slane %v252, 1
      %v606 = vsel %vm320, %v605, %v321
      %v607 = vrot.slane %v255, 1
      %v608 = vsel %vm320, %v607, %v324
      %v609 = vrot.slane %v258, 1
      %v610 = vsel %vm320, %v609, %v327
      %v611 = vrot.slane %v261, 1
      %v612 = vsel %vm320, %v611, %v330
      %v613 = vrot.slane %v264, 1
      %v614 = vsel %vm320, %v613, %v333
      %v615 = vrot.slane %v267, 1
      %v616 = vsel %vm320, %v615, %v336
      %v617 = vrot.slane %v270, 1
      %v618 = vsel %vm320, %v617, %v339
      %v619 = vrot.slane %v273, 1
      %v620 = vsel %vm320, %v619, %v342
      %s621 = scalar_lea.vmem %s1, 8
      %v622 = vld [vmem:[%s621] sm:$0x7]
      %v623 = vsel %vm347, %v606, 0
      %v625 = vsel %vm347, %v608, 0
      %v627 = vsel %vm347, %v610, 0
      %v629 = vsel %vm347, %v612, 0
      %v631 = vsel %vm347, %v614, 0
      %v633 = vsel %vm347, %v616, 0
      %v635 = vsel %vm347, %v618, 0
      %v637 = vsel %vm347, %v620, 0
      %v640 = vsel %vm364, %v622, 0
      %642 = vmatprep.subr.mxu0 0.0
      %643 = vmatpush1.msra.mxu0 0.0
      %644 = vmatprep.subr.mxu0 0.0
      %645 = vmatpush1.msra.mxu0 0.0
      %646 = vmatprep.subr.mxu0 0.0
      %647 = vmatpush1.msra.mxu0 0.0
      %648 = vmatprep.subr.mxu0 0.0
      %649 = vmatpush1.msra.mxu0 0.0
      %650 = vmatprep.subr.mxu0 0.0
      %651 = vmatpush1.msra.mxu0 0.0
      %652 = vmatprep.subr.mxu0 0.0
      %653 = vmatpush1.msra.mxu0 0.0
      %654 = vmatprep.subr.mxu0 0.0
      %655 = vmatpush1.msra.mxu0 0.0
      %656 = vmatprep.subr.mxu0 0.0
      %657 = vmatpush1.msra.mxu0 0.0
      %658 = vmatprep.subr.mxu0 0.0
      %659 = vmatpush1.msra.mxu0 0.0
      %660 = vmatprep.subr.mxu0 0.0
      %661 = vmatpush1.msra.mxu0 0.0
      %662 = vmatprep.subr.mxu0 0.0
      %663 = vmatpush1.msra.mxu0 0.0
      %664 = vmatprep.subr.mxu0 0.0
      %665 = vmatpush1.msra.mxu0 0.0
      %666 = vmatprep.subr.mxu0 0.0
      %667 = vmatpush1.msra.mxu0 0.0
      %668 = vmatprep.subr.mxu0 0.0
      %669 = vmatpush1.msra.mxu0 0.0
      %670 = vmatprep.subr.mxu0 0.0
      %671 = vmatpush1.msra.mxu0 0.0
      %672 = vmatprep.subr.mxu0 0.0
      %673 = vmatpush1.msra.mxu0 %v640
      %674 = vmatprep.subr.mxu0 0.0
      %675 = vmatpush2.msra.mxu0 0.0
      %676 = vmatprep.subr.mxu0 0.0
      %677 = vmatpush2.msra.mxu0 0.0
      %678 = vmatprep.subr.mxu0 0.0
      %679 = vmatpush2.msra.mxu0 0.0
      %680 = vmatprep.subr.mxu0 0.0
      %681 = vmatpush2.msra.mxu0 0.0
      %682 = vmatprep.subr.mxu0 0.0
      %683 = vmatpush2.msra.mxu0 0.0
      %684 = vmatprep.subr.mxu0 0.0
      %685 = vmatpush2.msra.mxu0 0.0
      %686 = vmatprep.subr.mxu0 0.0
      %687 = vmatpush2.msra.mxu0 0.0
      %688 = vmatprep.subr.mxu0 0.0
      %689 = vmatpush2.msra.mxu0 0.0
      %690 = vmatprep.subr.mxu0 0.0
      %691 = vmatpush2.msra.mxu0 0.0
      %692 = vmatprep.subr.mxu0 0.0
      %693 = vmatpush2.msra.mxu0 0.0
      %694 = vmatprep.subr.mxu0 0.0
      %695 = vmatpush2.msra.mxu0 0.0
      %696 = vmatprep.subr.mxu0 0.0
      %697 = vmatpush2.msra.mxu0 0.0
      %698 = vmatprep.subr.mxu0 0.0
      %699 = vmatpush2.msra.mxu0 0.0
      %700 = vmatprep.subr.mxu0 0.0
      %701 = vmatpush2.msra.mxu0 0.0
      %702 = vmatprep.subr.mxu0 0.0
      %703 = vmatpush2.msra.mxu0 0.0
      %704 = vmatprep.subr.mxu0 0.0
      %705 = vmatpush2.msra.mxu0 0.0
      %706 = vmatprep.mubr.f32.mxu0 0.0
      %707 = vmatmul.mubr.f32.gmra.mxu0 %v623
      %v708 = vpop.f32.mrf.mxu0
      %v709 = vadd.f32 0.0, %v708
      %v710 = vpop.f32.mrf.mxu0
      %711 = vmatprep.mubr.f32.mxu0 0.0
      %712 = vmatmul.mubr.f32.gmra.mxu0 %v625
      %v713 = vpop.f32.mrf.mxu0
      %v714 = vadd.f32 0.0, %v713
      %v715 = vpop.f32.mrf.mxu0
      %716 = vmatprep.mubr.f32.mxu0 0.0
      %717 = vmatmul.mubr.f32.gmra.mxu0 %v627
      %v718 = vpop.f32.mrf.mxu0
      %v719 = vadd.f32 0.0, %v718
      %v720 = vpop.f32.mrf.mxu0
      %721 = vmatprep.mubr.f32.mxu0 0.0
      %722 = vmatmul.mubr.f32.gmra.mxu0 %v629
      %v723 = vpop.f32.mrf.mxu0
      %v724 = vadd.f32 0.0, %v723
      %v725 = vpop.f32.mrf.mxu0
      %726 = vmatprep.mubr.f32.mxu0 0.0
      %727 = vmatmul.mubr.f32.gmra.mxu0 %v631
      %v728 = vpop.f32.mrf.mxu0
      %v729 = vadd.f32 0.0, %v728
      %v730 = vpop.f32.mrf.mxu0
      %731 = vmatprep.mubr.f32.mxu0 0.0
      %732 = vmatmul.mubr.f32.gmra.mxu0 %v633
      %v733 = vpop.f32.mrf.mxu0
      %v734 = vadd.f32 0.0, %v733
      %v735 = vpop.f32.mrf.mxu0
      %736 = vmatprep.mubr.f32.mxu0 0.0
      %737 = vmatmul.mubr.f32.gmra.mxu0 %v635
      %v738 = vpop.f32.mrf.mxu0
      %v739 = vadd.f32 0.0, %v738
      %v740 = vpop.f32.mrf.mxu0
      %741 = vmatprep.mubr.f32.mxu0 0.0
      %742 = vmatmul.mubr.f32.gmra.mxu0 %v637
      %v743 = vpop.f32.mrf.mxu0
      %v744 = vadd.f32 0.0, %v743
      %v745 = vpop.f32.mrf.mxu0
      %746 = vdwg.mxu0
      %v747 = vadd.f32 %v567, %v709
      %v748 = vadd.f32 %v572, %v714
      %v749 = vadd.f32 %v577, %v719
      %v750 = vadd.f32 %v582, %v724
      %v751 = vadd.f32 %v587, %v729
      %v752 = vadd.f32 %v592, %v734
      %v753 = vadd.f32 %v597, %v739
      %v754 = vadd.f32 %v602, %v744
      %s755 = scalar_lea.vmem %s1, 12
      %v756 = vld [vmem:[%s755] sm:$0x7]
      %v758 = vsel %vm347, %v279, 0
      %v761 = vsel %vm347, %v282, 0
      %v764 = vsel %vm347, %v285, 0
      %v767 = vsel %vm347, %v288, 0
      %v770 = vsel %vm347, %v291, 0
      %v773 = vsel %vm347, %v294, 0
      %v776 = vsel %vm347, %v297, 0
      %v779 = vsel %vm347, %v300, 0
      %v782 = vsel %vm364, %v756, 0
      %784 = vmatprep.subr.mxu0 0.0
      %785 = vmatpush1.msra.mxu0 0.0
      %786 = vmatprep.subr.mxu0 0.0
      %787 = vmatpush1.msra.mxu0 0.0
      %788 = vmatprep.subr.mxu0 0.0
      %789 = vmatpush1.msra.mxu0 0.0
      %790 = vmatprep.subr.mxu0 0.0
      %791 = vmatpush1.msra.mxu0 0.0
      %792 = vmatprep.subr.mxu0 0.0
      %793 = vmatpush1.msra.mxu0 0.0
      %794 = vmatprep.subr.mxu0 0.0
      %795 = vmatpush1.msra.mxu0 0.0
      %796 = vmatprep.subr.mxu0 0.0
      %797 = vmatpush1.msra.mxu0 0.0
      %798 = vmatprep.subr.mxu0 0.0
      %799 = vmatpush1.msra.mxu0 0.0
      %800 = vmatprep.subr.mxu0 0.0
      %801 = vmatpush1.msra.mxu0 0.0
      %802 = vmatprep.subr.mxu0 0.0
      %803 = vmatpush1.msra.mxu0 0.0
      %804 = vmatprep.subr.mxu0 0.0
      %805 = vmatpush1.msra.mxu0 0.0
      %806 = vmatprep.subr.mxu0 0.0
      %807 = vmatpush1.msra.mxu0 0.0
      %808 = vmatprep.subr.mxu0 0.0
      %809 = vmatpush1.msra.mxu0 0.0
      %810 = vmatprep.subr.mxu0 0.0
      %811 = vmatpush1.msra.mxu0 0.0
      %812 = vmatprep.subr.mxu0 0.0
      %813 = vmatpush1.msra.mxu0 0.0
      %814 = vmatprep.subr.mxu0 0.0
      %815 = vmatpush1.msra.mxu0 %v782
      %816 = vmatprep.subr.mxu0 0.0
      %817 = vmatpush2.msra.mxu0 0.0
      %818 = vmatprep.subr.mxu0 0.0
      %819 = vmatpush2.msra.mxu0 0.0
      %820 = vmatprep.subr.mxu0 0.0
      %821 = vmatpush2.msra.mxu0 0.0
      %822 = vmatprep.subr.mxu0 0.0
      %823 = vmatpush2.msra.mxu0 0.0
      %824 = vmatprep.subr.mxu0 0.0
      %825 = vmatpush2.msra.mxu0 0.0
      %826 = vmatprep.subr.mxu0 0.0
      %827 = vmatpush2.msra.mxu0 0.0
      %828 = vmatprep.subr.mxu0 0.0
      %829 = vmatpush2.msra.mxu0 0.0
      %830 = vmatprep.subr.mxu0 0.0
      %831 = vmatpush2.msra.mxu0 0.0
      %832 = vmatprep.subr.mxu0 0.0
      %833 = vmatpush2.msra.mxu0 0.0
      %834 = vmatprep.subr.mxu0 0.0
      %835 = vmatpush2.msra.mxu0 0.0
      %836 = vmatprep.subr.mxu0 0.0
      %837 = vmatpush2.msra.mxu0 0.0
      %838 = vmatprep.subr.mxu0 0.0
      %839 = vmatpush2.msra.mxu0 0.0
      %840 = vmatprep.subr.mxu0 0.0
      %841 = vmatpush2.msra.mxu0 0.0
      %842 = vmatprep.subr.mxu0 0.0
      %843 = vmatpush2.msra.mxu0 0.0
      %844 = vmatprep.subr.mxu0 0.0
      %845 = vmatpush2.msra.mxu0 0.0
      %846 = vmatprep.subr.mxu0 0.0
      %847 = vmatpush2.msra.mxu0 0.0
      %848 = vmatprep.mubr.f32.mxu0 0.0
      %849 = vmatmul.mubr.f32.gmra.mxu0 %v758
      %v850 = vpop.f32.mrf.mxu0
      %v851 = vadd.f32 0.0, %v850
      %v852 = vpop.f32.mrf.mxu0
      %853 = vmatprep.mubr.f32.mxu0 0.0
      %854 = vmatmul.mubr.f32.gmra.mxu0 %v761
      %v855 = vpop.f32.mrf.mxu0
      %v856 = vadd.f32 0.0, %v855
      %v857 = vpop.f32.mrf.mxu0
      %858 = vmatprep.mubr.f32.mxu0 0.0
      %859 = vmatmul.mubr.f32.gmra.mxu0 %v764
      %v860 = vpop.f32.mrf.mxu0
      %v861 = vadd.f32 0.0, %v860
      %v862 = vpop.f32.mrf.mxu0
      %863 = vmatprep.mubr.f32.mxu0 0.0
      %864 = vmatmul.mubr.f32.gmra.mxu0 %v767
      %v865 = vpop.f32.mrf.mxu0
      %v866 = vadd.f32 0.0, %v865
      %v867 = vpop.f32.mrf.mxu0
      %868 = vmatprep.mubr.f32.mxu0 0.0
      %869 = vmatmul.mubr.f32.gmra.mxu0 %v770
      %v870 = vpop.f32.mrf.mxu0
      %v871 = vadd.f32 0.0, %v870
      %v872 = vpop.f32.mrf.mxu0
      %873 = vmatprep.mubr.f32.mxu0 0.0
      %874 = vmatmul.mubr.f32.gmra.mxu0 %v773
      %v875 = vpop.f32.mrf.mxu0
      %v876 = vadd.f32 0.0, %v875
      %v877 = vpop.f32.mrf.mxu0
      %878 = vmatprep.mubr.f32.mxu0 0.0
      %879 = vmatmul.mubr.f32.gmra.mxu0 %v776
      %v880 = vpop.f32.mrf.mxu0
      %v881 = vadd.f32 0.0, %v880
      %v882 = vpop.f32.mrf.mxu0
      %883 = vmatprep.mubr.f32.mxu0 0.0
      %884 = vmatmul.mubr.f32.gmra.mxu0 %v779
      %v885 = vpop.f32.mrf.mxu0
      %v886 = vadd.f32 0.0, %v885
      %v887 = vpop.f32.mrf.mxu0
      %888 = vdwg.mxu0
      %v889 = vadd.f32 %v747, %v851
      %v890 = vadd.f32 %v748, %v856
      %v891 = vadd.f32 %v749, %v861
      %v892 = vadd.f32 %v750, %v866
      %v893 = vadd.f32 %v751, %v871
      %v894 = vadd.f32 %v752, %v876
      %v895 = vadd.f32 %v753, %v881
      %v896 = vadd.f32 %v754, %v886
      %v913 = vrot.slane %v280, 1
      %v914 = vrot.slane %v281, 1
      %v915 = vsel %vm320, %v913, %v914
      %v916 = vrot.slane %v283, 1
      %v917 = vrot.slane %v284, 1
      %v918 = vsel %vm320, %v916, %v917
      %v919 = vrot.slane %v286, 1
      %v920 = vrot.slane %v287, 1
      %v921 = vsel %vm320, %v919, %v920
      %v922 = vrot.slane %v289, 1
      %v923 = vrot.slane %v290, 1
      %v924 = vsel %vm320, %v922, %v923
      %v925 = vrot.slane %v292, 1
      %v926 = vrot.slane %v293, 1
      %v927 = vsel %vm320, %v925, %v926
      %v928 = vrot.slane %v295, 1
      %v929 = vrot.slane %v296, 1
      %v930 = vsel %vm320, %v928, %v929
      %v931 = vrot.slane %v298, 1
      %v932 = vrot.slane %v299, 1
      %v933 = vsel %vm320, %v931, %v932
      %v934 = vrot.slane %v301, 1
      %v935 = vrot.slane %v302, 1
      %v936 = vsel %vm320, %v934, %v935
      %s937 = scalar_lea.vmem %s1, 16
      %v938 = vld [vmem:[%s937] sm:$0x7]
      %v939 = vsel %vm347, %v915, 0
      %v941 = vsel %vm347, %v918, 0
      %v943 = vsel %vm347, %v921, 0
      %v945 = vsel %vm347, %v924, 0
      %v947 = vsel %vm347, %v927, 0
      %v949 = vsel %vm347, %v930, 0
      %v951 = vsel %vm347, %v933, 0
      %v953 = vsel %vm347, %v936, 0
      %v956 = vsel %vm364, %v938, 0
      %958 = vmatprep.subr.mxu0 0.0
      %959 = vmatpush1.msra.mxu0 0.0
      %960 = vmatprep.subr.mxu0 0.0
      %961 = vmatpush1.msra.mxu0 0.0
      %962 = vmatprep.subr.mxu0 0.0
      %963 = vmatpush1.msra.mxu0 0.0
      %964 = vmatprep.subr.mxu0 0.0
      %965 = vmatpush1.msra.mxu0 0.0
      %966 = vmatprep.subr.mxu0 0.0
      %967 = vmatpush1.msra.mxu0 0.0
      %968 = vmatprep.subr.mxu0 0.0
      %969 = vmatpush1.msra.mxu0 0.0
      %970 = vmatprep.subr.mxu0 0.0
      %971 = vmatpush1.msra.mxu0 0.0
      %972 = vmatprep.subr.mxu0 0.0
      %973 = vmatpush1.msra.mxu0 0.0
      %974 = vmatprep.subr.mxu0 0.0
      %975 = vmatpush1.msra.mxu0 0.0
      %976 = vmatprep.subr.mxu0 0.0
      %977 = vmatpush1.msra.mxu0 0.0
      %978 = vmatprep.subr.mxu0 0.0
      %979 = vmatpush1.msra.mxu0 0.0
      %980 = vmatprep.subr.mxu0 0.0
      %981 = vmatpush1.msra.mxu0 0.0
      %982 = vmatprep.subr.mxu0 0.0
      %983 = vmatpush1.msra.mxu0 0.0
      %984 = vmatprep.subr.mxu0 0.0
      %985 = vmatpush1.msra.mxu0 0.0
      %986 = vmatprep.subr.mxu0 0.0
      %987 = vmatpush1.msra.mxu0 0.0
      %988 = vmatprep.subr.mxu0 0.0
      %989 = vmatpush1.msra.mxu0 %v956
      %990 = vmatprep.subr.mxu0 0.0
      %991 = vmatpush2.msra.mxu0 0.0
      %992 = vmatprep.subr.mxu0 0.0
      %993 = vmatpush2.msra.mxu0 0.0
      %994 = vmatprep.subr.mxu0 0.0
      %995 = vmatpush2.msra.mxu0 0.0
      %996 = vmatprep.subr.mxu0 0.0
      %997 = vmatpush2.msra.mxu0 0.0
      %998 = vmatprep.subr.mxu0 0.0
      %999 = vmatpush2.msra.mxu0 0.0
      %1000 = vmatprep.subr.mxu0 0.0
      %1001 = vmatpush2.msra.mxu0 0.0
      %1002 = vmatprep.subr.mxu0 0.0
      %1003 = vmatpush2.msra.mxu0 0.0
      %1004 = vmatprep.subr.mxu0 0.0
      %1005 = vmatpush2.msra.mxu0 0.0
      %1006 = vmatprep.subr.mxu0 0.0
      %1007 = vmatpush2.msra.mxu0 0.0
      %1008 = vmatprep.subr.mxu0 0.0
      %1009 = vmatpush2.msra.mxu0 0.0
      %1010 = vmatprep.subr.mxu0 0.0
      %1011 = vmatpush2.msra.mxu0 0.0
      %1012 = vmatprep.subr.mxu0 0.0
      %1013 = vmatpush2.msra.mxu0 0.0
      %1014 = vmatprep.subr.mxu0 0.0
      %1015 = vmatpush2.msra.mxu0 0.0
      %1016 = vmatprep.subr.mxu0 0.0
      %1017 = vmatpush2.msra.mxu0 0.0
      %1018 = vmatprep.subr.mxu0 0.0
      %1019 = vmatpush2.msra.mxu0 0.0
      %1020 = vmatprep.subr.mxu0 0.0
      %1021 = vmatpush2.msra.mxu0 0.0
      %1022 = vmatprep.mubr.f32.mxu0 0.0
      %1023 = vmatmul.mubr.f32.gmra.mxu0 %v939
      %v1024 = vpop.f32.mrf.mxu0
      %v1025 = vadd.f32 0.0, %v1024
      %v1026 = vpop.f32.mrf.mxu0
      %1027 = vmatprep.mubr.f32.mxu0 0.0
      %1028 = vmatmul.mubr.f32.gmra.mxu0 %v941
      %v1029 = vpop.f32.mrf.mxu0
      %v1030 = vadd.f32 0.0, %v1029
      %v1031 = vpop.f32.mrf.mxu0
      %1032 = vmatprep.mubr.f32.mxu0 0.0
      %1033 = vmatmul.mubr.f32.gmra.mxu0 %v943
      %v1034 = vpop.f32.mrf.mxu0
      %v1035 = vadd.f32 0.0, %v1034
      %v1036 = vpop.f32.mrf.mxu0
      %1037 = vmatprep.mubr.f32.mxu0 0.0
      %1038 = vmatmul.mubr.f32.gmra.mxu0 %v945
      %v1039 = vpop.f32.mrf.mxu0
      %v1040 = vadd.f32 0.0, %v1039
      %v1041 = vpop.f32.mrf.mxu0
      %1042 = vmatprep.mubr.f32.mxu0 0.0
      %1043 = vmatmul.mubr.f32.gmra.mxu0 %v947
      %v1044 = vpop.f32.mrf.mxu0
      %v1045 = vadd.f32 0.0, %v1044
      %v1046 = vpop.f32.mrf.mxu0
      %1047 = vmatprep.mubr.f32.mxu0 0.0
      %1048 = vmatmul.mubr.f32.gmra.mxu0 %v949
      %v1049 = vpop.f32.mrf.mxu0
      %v1050 = vadd.f32 0.0, %v1049
      %v1051 = vpop.f32.mrf.mxu0
      %1052 = vmatprep.mubr.f32.mxu0 0.0
      %1053 = vmatmul.mubr.f32.gmra.mxu0 %v951
      %v1054 = vpop.f32.mrf.mxu0
      %v1055 = vadd.f32 0.0, %v1054
      %v1056 = vpop.f32.mrf.mxu0
      %1057 = vmatprep.mubr.f32.mxu0 0.0
      %1058 = vmatmul.mubr.f32.gmra.mxu0 %v953
      %v1059 = vpop.f32.mrf.mxu0
      %v1060 = vadd.f32 0.0, %v1059
      %v1061 = vpop.f32.mrf.mxu0
      %1062 = vdwg.mxu0
      %v1063 = vadd.f32 %v889, %v1025
      %v1064 = vadd.f32 %v890, %v1030
      %v1065 = vadd.f32 %v891, %v1035
      %v1066 = vadd.f32 %v892, %v1040
      %v1067 = vadd.f32 %v893, %v1045
      %v1068 = vadd.f32 %v894, %v1050
      %v1069 = vadd.f32 %v895, %v1055
      %v1070 = vadd.f32 %v896, %v1060
      %v1071 = vrot.slane %v279, 1
      %v1072 = vsel %vm320, %v1071, %v913
      %v1073 = vrot.slane %v282, 1
      %v1074 = vsel %vm320, %v1073, %v916
      %v1075 = vrot.slane %v285, 1
      %v1076 = vsel %vm320, %v1075, %v919
      %v1077 = vrot.slane %v288, 1
      %v1078 = vsel %vm320, %v1077, %v922
      %v1079 = vrot.slane %v291, 1
      %v1080 = vsel %vm320, %v1079, %v925
      %v1081 = vrot.slane %v294, 1
      %v1082 = vsel %vm320, %v1081, %v928
      %v1083 = vrot.slane %v297, 1
      %v1084 = vsel %vm320, %v1083, %v931
      %v1085 = vrot.slane %v300, 1
      %v1086 = vsel %vm320, %v1085, %v934
      %s1087 = scalar_lea.vmem %s1, 20
      %v1088 = vld [vmem:[%s1087] sm:$0x7]
      %v1089 = vsel %vm347, %v1072, 0
      %v1091 = vsel %vm347, %v1074, 0
      %v1093 = vsel %vm347, %v1076, 0
      %v1095 = vsel %vm347, %v1078, 0
      %v1097 = vsel %vm347, %v1080, 0
      %v1099 = vsel %vm347, %v1082, 0
      %v1101 = vsel %vm347, %v1084, 0
      %v1103 = vsel %vm347, %v1086, 0
      %v1106 = vsel %vm364, %v1088, 0
      %1108 = vmatprep.subr.mxu0 0.0
      %1109 = vmatpush1.msra.mxu0 0.0
      %1110 = vmatprep.subr.mxu0 0.0
      %1111 = vmatpush1.msra.mxu0 0.0
      %1112 = vmatprep.subr.mxu0 0.0
      %1113 = vmatpush1.msra.mxu0 0.0
      %1114 = vmatprep.subr.mxu0 0.0
      %1115 = vmatpush1.msra.mxu0 0.0
      %1116 = vmatprep.subr.mxu0 0.0
      %1117 = vmatpush1.msra.mxu0 0.0
      %1118 = vmatprep.subr.mxu0 0.0
      %1119 = vmatpush1.msra.mxu0 0.0
      %1120 = vmatprep.subr.mxu0 0.0
      %1121 = vmatpush1.msra.mxu0 0.0
      %1122 = vmatprep.subr.mxu0 0.0
      %1123 = vmatpush1.msra.mxu0 0.0
      %1124 = vmatprep.subr.mxu0 0.0
      %1125 = vmatpush1.msra.mxu0 0.0
      %1126 = vmatprep.subr.mxu0 0.0
      %1127 = vmatpush1.msra.mxu0 0.0
      %1128 = vmatprep.subr.mxu0 0.0
      %1129 = vmatpush1.msra.mxu0 0.0
      %1130 = vmatprep.subr.mxu0 0.0
      %1131 = vmatpush1.msra.mxu0 0.0
      %1132 = vmatprep.subr.mxu0 0.0
      %1133 = vmatpush1.msra.mxu0 0.0
      %1134 = vmatprep.subr.mxu0 0.0
      %1135 = vmatpush1.msra.mxu0 0.0
      %1136 = vmatprep.subr.mxu0 0.0
      %1137 = vmatpush1.msra.mxu0 0.0
      %1138 = vmatprep.subr.mxu0 0.0
      %1139 = vmatpush1.msra.mxu0 %v1106
      %1140 = vmatprep.subr.mxu0 0.0
      %1141 = vmatpush2.msra.mxu0 0.0
      %1142 = vmatprep.subr.mxu0 0.0
      %1143 = vmatpush2.msra.mxu0 0.0
      %1144 = vmatprep.subr.mxu0 0.0
      %1145 = vmatpush2.msra.mxu0 0.0
      %1146 = vmatprep.subr.mxu0 0.0
      %1147 = vmatpush2.msra.mxu0 0.0
      %1148 = vmatprep.subr.mxu0 0.0
      %1149 = vmatpush2.msra.mxu0 0.0
      %1150 = vmatprep.subr.mxu0 0.0
      %1151 = vmatpush2.msra.mxu0 0.0
      %1152 = vmatprep.subr.mxu0 0.0
      %1153 = vmatpush2.msra.mxu0 0.0
      %1154 = vmatprep.subr.mxu0 0.0
      %1155 = vmatpush2.msra.mxu0 0.0
      %1156 = vmatprep.subr.mxu0 0.0
      %1157 = vmatpush2.msra.mxu0 0.0
      %1158 = vmatprep.subr.mxu0 0.0
      %1159 = vmatpush2.msra.mxu0 0.0
      %1160 = vmatprep.subr.mxu0 0.0
      %1161 = vmatpush2.msra.mxu0 0.0
      %1162 = vmatprep.subr.mxu0 0.0
      %1163 = vmatpush2.msra.mxu0 0.0
      %1164 = vmatprep.subr.mxu0 0.0
      %1165 = vmatpush2.msra.mxu0 0.0
      %1166 = vmatprep.subr.mxu0 0.0
      %1167 = vmatpush2.msra.mxu0 0.0
      %1168 = vmatprep.subr.mxu0 0.0
      %1169 = vmatpush2.msra.mxu0 0.0
      %1170 = vmatprep.subr.mxu0 0.0
      %1171 = vmatpush2.msra.mxu0 0.0
      %1172 = vmatprep.mubr.f32.mxu0 0.0
      %1173 = vmatmul.mubr.f32.gmra.mxu0 %v1089
      %v1174 = vpop.f32.mrf.mxu0
      %v1175 = vadd.f32 0.0, %v1174
      %v1176 = vpop.f32.mrf.mxu0
      %1177 = vmatprep.mubr.f32.mxu0 0.0
      %1178 = vmatmul.mubr.f32.gmra.mxu0 %v1091
      %v1179 = vpop.f32.mrf.mxu0
      %v1180 = vadd.f32 0.0, %v1179
      %v1181 = vpop.f32.mrf.mxu0
      %1182 = vmatprep.mubr.f32.mxu0 0.0
      %1183 = vmatmul.mubr.f32.gmra.mxu0 %v1093
      %v1184 = vpop.f32.mrf.mxu0
      %v1185 = vadd.f32 0.0, %v1184
      %v1186 = vpop.f32.mrf.mxu0
      %1187 = vmatprep.mubr.f32.mxu0 0.0
      %1188 = vmatmul.mubr.f32.gmra.mxu0 %v1095
      %v1189 = vpop.f32.mrf.mxu0
      %v1190 = vadd.f32 0.0, %v1189
      %v1191 = vpop.f32.mrf.mxu0
      %1192 = vmatprep.mubr.f32.mxu0 0.0
      %1193 = vmatmul.mubr.f32.gmra.mxu0 %v1097
      %v1194 = vpop.f32.mrf.mxu0
      %v1195 = vadd.f32 0.0, %v1194
      %v1196 = vpop.f32.mrf.mxu0
      %1197 = vmatprep.mubr.f32.mxu0 0.0
      %1198 = vmatmul.mubr.f32.gmra.mxu0 %v1099
      %v1199 = vpop.f32.mrf.mxu0
      %v1200 = vadd.f32 0.0, %v1199
      %v1201 = vpop.f32.mrf.mxu0
      %1202 = vmatprep.mubr.f32.mxu0 0.0
      %1203 = vmatmul.mubr.f32.gmra.mxu0 %v1101
      %v1204 = vpop.f32.mrf.mxu0
      %v1205 = vadd.f32 0.0, %v1204
      %v1206 = vpop.f32.mrf.mxu0
      %1207 = vmatprep.mubr.f32.mxu0 0.0
      %1208 = vmatmul.mubr.f32.gmra.mxu0 %v1103
      %v1209 = vpop.f32.mrf.mxu0
      %v1210 = vadd.f32 0.0, %v1209
      %v1211 = vpop.f32.mrf.mxu0
      %1212 = vdwg.mxu0
      %v1213 = vadd.f32 %v1063, %v1175
      %v1214 = vadd.f32 %v1064, %v1180
      %v1215 = vadd.f32 %v1065, %v1185
      %v1216 = vadd.f32 %v1066, %v1190
      %v1217 = vadd.f32 %v1067, %v1195
      %v1218 = vadd.f32 %v1068, %v1200
      %v1219 = vadd.f32 %v1069, %v1205
      %v1220 = vadd.f32 %v1070, %v1210
      %s1221 = scalar_lea.vmem %s1, 24
      %v1222 = vld [vmem:[%s1221] sm:$0x7]
      %v1224 = vsel %vm347, %v276, 0
      %v1227 = vsel %vm364, %v1222, 0
      %1229 = vmatprep.subr.mxu0 0.0
      %1230 = vmatpush1.msra.mxu0 0.0
      %1231 = vmatprep.subr.mxu0 0.0
      %1232 = vmatpush1.msra.mxu0 0.0
      %1233 = vmatprep.subr.mxu0 0.0
      %1234 = vmatpush1.msra.mxu0 0.0
      %1235 = vmatprep.subr.mxu0 0.0
      %1236 = vmatpush1.msra.mxu0 0.0
      %1237 = vmatprep.subr.mxu0 0.0
      %1238 = vmatpush1.msra.mxu0 0.0
      %1239 = vmatprep.subr.mxu0 0.0
      %1240 = vmatpush1.msra.mxu0 0.0
      %1241 = vmatprep.subr.mxu0 0.0
      %1242 = vmatpush1.msra.mxu0 0.0
      %1243 = vmatprep.subr.mxu0 0.0
      %1244 = vmatpush1.msra.mxu0 0.0
      %1245 = vmatprep.subr.mxu0 0.0
      %1246 = vmatpush1.msra.mxu0 0.0
      %1247 = vmatprep.subr.mxu0 0.0
      %1248 = vmatpush1.msra.mxu0 0.0
      %1249 = vmatprep.subr.mxu0 0.0
      %1250 = vmatpush1.msra.mxu0 0.0
      %1251 = vmatprep.subr.mxu0 0.0
      %1252 = vmatpush1.msra.mxu0 0.0
      %1253 = vmatprep.subr.mxu0 0.0
      %1254 = vmatpush1.msra.mxu0 0.0
      %1255 = vmatprep.subr.mxu0 0.0
      %1256 = vmatpush1.msra.mxu0 0.0
      %1257 = vmatprep.subr.mxu0 0.0
      %1258 = vmatpush1.msra.mxu0 0.0
      %1259 = vmatprep.subr.mxu0 0.0
      %1260 = vmatpush1.msra.mxu0 %v1227
      %1261 = vmatprep.subr.mxu0 0.0
      %1262 = vmatpush2.msra.mxu0 0.0
      %1263 = vmatprep.subr.mxu0 0.0
      %1264 = vmatpush2.msra.mxu0 0.0
      %1265 = vmatprep.subr.mxu0 0.0
      %1266 = vmatpush2.msra.mxu0 0.0
      %1267 = vmatprep.subr.mxu0 0.0
      %1268 = vmatpush2.msra.mxu0 0.0
      %1269 = vmatprep.subr.mxu0 0.0
      %1270 = vmatpush2.msra.mxu0 0.0
      %1271 = vmatprep.subr.mxu0 0.0
      %1272 = vmatpush2.msra.mxu0 0.0
      %1273 = vmatprep.subr.mxu0 0.0
      %1274 = vmatpush2.msra.mxu0 0.0
      %1275 = vmatprep.subr.mxu0 0.0
      %1276 = vmatpush2.msra.mxu0 0.0
      %1277 = vmatprep.subr.mxu0 0.0
      %1278 = vmatpush2.msra.mxu0 0.0
      %1279 = vmatprep.subr.mxu0 0.0
      %1280 = vmatpush2.msra.mxu0 0.0
      %1281 = vmatprep.subr.mxu0 0.0
      %1282 = vmatpush2.msra.mxu0 0.0
      %1283 = vmatprep.subr.mxu0 0.0
      %1284 = vmatpush2.msra.mxu0 0.0
      %1285 = vmatprep.subr.mxu0 0.0
      %1286 = vmatpush2.msra.mxu0 0.0
      %1287 = vmatprep.subr.mxu0 0.0
      %1288 = vmatpush2.msra.mxu0 0.0
      %1289 = vmatprep.subr.mxu0 0.0
      %1290 = vmatpush2.msra.mxu0 0.0
      %1291 = vmatprep.subr.mxu0 0.0
      %1292 = vmatpush2.msra.mxu0 0.0
      %1293 = vmatprep.mubr.f32.mxu0 0.0
      %1294 = vmatmul.mubr.f32.gmra.mxu0 %v477
      %v1295 = vpop.f32.mrf.mxu0
      %v1296 = vadd.f32 0.0, %v1295
      %v1297 = vpop.f32.mrf.mxu0
      %1298 = vmatprep.mubr.f32.mxu0 0.0
      %1299 = vmatmul.mubr.f32.gmra.mxu0 %v480
      %v1300 = vpop.f32.mrf.mxu0
      %v1301 = vadd.f32 0.0, %v1300
      %v1302 = vpop.f32.mrf.mxu0
      %1303 = vmatprep.mubr.f32.mxu0 0.0
      %1304 = vmatmul.mubr.f32.gmra.mxu0 %v483
      %v1305 = vpop.f32.mrf.mxu0
      %v1306 = vadd.f32 0.0, %v1305
      %v1307 = vpop.f32.mrf.mxu0
      %1308 = vmatprep.mubr.f32.mxu0 0.0
      %1309 = vmatmul.mubr.f32.gmra.mxu0 %v486
      %v1310 = vpop.f32.mrf.mxu0
      %v1311 = vadd.f32 0.0, %v1310
      %v1312 = vpop.f32.mrf.mxu0
      %1313 = vmatprep.mubr.f32.mxu0 0.0
      %1314 = vmatmul.mubr.f32.gmra.mxu0 %v489
      %v1315 = vpop.f32.mrf.mxu0
      %v1316 = vadd.f32 0.0, %v1315
      %v1317 = vpop.f32.mrf.mxu0
      %1318 = vmatprep.mubr.f32.mxu0 0.0
      %1319 = vmatmul.mubr.f32.gmra.mxu0 %v492
      %v1320 = vpop.f32.mrf.mxu0
      %v1321 = vadd.f32 0.0, %v1320
      %v1322 = vpop.f32.mrf.mxu0
      %1323 = vmatprep.mubr.f32.mxu0 0.0
      %1324 = vmatmul.mubr.f32.gmra.mxu0 %v495
      %v1325 = vpop.f32.mrf.mxu0
      %v1326 = vadd.f32 0.0, %v1325
      %v1327 = vpop.f32.mrf.mxu0
      %1328 = vmatprep.mubr.f32.mxu0 0.0
      %1329 = vmatmul.mubr.f32.gmra.mxu0 %v1224
      %v1330 = vpop.f32.mrf.mxu0
      %v1331 = vadd.f32 0.0, %v1330
      %v1332 = vpop.f32.mrf.mxu0
      %1333 = vdwg.mxu0
      %v1334 = vadd.f32 %v1213, %v1296
      %v1335 = vadd.f32 %v1214, %v1301
      %v1336 = vadd.f32 %v1215, %v1306
      %v1337 = vadd.f32 %v1216, %v1311
      %v1338 = vadd.f32 %v1217, %v1316
      %v1339 = vadd.f32 %v1218, %v1321
      %v1340 = vadd.f32 %v1219, %v1326
      %v1341 = vadd.f32 %v1220, %v1331
      %v1344 = vrot.slane %v277, 1
      %v1345 = vrot.slane %v278, 1
      %v1346 = vsel %vm320, %v1344, %v1345
      %s1347 = scalar_lea.vmem %s1, 28
      %v1348 = vld [vmem:[%s1347] sm:$0x7]
      %v1349 = vsel %vm347, %v1346, 0
      %v1352 = vsel %vm364, %v1348, 0
      %1354 = vmatprep.subr.mxu0 0.0
      %1355 = vmatpush1.msra.mxu0 0.0
      %1356 = vmatprep.subr.mxu0 0.0
      %1357 = vmatpush1.msra.mxu0 0.0
      %1358 = vmatprep.subr.mxu0 0.0
      %1359 = vmatpush1.msra.mxu0 0.0
      %1360 = vmatprep.subr.mxu0 0.0
      %1361 = vmatpush1.msra.mxu0 0.0
      %1362 = vmatprep.subr.mxu0 0.0
      %1363 = vmatpush1.msra.mxu0 0.0
      %1364 = vmatprep.subr.mxu0 0.0
      %1365 = vmatpush1.msra.mxu0 0.0
      %1366 = vmatprep.subr.mxu0 0.0
      %1367 = vmatpush1.msra.mxu0 0.0
      %1368 = vmatprep.subr.mxu0 0.0
      %1369 = vmatpush1.msra.mxu0 0.0
      %1370 = vmatprep.subr.mxu0 0.0
      %1371 = vmatpush1.msra.mxu0 0.0
      %1372 = vmatprep.subr.mxu0 0.0
      %1373 = vmatpush1.msra.mxu0 0.0
      %1374 = vmatprep.subr.mxu0 0.0
      %1375 = vmatpush1.msra.mxu0 0.0
      %1376 = vmatprep.subr.mxu0 0.0
      %1377 = vmatpush1.msra.mxu0 0.0
      %1378 = vmatprep.subr.mxu0 0.0
      %1379 = vmatpush1.msra.mxu0 0.0
      %1380 = vmatprep.subr.mxu0 0.0
      %1381 = vmatpush1.msra.mxu0 0.0
      %1382 = vmatprep.subr.mxu0 0.0
      %1383 = vmatpush1.msra.mxu0 0.0
      %1384 = vmatprep.subr.mxu0 0.0
      %1385 = vmatpush1.msra.mxu0 %v1352
      %1386 = vmatprep.subr.mxu0 0.0
      %1387 = vmatpush2.msra.mxu0 0.0
      %1388 = vmatprep.subr.mxu0 0.0
      %1389 = vmatpush2.msra.mxu0 0.0
      %1390 = vmatprep.subr.mxu0 0.0
      %1391 = vmatpush2.msra.mxu0 0.0
      %1392 = vmatprep.subr.mxu0 0.0
      %1393 = vmatpush2.msra.mxu0 0.0
      %1394 = vmatprep.subr.mxu0 0.0
      %1395 = vmatpush2.msra.mxu0 0.0
      %1396 = vmatprep.subr.mxu0 0.0
      %1397 = vmatpush2.msra.mxu0 0.0
      %1398 = vmatprep.subr.mxu0 0.0
      %1399 = vmatpush2.msra.mxu0 0.0
      %1400 = vmatprep.subr.mxu0 0.0
      %1401 = vmatpush2.msra.mxu0 0.0
      %1402 = vmatprep.subr.mxu0 0.0
      %1403 = vmatpush2.msra.mxu0 0.0
      %1404 = vmatprep.subr.mxu0 0.0
      %1405 = vmatpush2.msra.mxu0 0.0
      %1406 = vmatprep.subr.mxu0 0.0
      %1407 = vmatpush2.msra.mxu0 0.0
      %1408 = vmatprep.subr.mxu0 0.0
      %1409 = vmatpush2.msra.mxu0 0.0
      %1410 = vmatprep.subr.mxu0 0.0
      %1411 = vmatpush2.msra.mxu0 0.0
      %1412 = vmatprep.subr.mxu0 0.0
      %1413 = vmatpush2.msra.mxu0 0.0
      %1414 = vmatprep.subr.mxu0 0.0
      %1415 = vmatpush2.msra.mxu0 0.0
      %1416 = vmatprep.subr.mxu0 0.0
      %1417 = vmatpush2.msra.mxu0 0.0
      %1418 = vmatprep.mubr.f32.mxu0 0.0
      %1419 = vmatmul.mubr.f32.gmra.mxu0 %v350
      %v1420 = vpop.f32.mrf.mxu0
      %v1421 = vadd.f32 0.0, %v1420
      %v1422 = vpop.f32.mrf.mxu0
      %1423 = vmatprep.mubr.f32.mxu0 0.0
      %1424 = vmatmul.mubr.f32.gmra.mxu0 %v352
      %v1425 = vpop.f32.mrf.mxu0
      %v1426 = vadd.f32 0.0, %v1425
      %v1427 = vpop.f32.mrf.mxu0
      %1428 = vmatprep.mubr.f32.mxu0 0.0
      %1429 = vmatmul.mubr.f32.gmra.mxu0 %v354
      %v1430 = vpop.f32.mrf.mxu0
      %v1431 = vadd.f32 0.0, %v1430
      %v1432 = vpop.f32.mrf.mxu0
      %1433 = vmatprep.mubr.f32.mxu0 0.0
      %1434 = vmatmul.mubr.f32.gmra.mxu0 %v356
      %v1435 = vpop.f32.mrf.mxu0
      %v1436 = vadd.f32 0.0, %v1435
      %v1437 = vpop.f32.mrf.mxu0
      %1438 = vmatprep.mubr.f32.mxu0 0.0
      %1439 = vmatmul.mubr.f32.gmra.mxu0 %v358
      %v1440 = vpop.f32.mrf.mxu0
      %v1441 = vadd.f32 0.0, %v1440
      %v1442 = vpop.f32.mrf.mxu0
      %1443 = vmatprep.mubr.f32.mxu0 0.0
      %1444 = vmatmul.mubr.f32.gmra.mxu0 %v360
      %v1445 = vpop.f32.mrf.mxu0
      %v1446 = vadd.f32 0.0, %v1445
      %v1447 = vpop.f32.mrf.mxu0
      %1448 = vmatprep.mubr.f32.mxu0 0.0
      %1449 = vmatmul.mubr.f32.gmra.mxu0 %v362
      %v1450 = vpop.f32.mrf.mxu0
      %v1451 = vadd.f32 0.0, %v1450
      %v1452 = vpop.f32.mrf.mxu0
      %1453 = vmatprep.mubr.f32.mxu0 0.0
      %1454 = vmatmul.mubr.f32.gmra.mxu0 %v1349
      %v1455 = vpop.f32.mrf.mxu0
      %v1456 = vadd.f32 0.0, %v1455
      %v1457 = vpop.f32.mrf.mxu0
      %1458 = vdwg.mxu0
      %v1459 = vadd.f32 %v1334, %v1421
      %v1460 = vadd.f32 %v1335, %v1426
      %v1461 = vadd.f32 %v1336, %v1431
      %v1462 = vadd.f32 %v1337, %v1436
      %v1463 = vadd.f32 %v1338, %v1441
      %v1464 = vadd.f32 %v1339, %v1446
      %v1465 = vadd.f32 %v1340, %v1451
      %v1466 = vadd.f32 %v1341, %v1456
      %v1467 = vrot.slane %v276, 1
      %v1468 = vsel %vm320, %v1467, %v1344
      %s1469 = scalar_lea.vmem %s1, 32
      %v1470 = vld [vmem:[%s1469] sm:$0x7]
      %v1471 = vsel %vm347, %v1468, 0
      %v1474 = vsel %vm364, %v1470, 0
      %1476 = vmatprep.subr.mxu0 0.0
      %1477 = vmatpush1.msra.mxu0 0.0
      %1478 = vmatprep.subr.mxu0 0.0
      %1479 = vmatpush1.msra.mxu0 0.0
      %1480 = vmatprep.subr.mxu0 0.0
      %1481 = vmatpush1.msra.mxu0 0.0
      %1482 = vmatprep.subr.mxu0 0.0
      %1483 = vmatpush1.msra.mxu0 0.0
      %1484 = vmatprep.subr.mxu0 0.0
      %1485 = vmatpush1.msra.mxu0 0.0
      %1486 = vmatprep.subr.mxu0 0.0
      %1487 = vmatpush1.msra.mxu0 0.0
      %1488 = vmatprep.subr.mxu0 0.0
      %1489 = vmatpush1.msra.mxu0 0.0
      %1490 = vmatprep.subr.mxu0 0.0
      %1491 = vmatpush1.msra.mxu0 0.0
      %1492 = vmatprep.subr.mxu0 0.0
      %1493 = vmatpush1.msra.mxu0 0.0
      %1494 = vmatprep.subr.mxu0 0.0
      %1495 = vmatpush1.msra.mxu0 0.0
      %1496 = vmatprep.subr.mxu0 0.0
      %1497 = vmatpush1.msra.mxu0 0.0
      %1498 = vmatprep.subr.mxu0 0.0
      %1499 = vmatpush1.msra.mxu0 0.0
      %1500 = vmatprep.subr.mxu0 0.0
      %1501 = vmatpush1.msra.mxu0 0.0
      %1502 = vmatprep.subr.mxu0 0.0
      %1503 = vmatpush1.msra.mxu0 0.0
      %1504 = vmatprep.subr.mxu0 0.0
      %1505 = vmatpush1.msra.mxu0 0.0
      %1506 = vmatprep.subr.mxu0 0.0
      %1507 = vmatpush1.msra.mxu0 %v1474
      %1508 = vmatprep.subr.mxu0 0.0
      %1509 = vmatpush2.msra.mxu0 0.0
      %1510 = vmatprep.subr.mxu0 0.0
      %1511 = vmatpush2.msra.mxu0 0.0
      %1512 = vmatprep.subr.mxu0 0.0
      %1513 = vmatpush2.msra.mxu0 0.0
      %1514 = vmatprep.subr.mxu0 0.0
      %1515 = vmatpush2.msra.mxu0 0.0
      %1516 = vmatprep.subr.mxu0 0.0
      %1517 = vmatpush2.msra.mxu0 0.0
      %1518 = vmatprep.subr.mxu0 0.0
      %1519 = vmatpush2.msra.mxu0 0.0
      %1520 = vmatprep.subr.mxu0 0.0
      %1521 = vmatpush2.msra.mxu0 0.0
      %1522 = vmatprep.subr.mxu0 0.0
      %1523 = vmatpush2.msra.mxu0 0.0
      %1524 = vmatprep.subr.mxu0 0.0
      %1525 = vmatpush2.msra.mxu0 0.0
      %1526 = vmatprep.subr.mxu0 0.0
      %1527 = vmatpush2.msra.mxu0 0.0
      %1528 = vmatprep.subr.mxu0 0.0
      %1529 = vmatpush2.msra.mxu0 0.0
      %1530 = vmatprep.subr.mxu0 0.0
      %1531 = vmatpush2.msra.mxu0 0.0
      %1532 = vmatprep.subr.mxu0 0.0
      %1533 = vmatpush2.msra.mxu0 0.0
      %1534 = vmatprep.subr.mxu0 0.0
      %1535 = vmatpush2.msra.mxu0 0.0
      %1536 = vmatprep.subr.mxu0 0.0
      %1537 = vmatpush2.msra.mxu0 0.0
      %1538 = vmatprep.subr.mxu0 0.0
      %1539 = vmatpush2.msra.mxu0 0.0
      %1540 = vmatprep.mubr.f32.mxu0 0.0
      %1541 = vmatmul.mubr.f32.gmra.mxu0 %v625
      %v1542 = vpop.f32.mrf.mxu0
      %v1543 = vadd.f32 0.0, %v1542
      %v1544 = vpop.f32.mrf.mxu0
      %1545 = vmatprep.mubr.f32.mxu0 0.0
      %1546 = vmatmul.mubr.f32.gmra.mxu0 %v627
      %v1547 = vpop.f32.mrf.mxu0
      %v1548 = vadd.f32 0.0, %v1547
      %v1549 = vpop.f32.mrf.mxu0
      %1550 = vmatprep.mubr.f32.mxu0 0.0
      %1551 = vmatmul.mubr.f32.gmra.mxu0 %v629
      %v1552 = vpop.f32.mrf.mxu0
      %v1553 = vadd.f32 0.0, %v1552
      %v1554 = vpop.f32.mrf.mxu0
      %1555 = vmatprep.mubr.f32.mxu0 0.0
      %1556 = vmatmul.mubr.f32.gmra.mxu0 %v631
      %v1557 = vpop.f32.mrf.mxu0
      %v1558 = vadd.f32 0.0, %v1557
      %v1559 = vpop.f32.mrf.mxu0
      %1560 = vmatprep.mubr.f32.mxu0 0.0
      %1561 = vmatmul.mubr.f32.gmra.mxu0 %v633
      %v1562 = vpop.f32.mrf.mxu0
      %v1563 = vadd.f32 0.0, %v1562
      %v1564 = vpop.f32.mrf.mxu0
      %1565 = vmatprep.mubr.f32.mxu0 0.0
      %1566 = vmatmul.mubr.f32.gmra.mxu0 %v635
      %v1567 = vpop.f32.mrf.mxu0
      %v1568 = vadd.f32 0.0, %v1567
      %v1569 = vpop.f32.mrf.mxu0
      %1570 = vmatprep.mubr.f32.mxu0 0.0
      %1571 = vmatmul.mubr.f32.gmra.mxu0 %v637
      %v1572 = vpop.f32.mrf.mxu0
      %v1573 = vadd.f32 0.0, %v1572
      %v1574 = vpop.f32.mrf.mxu0
      %1575 = vmatprep.mubr.f32.mxu0 0.0
      %1576 = vmatmul.mubr.f32.gmra.mxu0 %v1471
      %v1577 = vpop.f32.mrf.mxu0
      %v1578 = vadd.f32 0.0, %v1577
      %v1579 = vpop.f32.mrf.mxu0
      %1580 = vdwg.mxu0
      %v1581 = vadd.f32 %v1459, %v1543
      %v1582 = vadd.f32 %v1460, %v1548
      %v1583 = vadd.f32 %v1461, %v1553
      %v1584 = vadd.f32 %v1462, %v1558
      %v1585 = vadd.f32 %v1463, %v1563
      %v1586 = vadd.f32 %v1464, %v1568
      %v1587 = vadd.f32 %v1465, %v1573
      %v1588 = vadd.f32 %v1466, %v1578
      %v1589 = vld [vmem:[%s2] sm:$0x1]
      %v1591 = vlaneseq
      %v1592 = vshrl.u32 %v1591, 7
      %v1593 = vsub.s32 0, %v1592
      %v1594 = vrot.slane %v1589, %v1593
      %v1596 = vadd.f32 %v1581, %v1594
      %v1597 = vadd.f32 %v1582, %v1594
      %v1598 = vadd.f32 %v1583, %v1594
      %v1599 = vadd.f32 %v1584, %v1594
      %v1600 = vadd.f32 %v1585, %v1594
      %v1601 = vadd.f32 %v1586, %v1594
      %v1602 = vadd.f32 %v1587, %v1594
      %v1603 = vadd.f32 %v1588, %v1594
      %v1604 = vmax.f32 %v1596, 0.0
      %v1605 = vmax.f32 %v1597, 0.0
      %v1606 = vmax.f32 %v1598, 0.0
      %v1607 = vmax.f32 %v1599, 0.0
      %v1608 = vmax.f32 %v1600, 0.0
      %v1609 = vmax.f32 %v1601, 0.0
      %v1610 = vmax.f32 %v1602, 0.0
      %v1611 = vmax.f32 %v1603, 0.0
      %vm1612 = vcmask 261120
      %1613 = vst.msk [vmem:[#allocation2] sm:$0xff] %vm1612, 0.0
      %vm1614 = vcmask 254976
      %1615 = vst.msk [vmem:[#allocation2 + $0x8] sm:$0x3] %vm1614, 0.0
      %1616 = vst.msk [vmem:[#allocation2 + $0x10] sm:$0xff] %vm1612, 0.0
      %1617 = vst.msk [vmem:[#allocation2 + $0x18] sm:$0x3] %vm1614, 0.0
      %1618 = vst.msk [vmem:[#allocation2 + $0x20] sm:$0xff] %vm1612, 0.0
      %1619 = vst.msk [vmem:[#allocation2 + $0x28] sm:$0x3] %vm1614, 0.0
      %1620 = vst.msk [vmem:[#allocation2 + $0x30] sm:$0xff] %vm1612, 0.0
      %1621 = vst.msk [vmem:[#allocation2 + $0x38] sm:$0x3] %vm1614, 0.0
      %1622 = vst.msk [vmem:[#allocation2 + $0x40] sm:$0xff] %vm1612, 0.0
      %1623 = vst.msk [vmem:[#allocation2 + $0x48] sm:$0x3] %vm1614, 0.0
      %1624 = vst.msk [vmem:[#allocation2 + $0x50] sm:$0xff] %vm1612, 0.0
      %1625 = vst.msk [vmem:[#allocation2 + $0x58] sm:$0x3] %vm1614, 0.0
      %1626 = vst.msk [vmem:[#allocation2 + $0x60] sm:$0xff] %vm1612, 0.0
      %1627 = vst.msk [vmem:[#allocation2 + $0x68] sm:$0x3] %vm1614, 0.0
      %1628 = vst.msk [vmem:[#allocation2 + $0x70] sm:$0xff] %vm1612, 0.0
      %1629 = vst.msk [vmem:[#allocation2 + $0x78] sm:$0x3] %vm1614, 0.0
      %1630 = vst.msk [vmem:[#allocation2 + $0x80] sm:$0xff] %vm1612, 0.0
      %1631 = vst.msk [vmem:[#allocation2 + $0x88] sm:$0x3] %vm1614, 0.0
      %1632 = vst.msk [vmem:[#allocation2 + $0x90] sm:$0xff] %vm1612, 0.0
      %1633 = vst.msk [vmem:[#allocation2 + $0x98] sm:$0x3] %vm1614, 0.0
      %s1634 = scalar_lea.vmem [#allocation2], 16
      %1635 = vst.msk [vmem:[%s1634 + $0x1] sm:$0xff] %vm1612, %v1604
      %1636 = vst.msk [vmem:[%s1634 + $0x11] sm:$0xff] %vm1612, %v1605
      %1637 = vst.msk [vmem:[%s1634 + $0x21] sm:$0xff] %vm1612, %v1606
      %1638 = vst.msk [vmem:[%s1634 + $0x31] sm:$0xff] %vm1612, %v1607
      %1639 = vst.msk [vmem:[%s1634 + $0x41] sm:$0xff] %vm1612, %v1608
      %1640 = vst.msk [vmem:[%s1634 + $0x51] sm:$0xff] %vm1612, %v1609
      %1641 = vst.msk [vmem:[%s1634 + $0x61] sm:$0xff] %vm1612, %v1610
      %1642 = vst.msk [vmem:[%s1634 + $0x71] sm:$0xff] %vm1612, %v1611
      %v1643 = vld [vmem:[#allocation2] sm:$0xff]
      %v1644 = vld [vmem:[#allocation2 + $0x8] sm:$0x3]
      %v1645 = vld [vmem:[#allocation2 + $0x10] sm:$0xff]
      %v1646 = vld [vmem:[#allocation2 + $0x18] sm:$0x3]
      %v1647 = vld [vmem:[#allocation2 + $0x20] sm:$0xff]
      %v1648 = vld [vmem:[#allocation2 + $0x28] sm:$0x3]
      %v1649 = vld [vmem:[#allocation2 + $0x30] sm:$0xff]
      %v1650 = vld [vmem:[#allocation2 + $0x38] sm:$0x3]
      %v1651 = vld [vmem:[#allocation2 + $0x40] sm:$0xff]
      %v1652 = vld [vmem:[#allocation2 + $0x48] sm:$0x3]
      %v1653 = vld [vmem:[#allocation2 + $0x50] sm:$0xff]
      %v1654 = vld [vmem:[#allocation2 + $0x58] sm:$0x3]
      %v1655 = vld [vmem:[#allocation2 + $0x60] sm:$0xff]
      %v1656 = vld [vmem:[#allocation2 + $0x68] sm:$0x3]
      %v1657 = vld [vmem:[#allocation2 + $0x70] sm:$0xff]
      %v1658 = vld [vmem:[#allocation2 + $0x78] sm:$0x3]
      %v1659 = vld [vmem:[#allocation2 + $0x80] sm:$0xff]
      %v1660 = vld [vmem:[#allocation2 + $0x88] sm:$0x3]
      %v1661 = vld [vmem:[#allocation2 + $0x90] sm:$0xff]
      %v1662 = vld [vmem:[#allocation2 + $0x98] sm:$0x3]
      %v1663 = vld [vmem:[%s3] sm:$0xff]
      %v1664 = vld [vmem:[%s3 + $0x8] sm:$0xff]
      %v1665 = vld [vmem:[%s3 + $0x10] sm:$0xff]
      %v1666 = vld [vmem:[%s3 + $0x18] sm:$0xff]
      %v1683 = vrot.slane %v1643, 1
      %v1684 = vrot.slane %v1644, 1
      %v1685 = vsel %vm320, %v1683, %v1684
      %v1686 = vrot.slane %v1645, 1
      %v1687 = vrot.slane %v1646, 1
      %v1688 = vsel %vm320, %v1686, %v1687
      %v1689 = vrot.slane %v1647, 1
      %v1690 = vrot.slane %v1648, 1
      %v1691 = vsel %vm320, %v1689, %v1690
      %v1692 = vrot.slane %v1649, 1
      %v1693 = vrot.slane %v1650, 1
      %v1694 = vsel %vm320, %v1692, %v1693
      %v1695 = vrot.slane %v1651, 1
      %v1696 = vrot.slane %v1652, 1
      %v1697 = vsel %vm320, %v1695, %v1696
      %v1698 = vrot.slane %v1653, 1
      %v1699 = vrot.slane %v1654, 1
      %v1700 = vsel %vm320, %v1698, %v1699
      %v1701 = vrot.slane %v1655, 1
      %v1702 = vrot.slane %v1656, 1
      %v1703 = vsel %vm320, %v1701, %v1702
      %v1704 = vrot.slane %v1657, 1
      %v1705 = vrot.slane %v1658, 1
      %v1706 = vsel %vm320, %v1704, %v1705
      %s1707 = scalar_lea.vmem %s3, 32
      %v1708 = vld [vmem:[%s1707] sm:$0xff]
      %v1709 = vld [vmem:[%s1707 + $0x8] sm:$0xff]
      %v1710 = vld [vmem:[%s1707 + $0x10] sm:$0xff]
      %v1711 = vld [vmem:[%s1707 + $0x18] sm:$0xff]
      %v1712 = vsel %vm1612, %v1685, 0
      %v1714 = vsel %vm1612, %v1688, 0
      %v1716 = vsel %vm1612, %v1691, 0
      %v1718 = vsel %vm1612, %v1694, 0
      %v1720 = vsel %vm1612, %v1697, 0
      %v1722 = vsel %vm1612, %v1700, 0
      %v1724 = vsel %vm1612, %v1703, 0
      %v1726 = vsel %vm1612, %v1706, 0
      %1728 = vmatprep.subr.mxu0 0.0
      %1729 = vmatpush1.msra.mxu0 0.0
      %1730 = vmatprep.subr.mxu0 0.0
      %1731 = vmatpush1.msra.mxu0 0.0
      %1732 = vmatprep.subr.mxu0 0.0
      %1733 = vmatpush1.msra.mxu0 0.0
      %1734 = vmatprep.subr.mxu0 0.0
      %1735 = vmatpush1.msra.mxu0 0.0
      %1736 = vmatprep.subr.mxu0 0.0
      %1737 = vmatpush1.msra.mxu0 0.0
      %1738 = vmatprep.subr.mxu0 0.0
      %1739 = vmatpush1.msra.mxu0 0.0
      %1740 = vmatprep.subr.mxu0 0.0
      %1741 = vmatpush1.msra.mxu0 0.0
      %1742 = vmatprep.subr.mxu0 0.0
      %1743 = vmatpush1.msra.mxu0 0.0
      %1744 = vmatprep.subr.mxu0 0.0
      %1745 = vmatpush1.msra.mxu0 0.0
      %1746 = vmatprep.subr.mxu0 0.0
      %1747 = vmatpush1.msra.mxu0 0.0
      %1748 = vmatprep.subr.mxu0 0.0
      %1749 = vmatpush1.msra.mxu0 0.0
      %1750 = vmatprep.subr.mxu0 0.0
      %1751 = vmatpush1.msra.mxu0 0.0
      %1752 = vmatprep.subr.mxu0 0.0
      %1753 = vmatpush1.msra.mxu0 %v1711
      %1754 = vmatprep.subr.mxu0 0.0
      %1755 = vmatpush1.msra.mxu0 %v1710
      %1756 = vmatprep.subr.mxu0 0.0
      %1757 = vmatpush1.msra.mxu0 %v1709
      %1758 = vmatprep.subr.mxu0 0.0
      %1759 = vmatpush1.msra.mxu0 %v1708
      %1760 = vmatprep.subr.mxu0 0.0
      %1761 = vmatpush2.msra.mxu0 0.0
      %1762 = vmatprep.subr.mxu0 0.0
      %1763 = vmatpush2.msra.mxu0 0.0
      %1764 = vmatprep.subr.mxu0 0.0
      %1765 = vmatpush2.msra.mxu0 0.0
      %1766 = vmatprep.subr.mxu0 0.0
      %1767 = vmatpush2.msra.mxu0 0.0
      %1768 = vmatprep.subr.mxu0 0.0
      %1769 = vmatpush2.msra.mxu0 0.0
      %1770 = vmatprep.subr.mxu0 0.0
      %1771 = vmatpush2.msra.mxu0 0.0
      %1772 = vmatprep.subr.mxu0 0.0
      %1773 = vmatpush2.msra.mxu0 0.0
      %1774 = vmatprep.subr.mxu0 0.0
      %1775 = vmatpush2.msra.mxu0 0.0
      %1776 = vmatprep.subr.mxu0 0.0
      %1777 = vmatpush2.msra.mxu0 0.0
      %1778 = vmatprep.subr.mxu0 0.0
      %1779 = vmatpush2.msra.mxu0 0.0
      %1780 = vmatprep.subr.mxu0 0.0
      %1781 = vmatpush2.msra.mxu0 0.0
      %1782 = vmatprep.subr.mxu0 0.0
      %1783 = vmatpush2.msra.mxu0 0.0
      %1784 = vmatprep.subr.mxu0 0.0
      %1785 = vmatpush2.msra.mxu0 0.0
      %1786 = vmatprep.subr.mxu0 0.0
      %1787 = vmatpush2.msra.mxu0 0.0
      %1788 = vmatprep.subr.mxu0 0.0
      %1789 = vmatpush2.msra.mxu0 0.0
      %1790 = vmatprep.subr.mxu0 0.0
      %1791 = vmatpush2.msra.mxu0 0.0
      %1792 = vmatprep.mubr.f32.mxu0 0.0
      %1793 = vmatmul.mubr.f32.gmra.mxu0 %v1712
      %v1794 = vpop.f32.mrf.mxu0
      %v1795 = vadd.f32 0.0, %v1794
      %v1796 = vpop.f32.mrf.mxu0
      %1797 = vmatprep.mubr.f32.mxu0 0.0
      %1798 = vmatmul.mubr.f32.gmra.mxu0 %v1714
      %v1799 = vpop.f32.mrf.mxu0
      %v1800 = vadd.f32 0.0, %v1799
      %v1801 = vpop.f32.mrf.mxu0
      %1802 = vmatprep.mubr.f32.mxu0 0.0
      %1803 = vmatmul.mubr.f32.gmra.mxu0 %v1716
      %v1804 = vpop.f32.mrf.mxu0
      %v1805 = vadd.f32 0.0, %v1804
      %v1806 = vpop.f32.mrf.mxu0
      %1807 = vmatprep.mubr.f32.mxu0 0.0
      %1808 = vmatmul.mubr.f32.gmra.mxu0 %v1718
      %v1809 = vpop.f32.mrf.mxu0
      %v1810 = vadd.f32 0.0, %v1809
      %v1811 = vpop.f32.mrf.mxu0
      %1812 = vmatprep.mubr.f32.mxu0 0.0
      %1813 = vmatmul.mubr.f32.gmra.mxu0 %v1720
      %v1814 = vpop.f32.mrf.mxu0
      %v1815 = vadd.f32 0.0, %v1814
      %v1816 = vpop.f32.mrf.mxu0
      %1817 = vmatprep.mubr.f32.mxu0 0.0
      %1818 = vmatmul.mubr.f32.gmra.mxu0 %v1722
      %v1819 = vpop.f32.mrf.mxu0
      %v1820 = vadd.f32 0.0, %v1819
      %v1821 = vpop.f32.mrf.mxu0
      %1822 = vmatprep.mubr.f32.mxu0 0.0
      %1823 = vmatmul.mubr.f32.gmra.mxu0 %v1724
      %v1824 = vpop.f32.mrf.mxu0
      %v1825 = vadd.f32 0.0, %v1824
      %v1826 = vpop.f32.mrf.mxu0
      %1827 = vmatprep.mubr.f32.mxu0 0.0
      %1828 = vmatmul.mubr.f32.gmra.mxu0 %v1726
      %v1829 = vpop.f32.mrf.mxu0
      %v1830 = vadd.f32 0.0, %v1829
      %v1831 = vpop.f32.mrf.mxu0
      %1832 = vdwg.mxu0
      %v1833 = vsel %vm1612, %v1643, 0
      %v1835 = vsel %vm1612, %v1645, 0
      %v1837 = vsel %vm1612, %v1647, 0
      %v1839 = vsel %vm1612, %v1649, 0
      %v1841 = vsel %vm1612, %v1651, 0
      %v1843 = vsel %vm1612, %v1653, 0
      %v1845 = vsel %vm1612, %v1655, 0
      %v1847 = vsel %vm1612, %v1657, 0
      %1849 = vmatprep.subr.mxu0 0.0
      %1850 = vmatpush1.msra.mxu0 0.0
      %1851 = vmatprep.subr.mxu0 0.0
      %1852 = vmatpush1.msra.mxu0 0.0
      %1853 = vmatprep.subr.mxu0 0.0
      %1854 = vmatpush1.msra.mxu0 0.0
      %1855 = vmatprep.subr.mxu0 0.0
      %1856 = vmatpush1.msra.mxu0 0.0
      %1857 = vmatprep.subr.mxu0 0.0
      %1858 = vmatpush1.msra.mxu0 0.0
      %1859 = vmatprep.subr.mxu0 0.0
      %1860 = vmatpush1.msra.mxu0 0.0
      %1861 = vmatprep.subr.mxu0 0.0
      %1862 = vmatpush1.msra.mxu0 0.0
      %1863 = vmatprep.subr.mxu0 0.0
      %1864 = vmatpush1.msra.mxu0 0.0
      %1865 = vmatprep.subr.mxu0 0.0
      %1866 = vmatpush1.msra.mxu0 0.0
      %1867 = vmatprep.subr.mxu0 0.0
      %1868 = vmatpush1.msra.mxu0 0.0
      %1869 = vmatprep.subr.mxu0 0.0
      %1870 = vmatpush1.msra.mxu0 0.0
      %1871 = vmatprep.subr.mxu0 0.0
      %1872 = vmatpush1.msra.mxu0 0.0
      %1873 = vmatprep.subr.mxu0 0.0
      %1874 = vmatpush1.msra.mxu0 %v1666
      %1875 = vmatprep.subr.mxu0 0.0
      %1876 = vmatpush1.msra.mxu0 %v1665
      %1877 = vmatprep.subr.mxu0 0.0
      %1878 = vmatpush1.msra.mxu0 %v1664
      %1879 = vmatprep.subr.mxu0 0.0
      %1880 = vmatpush1.msra.mxu0 %v1663
      %1881 = vmatprep.subr.mxu0 0.0
      %1882 = vmatpush2.msra.mxu0 0.0
      %1883 = vmatprep.subr.mxu0 0.0
      %1884 = vmatpush2.msra.mxu0 0.0
      %1885 = vmatprep.subr.mxu0 0.0
      %1886 = vmatpush2.msra.mxu0 0.0
      %1887 = vmatprep.subr.mxu0 0.0
      %1888 = vmatpush2.msra.mxu0 0.0
      %1889 = vmatprep.subr.mxu0 0.0
      %1890 = vmatpush2.msra.mxu0 0.0
      %1891 = vmatprep.subr.mxu0 0.0
      %1892 = vmatpush2.msra.mxu0 0.0
      %1893 = vmatprep.subr.mxu0 0.0
      %1894 = vmatpush2.msra.mxu0 0.0
      %1895 = vmatprep.subr.mxu0 0.0
      %1896 = vmatpush2.msra.mxu0 0.0
      %1897 = vmatprep.subr.mxu0 0.0
      %1898 = vmatpush2.msra.mxu0 0.0
      %1899 = vmatprep.subr.mxu0 0.0
      %1900 = vmatpush2.msra.mxu0 0.0
      %1901 = vmatprep.subr.mxu0 0.0
      %1902 = vmatpush2.msra.mxu0 0.0
      %1903 = vmatprep.subr.mxu0 0.0
      %1904 = vmatpush2.msra.mxu0 0.0
      %1905 = vmatprep.subr.mxu0 0.0
      %1906 = vmatpush2.msra.mxu0 0.0
      %1907 = vmatprep.subr.mxu0 0.0
      %1908 = vmatpush2.msra.mxu0 0.0
      %1909 = vmatprep.subr.mxu0 0.0
      %1910 = vmatpush2.msra.mxu0 0.0
      %1911 = vmatprep.subr.mxu0 0.0
      %1912 = vmatpush2.msra.mxu0 0.0
      %1913 = vmatprep.mubr.f32.mxu0 0.0
      %1914 = vmatmul.mubr.f32.gmra.mxu0 %v1833
      %v1915 = vpop.f32.mrf.mxu0
      %v1916 = vadd.f32 %v1795, %v1915
      %v1917 = vpop.f32.mrf.mxu0
      %1918 = vmatprep.mubr.f32.mxu0 0.0
      %1919 = vmatmul.mubr.f32.gmra.mxu0 %v1835
      %v1920 = vpop.f32.mrf.mxu0
      %v1921 = vadd.f32 %v1800, %v1920
      %v1922 = vpop.f32.mrf.mxu0
      %1923 = vmatprep.mubr.f32.mxu0 0.0
      %1924 = vmatmul.mubr.f32.gmra.mxu0 %v1837
      %v1925 = vpop.f32.mrf.mxu0
      %v1926 = vadd.f32 %v1805, %v1925
      %v1927 = vpop.f32.mrf.mxu0
      %1928 = vmatprep.mubr.f32.mxu0 0.0
      %1929 = vmatmul.mubr.f32.gmra.mxu0 %v1839
      %v1930 = vpop.f32.mrf.mxu0
      %v1931 = vadd.f32 %v1810, %v1930
      %v1932 = vpop.f32.mrf.mxu0
      %1933 = vmatprep.mubr.f32.mxu0 0.0
      %1934 = vmatmul.mubr.f32.gmra.mxu0 %v1841
      %v1935 = vpop.f32.mrf.mxu0
      %v1936 = vadd.f32 %v1815, %v1935
      %v1937 = vpop.f32.mrf.mxu0
      %1938 = vmatprep.mubr.f32.mxu0 0.0
      %1939 = vmatmul.mubr.f32.gmra.mxu0 %v1843
      %v1940 = vpop.f32.mrf.mxu0
      %v1941 = vadd.f32 %v1820, %v1940
      %v1942 = vpop.f32.mrf.mxu0
      %1943 = vmatprep.mubr.f32.mxu0 0.0
      %1944 = vmatmul.mubr.f32.gmra.mxu0 %v1845
      %v1945 = vpop.f32.mrf.mxu0
      %v1946 = vadd.f32 %v1825, %v1945
      %v1947 = vpop.f32.mrf.mxu0
      %1948 = vmatprep.mubr.f32.mxu0 0.0
      %1949 = vmatmul.mubr.f32.gmra.mxu0 %v1847
      %v1950 = vpop.f32.mrf.mxu0
      %v1951 = vadd.f32 %v1830, %v1950
      %v1952 = vpop.f32.mrf.mxu0
      %1953 = vdwg.mxu0
      %vm1954 = vcmask 1045504
      %v1955 = vrot.slane %v1643, 2
      %v1956 = vrot.slane %v1644, 2
      %v1957 = vsel %vm1954, %v1955, %v1956
      %v1958 = vrot.slane %v1645, 2
      %v1959 = vrot.slane %v1646, 2
      %v1960 = vsel %vm1954, %v1958, %v1959
      %v1961 = vrot.slane %v1647, 2
      %v1962 = vrot.slane %v1648, 2
      %v1963 = vsel %vm1954, %v1961, %v1962
      %v1964 = vrot.slane %v1649, 2
      %v1965 = vrot.slane %v1650, 2
      %v1966 = vsel %vm1954, %v1964, %v1965
      %v1967 = vrot.slane %v1651, 2
      %v1968 = vrot.slane %v1652, 2
      %v1969 = vsel %vm1954, %v1967, %v1968
      %v1970 = vrot.slane %v1653, 2
      %v1971 = vrot.slane %v1654, 2
      %v1972 = vsel %vm1954, %v1970, %v1971
      %v1973 = vrot.slane %v1655, 2
      %v1974 = vrot.slane %v1656, 2
      %v1975 = vsel %vm1954, %v1973, %v1974
      %v1976 = vrot.slane %v1657, 2
      %v1977 = vrot.slane %v1658, 2
      %v1978 = vsel %vm1954, %v1976, %v1977
      %s1979 = scalar_lea.vmem %s3, 64
      %v1980 = vld [vmem:[%s1979] sm:$0xff]
      %v1981 = vld [vmem:[%s1979 + $0x8] sm:$0xff]
      %v1982 = vld [vmem:[%s1979 + $0x10] sm:$0xff]
      %v1983 = vld [vmem:[%s1979 + $0x18] sm:$0xff]
      %v1984 = vsel %vm1612, %v1957, 0
      %v1986 = vsel %vm1612, %v1960, 0
      %v1988 = vsel %vm1612, %v1963, 0
      %v1990 = vsel %vm1612, %v1966, 0
      %v1992 = vsel %vm1612, %v1969, 0
      %v1994 = vsel %vm1612, %v1972, 0
      %v1996 = vsel %vm1612, %v1975, 0
      %v1998 = vsel %vm1612, %v1978, 0
      %2000 = vmatprep.subr.mxu0 0.0
      %2001 = vmatpush1.msra.mxu0 0.0
      %2002 = vmatprep.subr.mxu0 0.0
      %2003 = vmatpush1.msra.mxu0 0.0
      %2004 = vmatprep.subr.mxu0 0.0
      %2005 = vmatpush1.msra.mxu0 0.0
      %2006 = vmatprep.subr.mxu0 0.0
      %2007 = vmatpush1.msra.mxu0 0.0
      %2008 = vmatprep.subr.mxu0 0.0
      %2009 = vmatpush1.msra.mxu0 0.0
      %2010 = vmatprep.subr.mxu0 0.0
      %2011 = vmatpush1.msra.mxu0 0.0
      %2012 = vmatprep.subr.mxu0 0.0
      %2013 = vmatpush1.msra.mxu0 0.0
      %2014 = vmatprep.subr.mxu0 0.0
      %2015 = vmatpush1.msra.mxu0 0.0
      %2016 = vmatprep.subr.mxu0 0.0
      %2017 = vmatpush1.msra.mxu0 0.0
      %2018 = vmatprep.subr.mxu0 0.0
      %2019 = vmatpush1.msra.mxu0 0.0
      %2020 = vmatprep.subr.mxu0 0.0
      %2021 = vmatpush1.msra.mxu0 0.0
      %2022 = vmatprep.subr.mxu0 0.0
      %2023 = vmatpush1.msra.mxu0 0.0
      %2024 = vmatprep.subr.mxu0 0.0
      %2025 = vmatpush1.msra.mxu0 %v1983
      %2026 = vmatprep.subr.mxu0 0.0
      %2027 = vmatpush1.msra.mxu0 %v1982
      %2028 = vmatprep.subr.mxu0 0.0
      %2029 = vmatpush1.msra.mxu0 %v1981
      %2030 = vmatprep.subr.mxu0 0.0
      %2031 = vmatpush1.msra.mxu0 %v1980
      %2032 = vmatprep.subr.mxu0 0.0
      %2033 = vmatpush2.msra.mxu0 0.0
      %2034 = vmatprep.subr.mxu0 0.0
      %2035 = vmatpush2.msra.mxu0 0.0
      %2036 = vmatprep.subr.mxu0 0.0
      %2037 = vmatpush2.msra.mxu0 0.0
      %2038 = vmatprep.subr.mxu0 0.0
      %2039 = vmatpush2.msra.mxu0 0.0
      %2040 = vmatprep.subr.mxu0 0.0
      %2041 = vmatpush2.msra.mxu0 0.0
      %2042 = vmatprep.subr.mxu0 0.0
      %2043 = vmatpush2.msra.mxu0 0.0
      %2044 = vmatprep.subr.mxu0 0.0
      %2045 = vmatpush2.msra.mxu0 0.0
      %2046 = vmatprep.subr.mxu0 0.0
      %2047 = vmatpush2.msra.mxu0 0.0
      %2048 = vmatprep.subr.mxu0 0.0
      %2049 = vmatpush2.msra.mxu0 0.0
      %2050 = vmatprep.subr.mxu0 0.0
      %2051 = vmatpush2.msra.mxu0 0.0
      %2052 = vmatprep.subr.mxu0 0.0
      %2053 = vmatpush2.msra.mxu0 0.0
      %2054 = vmatprep.subr.mxu0 0.0
      %2055 = vmatpush2.msra.mxu0 0.0
      %2056 = vmatprep.subr.mxu0 0.0
      %2057 = vmatpush2.msra.mxu0 0.0
      %2058 = vmatprep.subr.mxu0 0.0
      %2059 = vmatpush2.msra.mxu0 0.0
      %2060 = vmatprep.subr.mxu0 0.0
      %2061 = vmatpush2.msra.mxu0 0.0
      %2062 = vmatprep.subr.mxu0 0.0
      %2063 = vmatpush2.msra.mxu0 0.0
      %2064 = vmatprep.mubr.f32.mxu0 0.0
      %2065 = vmatmul.mubr.f32.gmra.mxu0 %v1984
      %v2066 = vpop.f32.mrf.mxu0
      %v2067 = vadd.f32 0.0, %v2066
      %v2068 = vpop.f32.mrf.mxu0
      %2069 = vmatprep.mubr.f32.mxu0 0.0
      %2070 = vmatmul.mubr.f32.gmra.mxu0 %v1986
      %v2071 = vpop.f32.mrf.mxu0
      %v2072 = vadd.f32 0.0, %v2071
      %v2073 = vpop.f32.mrf.mxu0
      %2074 = vmatprep.mubr.f32.mxu0 0.0
      %2075 = vmatmul.mubr.f32.gmra.mxu0 %v1988
      %v2076 = vpop.f32.mrf.mxu0
      %v2077 = vadd.f32 0.0, %v2076
      %v2078 = vpop.f32.mrf.mxu0
      %2079 = vmatprep.mubr.f32.mxu0 0.0
      %2080 = vmatmul.mubr.f32.gmra.mxu0 %v1990
      %v2081 = vpop.f32.mrf.mxu0
      %v2082 = vadd.f32 0.0, %v2081
      %v2083 = vpop.f32.mrf.mxu0
      %2084 = vmatprep.mubr.f32.mxu0 0.0
      %2085 = vmatmul.mubr.f32.gmra.mxu0 %v1992
      %v2086 = vpop.f32.mrf.mxu0
      %v2087 = vadd.f32 0.0, %v2086
      %v2088 = vpop.f32.mrf.mxu0
      %2089 = vmatprep.mubr.f32.mxu0 0.0
      %2090 = vmatmul.mubr.f32.gmra.mxu0 %v1994
      %v2091 = vpop.f32.mrf.mxu0
      %v2092 = vadd.f32 0.0, %v2091
      %v2093 = vpop.f32.mrf.mxu0
      %2094 = vmatprep.mubr.f32.mxu0 0.0
      %2095 = vmatmul.mubr.f32.gmra.mxu0 %v1996
      %v2096 = vpop.f32.mrf.mxu0
      %v2097 = vadd.f32 0.0, %v2096
      %v2098 = vpop.f32.mrf.mxu0
      %2099 = vmatprep.mubr.f32.mxu0 0.0
      %2100 = vmatmul.mubr.f32.gmra.mxu0 %v1998
      %v2101 = vpop.f32.mrf.mxu0
      %v2102 = vadd.f32 0.0, %v2101
      %v2103 = vpop.f32.mrf.mxu0
      %2104 = vdwg.mxu0
      %v2105 = vadd.f32 %v1916, %v2067
      %v2106 = vadd.f32 %v1921, %v2072
      %v2107 = vadd.f32 %v1926, %v2077
      %v2108 = vadd.f32 %v1931, %v2082
      %v2109 = vadd.f32 %v1936, %v2087
      %v2110 = vadd.f32 %v1941, %v2092
      %v2111 = vadd.f32 %v1946, %v2097
      %v2112 = vadd.f32 %v1951, %v2102
      %s2113 = scalar_lea.vmem %s3, 96
      %v2114 = vld [vmem:[%s2113] sm:$0xff]
      %v2115 = vld [vmem:[%s2113 + $0x8] sm:$0xff]
      %v2116 = vld [vmem:[%s2113 + $0x10] sm:$0xff]
      %v2117 = vld [vmem:[%s2113 + $0x18] sm:$0xff]
      %v2119 = vsel %vm1612, %v1659, 0
      %2121 = vmatprep.subr.mxu0 0.0
      %2122 = vmatpush1.msra.mxu0 0.0
      %2123 = vmatprep.subr.mxu0 0.0
      %2124 = vmatpush1.msra.mxu0 0.0
      %2125 = vmatprep.subr.mxu0 0.0
      %2126 = vmatpush1.msra.mxu0 0.0
      %2127 = vmatprep.subr.mxu0 0.0
      %2128 = vmatpush1.msra.mxu0 0.0
      %2129 = vmatprep.subr.mxu0 0.0
      %2130 = vmatpush1.msra.mxu0 0.0
      %2131 = vmatprep.subr.mxu0 0.0
      %2132 = vmatpush1.msra.mxu0 0.0
      %2133 = vmatprep.subr.mxu0 0.0
      %2134 = vmatpush1.msra.mxu0 0.0
      %2135 = vmatprep.subr.mxu0 0.0
      %2136 = vmatpush1.msra.mxu0 0.0
      %2137 = vmatprep.subr.mxu0 0.0
      %2138 = vmatpush1.msra.mxu0 0.0
      %2139 = vmatprep.subr.mxu0 0.0
      %2140 = vmatpush1.msra.mxu0 0.0
      %2141 = vmatprep.subr.mxu0 0.0
      %2142 = vmatpush1.msra.mxu0 0.0
      %2143 = vmatprep.subr.mxu0 0.0
      %2144 = vmatpush1.msra.mxu0 0.0
      %2145 = vmatprep.subr.mxu0 0.0
      %2146 = vmatpush1.msra.mxu0 %v2117
      %2147 = vmatprep.subr.mxu0 0.0
      %2148 = vmatpush1.msra.mxu0 %v2116
      %2149 = vmatprep.subr.mxu0 0.0
      %2150 = vmatpush1.msra.mxu0 %v2115
      %2151 = vmatprep.subr.mxu0 0.0
      %2152 = vmatpush1.msra.mxu0 %v2114
      %2153 = vmatprep.subr.mxu0 0.0
      %2154 = vmatpush2.msra.mxu0 0.0
      %2155 = vmatprep.subr.mxu0 0.0
      %2156 = vmatpush2.msra.mxu0 0.0
      %2157 = vmatprep.subr.mxu0 0.0
      %2158 = vmatpush2.msra.mxu0 0.0
      %2159 = vmatprep.subr.mxu0 0.0
      %2160 = vmatpush2.msra.mxu0 0.0
      %2161 = vmatprep.subr.mxu0 0.0
      %2162 = vmatpush2.msra.mxu0 0.0
      %2163 = vmatprep.subr.mxu0 0.0
      %2164 = vmatpush2.msra.mxu0 0.0
      %2165 = vmatprep.subr.mxu0 0.0
      %2166 = vmatpush2.msra.mxu0 0.0
      %2167 = vmatprep.subr.mxu0 0.0
      %2168 = vmatpush2.msra.mxu0 0.0
      %2169 = vmatprep.subr.mxu0 0.0
      %2170 = vmatpush2.msra.mxu0 0.0
      %2171 = vmatprep.subr.mxu0 0.0
      %2172 = vmatpush2.msra.mxu0 0.0
      %2173 = vmatprep.subr.mxu0 0.0
      %2174 = vmatpush2.msra.mxu0 0.0
      %2175 = vmatprep.subr.mxu0 0.0
      %2176 = vmatpush2.msra.mxu0 0.0
      %2177 = vmatprep.subr.mxu0 0.0
      %2178 = vmatpush2.msra.mxu0 0.0
      %2179 = vmatprep.subr.mxu0 0.0
      %2180 = vmatpush2.msra.mxu0 0.0
      %2181 = vmatprep.subr.mxu0 0.0
      %2182 = vmatpush2.msra.mxu0 0.0
      %2183 = vmatprep.subr.mxu0 0.0
      %2184 = vmatpush2.msra.mxu0 0.0
      %2185 = vmatprep.mubr.f32.mxu0 0.0
      %2186 = vmatmul.mubr.f32.gmra.mxu0 %v1835
      %v2187 = vpop.f32.mrf.mxu0
      %v2188 = vadd.f32 0.0, %v2187
      %v2189 = vpop.f32.mrf.mxu0
      %2190 = vmatprep.mubr.f32.mxu0 0.0
      %2191 = vmatmul.mubr.f32.gmra.mxu0 %v1837
      %v2192 = vpop.f32.mrf.mxu0
      %v2193 = vadd.f32 0.0, %v2192
      %v2194 = vpop.f32.mrf.mxu0
      %2195 = vmatprep.mubr.f32.mxu0 0.0
      %2196 = vmatmul.mubr.f32.gmra.mxu0 %v1839
      %v2197 = vpop.f32.mrf.mxu0
      %v2198 = vadd.f32 0.0, %v2197
      %v2199 = vpop.f32.mrf.mxu0
      %2200 = vmatprep.mubr.f32.mxu0 0.0
      %2201 = vmatmul.mubr.f32.gmra.mxu0 %v1841
      %v2202 = vpop.f32.mrf.mxu0
      %v2203 = vadd.f32 0.0, %v2202
      %v2204 = vpop.f32.mrf.mxu0
      %2205 = vmatprep.mubr.f32.mxu0 0.0
      %2206 = vmatmul.mubr.f32.gmra.mxu0 %v1843
      %v2207 = vpop.f32.mrf.mxu0
      %v2208 = vadd.f32 0.0, %v2207
      %v2209 = vpop.f32.mrf.mxu0
      %2210 = vmatprep.mubr.f32.mxu0 0.0
      %2211 = vmatmul.mubr.f32.gmra.mxu0 %v1845
      %v2212 = vpop.f32.mrf.mxu0
      %v2213 = vadd.f32 0.0, %v2212
      %v2214 = vpop.f32.mrf.mxu0
      %2215 = vmatprep.mubr.f32.mxu0 0.0
      %2216 = vmatmul.mubr.f32.gmra.mxu0 %v1847
      %v2217 = vpop.f32.mrf.mxu0
      %v2218 = vadd.f32 0.0, %v2217
      %v2219 = vpop.f32.mrf.mxu0
      %2220 = vmatprep.mubr.f32.mxu0 0.0
      %2221 = vmatmul.mubr.f32.gmra.mxu0 %v2119
      %v2222 = vpop.f32.mrf.mxu0
      %v2223 = vadd.f32 0.0, %v2222
      %v2224 = vpop.f32.mrf.mxu0
      %2225 = vdwg.mxu0
      %v2226 = vadd.f32 %v2105, %v2188
      %v2227 = vadd.f32 %v2106, %v2193
      %v2228 = vadd.f32 %v2107, %v2198
      %v2229 = vadd.f32 %v2108, %v2203
      %v2230 = vadd.f32 %v2109, %v2208
      %v2231 = vadd.f32 %v2110, %v2213
      %v2232 = vadd.f32 %v2111, %v2218
      %v2233 = vadd.f32 %v2112, %v2223
      %v2235 = vrot.slane %v1659, 1
      %v2236 = vrot.slane %v1660, 1
      %v2237 = vsel %vm320, %v2235, %v2236
      %s2238 = scalar_lea.vmem %s3, 128
      %v2239 = vld [vmem:[%s2238] sm:$0xff]
      %v2240 = vld [vmem:[%s2238 + $0x8] sm:$0xff]
      %v2241 = vld [vmem:[%s2238 + $0x10] sm:$0xff]
      %v2242 = vld [vmem:[%s2238 + $0x18] sm:$0xff]
      %v2243 = vsel %vm1612, %v2237, 0
      %2245 = vmatprep.subr.mxu0 0.0
      %2246 = vmatpush1.msra.mxu0 0.0
      %2247 = vmatprep.subr.mxu0 0.0
      %2248 = vmatpush1.msra.mxu0 0.0
      %2249 = vmatprep.subr.mxu0 0.0
      %2250 = vmatpush1.msra.mxu0 0.0
      %2251 = vmatprep.subr.mxu0 0.0
      %2252 = vmatpush1.msra.mxu0 0.0
      %2253 = vmatprep.subr.mxu0 0.0
      %2254 = vmatpush1.msra.mxu0 0.0
      %2255 = vmatprep.subr.mxu0 0.0
      %2256 = vmatpush1.msra.mxu0 0.0
      %2257 = vmatprep.subr.mxu0 0.0
      %2258 = vmatpush1.msra.mxu0 0.0
      %2259 = vmatprep.subr.mxu0 0.0
      %2260 = vmatpush1.msra.mxu0 0.0
      %2261 = vmatprep.subr.mxu0 0.0
      %2262 = vmatpush1.msra.mxu0 0.0
      %2263 = vmatprep.subr.mxu0 0.0
      %2264 = vmatpush1.msra.mxu0 0.0
      %2265 = vmatprep.subr.mxu0 0.0
      %2266 = vmatpush1.msra.mxu0 0.0
      %2267 = vmatprep.subr.mxu0 0.0
      %2268 = vmatpush1.msra.mxu0 0.0
      %2269 = vmatprep.subr.mxu0 0.0
      %2270 = vmatpush1.msra.mxu0 %v2242
      %2271 = vmatprep.subr.mxu0 0.0
      %2272 = vmatpush1.msra.mxu0 %v2241
      %2273 = vmatprep.subr.mxu0 0.0
      %2274 = vmatpush1.msra.mxu0 %v2240
      %2275 = vmatprep.subr.mxu0 0.0
      %2276 = vmatpush1.msra.mxu0 %v2239
      %2277 = vmatprep.subr.mxu0 0.0
      %2278 = vmatpush2.msra.mxu0 0.0
      %2279 = vmatprep.subr.mxu0 0.0
      %2280 = vmatpush2.msra.mxu0 0.0
      %2281 = vmatprep.subr.mxu0 0.0
      %2282 = vmatpush2.msra.mxu0 0.0
      %2283 = vmatprep.subr.mxu0 0.0
      %2284 = vmatpush2.msra.mxu0 0.0
      %2285 = vmatprep.subr.mxu0 0.0
      %2286 = vmatpush2.msra.mxu0 0.0
      %2287 = vmatprep.subr.mxu0 0.0
      %2288 = vmatpush2.msra.mxu0 0.0
      %2289 = vmatprep.subr.mxu0 0.0
      %2290 = vmatpush2.msra.mxu0 0.0
      %2291 = vmatprep.subr.mxu0 0.0
      %2292 = vmatpush2.msra.mxu0 0.0
      %2293 = vmatprep.subr.mxu0 0.0
      %2294 = vmatpush2.msra.mxu0 0.0
      %2295 = vmatprep.subr.mxu0 0.0
      %2296 = vmatpush2.msra.mxu0 0.0
      %2297 = vmatprep.subr.mxu0 0.0
      %2298 = vmatpush2.msra.mxu0 0.0
      %2299 = vmatprep.subr.mxu0 0.0
      %2300 = vmatpush2.msra.mxu0 0.0
      %2301 = vmatprep.subr.mxu0 0.0
      %2302 = vmatpush2.msra.mxu0 0.0
      %2303 = vmatprep.subr.mxu0 0.0
      %2304 = vmatpush2.msra.mxu0 0.0
      %2305 = vmatprep.subr.mxu0 0.0
      %2306 = vmatpush2.msra.mxu0 0.0
      %2307 = vmatprep.subr.mxu0 0.0
      %2308 = vmatpush2.msra.mxu0 0.0
      %2309 = vmatprep.mubr.f32.mxu0 0.0
      %2310 = vmatmul.mubr.f32.gmra.mxu0 %v1714
      %v2311 = vpop.f32.mrf.mxu0
      %v2312 = vadd.f32 0.0, %v2311
      %v2313 = vpop.f32.mrf.mxu0
      %2314 = vmatprep.mubr.f32.mxu0 0.0
      %2315 = vmatmul.mubr.f32.gmra.mxu0 %v1716
      %v2316 = vpop.f32.mrf.mxu0
      %v2317 = vadd.f32 0.0, %v2316
      %v2318 = vpop.f32.mrf.mxu0
      %2319 = vmatprep.mubr.f32.mxu0 0.0
      %2320 = vmatmul.mubr.f32.gmra.mxu0 %v1718
      %v2321 = vpop.f32.mrf.mxu0
      %v2322 = vadd.f32 0.0, %v2321
      %v2323 = vpop.f32.mrf.mxu0
      %2324 = vmatprep.mubr.f32.mxu0 0.0
      %2325 = vmatmul.mubr.f32.gmra.mxu0 %v1720
      %v2326 = vpop.f32.mrf.mxu0
      %v2327 = vadd.f32 0.0, %v2326
      %v2328 = vpop.f32.mrf.mxu0
      %2329 = vmatprep.mubr.f32.mxu0 0.0
      %2330 = vmatmul.mubr.f32.gmra.mxu0 %v1722
      %v2331 = vpop.f32.mrf.mxu0
      %v2332 = vadd.f32 0.0, %v2331
      %v2333 = vpop.f32.mrf.mxu0
      %2334 = vmatprep.mubr.f32.mxu0 0.0
      %2335 = vmatmul.mubr.f32.gmra.mxu0 %v1724
      %v2336 = vpop.f32.mrf.mxu0
      %v2337 = vadd.f32 0.0, %v2336
      %v2338 = vpop.f32.mrf.mxu0
      %2339 = vmatprep.mubr.f32.mxu0 0.0
      %2340 = vmatmul.mubr.f32.gmra.mxu0 %v1726
      %v2341 = vpop.f32.mrf.mxu0
      %v2342 = vadd.f32 0.0, %v2341
      %v2343 = vpop.f32.mrf.mxu0
      %2344 = vmatprep.mubr.f32.mxu0 0.0
      %2345 = vmatmul.mubr.f32.gmra.mxu0 %v2243
      %v2346 = vpop.f32.mrf.mxu0
      %v2347 = vadd.f32 0.0, %v2346
      %v2348 = vpop.f32.mrf.mxu0
      %2349 = vdwg.mxu0
      %v2350 = vadd.f32 %v2226, %v2312
      %v2351 = vadd.f32 %v2227, %v2317
      %v2352 = vadd.f32 %v2228, %v2322
      %v2353 = vadd.f32 %v2229, %v2327
      %v2354 = vadd.f32 %v2230, %v2332
      %v2355 = vadd.f32 %v2231, %v2337
      %v2356 = vadd.f32 %v2232, %v2342
      %v2357 = vadd.f32 %v2233, %v2347
      %v2358 = vrot.slane %v1659, 2
      %v2359 = vrot.slane %v1660, 2
      %v2360 = vsel %vm1954, %v2358, %v2359
      %s2361 = scalar_lea.vmem %s3, 160
      %v2362 = vld [vmem:[%s2361] sm:$0xff]
      %v2363 = vld [vmem:[%s2361 + $0x8] sm:$0xff]
      %v2364 = vld [vmem:[%s2361 + $0x10] sm:$0xff]
      %v2365 = vld [vmem:[%s2361 + $0x18] sm:$0xff]
      %v2366 = vsel %vm1612, %v2360, 0
      %2368 = vmatprep.subr.mxu0 0.0
      %2369 = vmatpush1.msra.mxu0 0.0
      %2370 = vmatprep.subr.mxu0 0.0
      %2371 = vmatpush1.msra.mxu0 0.0
      %2372 = vmatprep.subr.mxu0 0.0
      %2373 = vmatpush1.msra.mxu0 0.0
      %2374 = vmatprep.subr.mxu0 0.0
      %2375 = vmatpush1.msra.mxu0 0.0
      %2376 = vmatprep.subr.mxu0 0.0
      %2377 = vmatpush1.msra.mxu0 0.0
      %2378 = vmatprep.subr.mxu0 0.0
      %2379 = vmatpush1.msra.mxu0 0.0
      %2380 = vmatprep.subr.mxu0 0.0
      %2381 = vmatpush1.msra.mxu0 0.0
      %2382 = vmatprep.subr.mxu0 0.0
      %2383 = vmatpush1.msra.mxu0 0.0
      %2384 = vmatprep.subr.mxu0 0.0
      %2385 = vmatpush1.msra.mxu0 0.0
      %2386 = vmatprep.subr.mxu0 0.0
      %2387 = vmatpush1.msra.mxu0 0.0
      %2388 = vmatprep.subr.mxu0 0.0
      %2389 = vmatpush1.msra.mxu0 0.0
      %2390 = vmatprep.subr.mxu0 0.0
      %2391 = vmatpush1.msra.mxu0 0.0
      %2392 = vmatprep.subr.mxu0 0.0
      %2393 = vmatpush1.msra.mxu0 %v2365
      %2394 = vmatprep.subr.mxu0 0.0
      %2395 = vmatpush1.msra.mxu0 %v2364
      %2396 = vmatprep.subr.mxu0 0.0
      %2397 = vmatpush1.msra.mxu0 %v2363
      %2398 = vmatprep.subr.mxu0 0.0
      %2399 = vmatpush1.msra.mxu0 %v2362
      %2400 = vmatprep.subr.mxu0 0.0
      %2401 = vmatpush2.msra.mxu0 0.0
      %2402 = vmatprep.subr.mxu0 0.0
      %2403 = vmatpush2.msra.mxu0 0.0
      %2404 = vmatprep.subr.mxu0 0.0
      %2405 = vmatpush2.msra.mxu0 0.0
      %2406 = vmatprep.subr.mxu0 0.0
      %2407 = vmatpush2.msra.mxu0 0.0
      %2408 = vmatprep.subr.mxu0 0.0
      %2409 = vmatpush2.msra.mxu0 0.0
      %2410 = vmatprep.subr.mxu0 0.0
      %2411 = vmatpush2.msra.mxu0 0.0
      %2412 = vmatprep.subr.mxu0 0.0
      %2413 = vmatpush2.msra.mxu0 0.0
      %2414 = vmatprep.subr.mxu0 0.0
      %2415 = vmatpush2.msra.mxu0 0.0
      %2416 = vmatprep.subr.mxu0 0.0
      %2417 = vmatpush2.msra.mxu0 0.0
      %2418 = vmatprep.subr.mxu0 0.0
      %2419 = vmatpush2.msra.mxu0 0.0
      %2420 = vmatprep.subr.mxu0 0.0
      %2421 = vmatpush2.msra.mxu0 0.0
      %2422 = vmatprep.subr.mxu0 0.0
      %2423 = vmatpush2.msra.mxu0 0.0
      %2424 = vmatprep.subr.mxu0 0.0
      %2425 = vmatpush2.msra.mxu0 0.0
      %2426 = vmatprep.subr.mxu0 0.0
      %2427 = vmatpush2.msra.mxu0 0.0
      %2428 = vmatprep.subr.mxu0 0.0
      %2429 = vmatpush2.msra.mxu0 0.0
      %2430 = vmatprep.subr.mxu0 0.0
      %2431 = vmatpush2.msra.mxu0 0.0
      %2432 = vmatprep.mubr.f32.mxu0 0.0
      %2433 = vmatmul.mubr.f32.gmra.mxu0 %v1986
      %v2434 = vpop.f32.mrf.mxu0
      %v2435 = vadd.f32 0.0, %v2434
      %v2436 = vpop.f32.mrf.mxu0
      %2437 = vmatprep.mubr.f32.mxu0 0.0
      %2438 = vmatmul.mubr.f32.gmra.mxu0 %v1988
      %v2439 = vpop.f32.mrf.mxu0
      %v2440 = vadd.f32 0.0, %v2439
      %v2441 = vpop.f32.mrf.mxu0
      %2442 = vmatprep.mubr.f32.mxu0 0.0
      %2443 = vmatmul.mubr.f32.gmra.mxu0 %v1990
      %v2444 = vpop.f32.mrf.mxu0
      %v2445 = vadd.f32 0.0, %v2444
      %v2446 = vpop.f32.mrf.mxu0
      %2447 = vmatprep.mubr.f32.mxu0 0.0
      %2448 = vmatmul.mubr.f32.gmra.mxu0 %v1992
      %v2449 = vpop.f32.mrf.mxu0
      %v2450 = vadd.f32 0.0, %v2449
      %v2451 = vpop.f32.mrf.mxu0
      %2452 = vmatprep.mubr.f32.mxu0 0.0
      %2453 = vmatmul.mubr.f32.gmra.mxu0 %v1994
      %v2454 = vpop.f32.mrf.mxu0
      %v2455 = vadd.f32 0.0, %v2454
      %v2456 = vpop.f32.mrf.mxu0
      %2457 = vmatprep.mubr.f32.mxu0 0.0
      %2458 = vmatmul.mubr.f32.gmra.mxu0 %v1996
      %v2459 = vpop.f32.mrf.mxu0
      %v2460 = vadd.f32 0.0, %v2459
      %v2461 = vpop.f32.mrf.mxu0
      %2462 = vmatprep.mubr.f32.mxu0 0.0
      %2463 = vmatmul.mubr.f32.gmra.mxu0 %v1998
      %v2464 = vpop.f32.mrf.mxu0
      %v2465 = vadd.f32 0.0, %v2464
      %v2466 = vpop.f32.mrf.mxu0
      %2467 = vmatprep.mubr.f32.mxu0 0.0
      %2468 = vmatmul.mubr.f32.gmra.mxu0 %v2366
      %v2469 = vpop.f32.mrf.mxu0
      %v2470 = vadd.f32 0.0, %v2469
      %v2471 = vpop.f32.mrf.mxu0
      %2472 = vdwg.mxu0
      %v2473 = vadd.f32 %v2350, %v2435
      %v2474 = vadd.f32 %v2351, %v2440
      %v2475 = vadd.f32 %v2352, %v2445
      %v2476 = vadd.f32 %v2353, %v2450
      %v2477 = vadd.f32 %v2354, %v2455
      %v2478 = vadd.f32 %v2355, %v2460
      %v2479 = vadd.f32 %v2356, %v2465
      %v2480 = vadd.f32 %v2357, %v2470
      %s2481 = scalar_lea.vmem %s3, 192
      %v2482 = vld [vmem:[%s2481] sm:$0xff]
      %v2483 = vld [vmem:[%s2481 + $0x8] sm:$0xff]
      %v2484 = vld [vmem:[%s2481 + $0x10] sm:$0xff]
      %v2485 = vld [vmem:[%s2481 + $0x18] sm:$0xff]
      %v2487 = vsel %vm1612, %v1661, 0
      %2489 = vmatprep.subr.mxu0 0.0
      %2490 = vmatpush1.msra.mxu0 0.0
      %2491 = vmatprep.subr.mxu0 0.0
      %2492 = vmatpush1.msra.mxu0 0.0
      %2493 = vmatprep.subr.mxu0 0.0
      %2494 = vmatpush1.msra.mxu0 0.0
      %2495 = vmatprep.subr.mxu0 0.0
      %2496 = vmatpush1.msra.mxu0 0.0
      %2497 = vmatprep.subr.mxu0 0.0
      %2498 = vmatpush1.msra.mxu0 0.0
      %2499 = vmatprep.subr.mxu0 0.0
      %2500 = vmatpush1.msra.mxu0 0.0
      %2501 = vmatprep.subr.mxu0 0.0
      %2502 = vmatpush1.msra.mxu0 0.0
      %2503 = vmatprep.subr.mxu0 0.0
      %2504 = vmatpush1.msra.mxu0 0.0
      %2505 = vmatprep.subr.mxu0 0.0
      %2506 = vmatpush1.msra.mxu0 0.0
      %2507 = vmatprep.subr.mxu0 0.0
      %2508 = vmatpush1.msra.mxu0 0.0
      %2509 = vmatprep.subr.mxu0 0.0
      %2510 = vmatpush1.msra.mxu0 0.0
      %2511 = vmatprep.subr.mxu0 0.0
      %2512 = vmatpush1.msra.mxu0 0.0
      %2513 = vmatprep.subr.mxu0 0.0
      %2514 = vmatpush1.msra.mxu0 %v2485
      %2515 = vmatprep.subr.mxu0 0.0
      %2516 = vmatpush1.msra.mxu0 %v2484
      %2517 = vmatprep.subr.mxu0 0.0
      %2518 = vmatpush1.msra.mxu0 %v2483
      %2519 = vmatprep.subr.mxu0 0.0
      %2520 = vmatpush1.msra.mxu0 %v2482
      %2521 = vmatprep.subr.mxu0 0.0
      %2522 = vmatpush2.msra.mxu0 0.0
      %2523 = vmatprep.subr.mxu0 0.0
      %2524 = vmatpush2.msra.mxu0 0.0
      %2525 = vmatprep.subr.mxu0 0.0
      %2526 = vmatpush2.msra.mxu0 0.0
      %2527 = vmatprep.subr.mxu0 0.0
      %2528 = vmatpush2.msra.mxu0 0.0
      %2529 = vmatprep.subr.mxu0 0.0
      %2530 = vmatpush2.msra.mxu0 0.0
      %2531 = vmatprep.subr.mxu0 0.0
      %2532 = vmatpush2.msra.mxu0 0.0
      %2533 = vmatprep.subr.mxu0 0.0
      %2534 = vmatpush2.msra.mxu0 0.0
      %2535 = vmatprep.subr.mxu0 0.0
      %2536 = vmatpush2.msra.mxu0 0.0
      %2537 = vmatprep.subr.mxu0 0.0
      %2538 = vmatpush2.msra.mxu0 0.0
      %2539 = vmatprep.subr.mxu0 0.0
      %2540 = vmatpush2.msra.mxu0 0.0
      %2541 = vmatprep.subr.mxu0 0.0
      %2542 = vmatpush2.msra.mxu0 0.0
      %2543 = vmatprep.subr.mxu0 0.0
      %2544 = vmatpush2.msra.mxu0 0.0
      %2545 = vmatprep.subr.mxu0 0.0
      %2546 = vmatpush2.msra.mxu0 0.0
      %2547 = vmatprep.subr.mxu0 0.0
      %2548 = vmatpush2.msra.mxu0 0.0
      %2549 = vmatprep.subr.mxu0 0.0
      %2550 = vmatpush2.msra.mxu0 0.0
      %2551 = vmatprep.subr.mxu0 0.0
      %2552 = vmatpush2.msra.mxu0 0.0
      %2553 = vmatprep.mubr.f32.mxu0 0.0
      %2554 = vmatmul.mubr.f32.gmra.mxu0 %v1837
      %v2555 = vpop.f32.mrf.mxu0
      %v2556 = vadd.f32 0.0, %v2555
      %v2557 = vpop.f32.mrf.mxu0
      %2558 = vmatprep.mubr.f32.mxu0 0.0
      %2559 = vmatmul.mubr.f32.gmra.mxu0 %v1839
      %v2560 = vpop.f32.mrf.mxu0
      %v2561 = vadd.f32 0.0, %v2560
      %v2562 = vpop.f32.mrf.mxu0
      %2563 = vmatprep.mubr.f32.mxu0 0.0
      %2564 = vmatmul.mubr.f32.gmra.mxu0 %v1841
      %v2565 = vpop.f32.mrf.mxu0
      %v2566 = vadd.f32 0.0, %v2565
      %v2567 = vpop.f32.mrf.mxu0
      %2568 = vmatprep.mubr.f32.mxu0 0.0
      %2569 = vmatmul.mubr.f32.gmra.mxu0 %v1843
      %v2570 = vpop.f32.mrf.mxu0
      %v2571 = vadd.f32 0.0, %v2570
      %v2572 = vpop.f32.mrf.mxu0
      %2573 = vmatprep.mubr.f32.mxu0 0.0
      %2574 = vmatmul.mubr.f32.gmra.mxu0 %v1845
      %v2575 = vpop.f32.mrf.mxu0
      %v2576 = vadd.f32 0.0, %v2575
      %v2577 = vpop.f32.mrf.mxu0
      %2578 = vmatprep.mubr.f32.mxu0 0.0
      %2579 = vmatmul.mubr.f32.gmra.mxu0 %v1847
      %v2580 = vpop.f32.mrf.mxu0
      %v2581 = vadd.f32 0.0, %v2580
      %v2582 = vpop.f32.mrf.mxu0
      %2583 = vmatprep.mubr.f32.mxu0 0.0
      %2584 = vmatmul.mubr.f32.gmra.mxu0 %v2119
      %v2585 = vpop.f32.mrf.mxu0
      %v2586 = vadd.f32 0.0, %v2585
      %v2587 = vpop.f32.mrf.mxu0
      %2588 = vmatprep.mubr.f32.mxu0 0.0
      %2589 = vmatmul.mubr.f32.gmra.mxu0 %v2487
      %v2590 = vpop.f32.mrf.mxu0
      %v2591 = vadd.f32 0.0, %v2590
      %v2592 = vpop.f32.mrf.mxu0
      %2593 = vdwg.mxu0
      %v2594 = vadd.f32 %v2473, %v2556
      %v2595 = vadd.f32 %v2474, %v2561
      %v2596 = vadd.f32 %v2475, %v2566
      %v2597 = vadd.f32 %v2476, %v2571
      %v2598 = vadd.f32 %v2477, %v2576
      %v2599 = vadd.f32 %v2478, %v2581
      %v2600 = vadd.f32 %v2479, %v2586
      %v2601 = vadd.f32 %v2480, %v2591
      %v2603 = vrot.slane %v1661, 1
      %v2604 = vrot.slane %v1662, 1
      %v2605 = vsel %vm320, %v2603, %v2604
      %s2606 = scalar_lea.vmem %s3, 224
      %v2607 = vld [vmem:[%s2606] sm:$0xff]
      %v2608 = vld [vmem:[%s2606 + $0x8] sm:$0xff]
      %v2609 = vld [vmem:[%s2606 + $0x10] sm:$0xff]
      %v2610 = vld [vmem:[%s2606 + $0x18] sm:$0xff]
      %v2611 = vsel %vm1612, %v2605, 0
      %2613 = vmatprep.subr.mxu0 0.0
      %2614 = vmatpush1.msra.mxu0 0.0
      %2615 = vmatprep.subr.mxu0 0.0
      %2616 = vmatpush1.msra.mxu0 0.0
      %2617 = vmatprep.subr.mxu0 0.0
      %2618 = vmatpush1.msra.mxu0 0.0
      %2619 = vmatprep.subr.mxu0 0.0
      %2620 = vmatpush1.msra.mxu0 0.0
      %2621 = vmatprep.subr.mxu0 0.0
      %2622 = vmatpush1.msra.mxu0 0.0
      %2623 = vmatprep.subr.mxu0 0.0
      %2624 = vmatpush1.msra.mxu0 0.0
      %2625 = vmatprep.subr.mxu0 0.0
      %2626 = vmatpush1.msra.mxu0 0.0
      %2627 = vmatprep.subr.mxu0 0.0
      %2628 = vmatpush1.msra.mxu0 0.0
      %2629 = vmatprep.subr.mxu0 0.0
      %2630 = vmatpush1.msra.mxu0 0.0
      %2631 = vmatprep.subr.mxu0 0.0
      %2632 = vmatpush1.msra.mxu0 0.0
      %2633 = vmatprep.subr.mxu0 0.0
      %2634 = vmatpush1.msra.mxu0 0.0
      %2635 = vmatprep.subr.mxu0 0.0
      %2636 = vmatpush1.msra.mxu0 0.0
      %2637 = vmatprep.subr.mxu0 0.0
      %2638 = vmatpush1.msra.mxu0 %v2610
      %2639 = vmatprep.subr.mxu0 0.0
      %2640 = vmatpush1.msra.mxu0 %v2609
      %2641 = vmatprep.subr.mxu0 0.0
      %2642 = vmatpush1.msra.mxu0 %v2608
      %2643 = vmatprep.subr.mxu0 0.0
      %2644 = vmatpush1.msra.mxu0 %v2607
      %2645 = vmatprep.subr.mxu0 0.0
      %2646 = vmatpush2.msra.mxu0 0.0
      %2647 = vmatprep.subr.mxu0 0.0
      %2648 = vmatpush2.msra.mxu0 0.0
      %2649 = vmatprep.subr.mxu0 0.0
      %2650 = vmatpush2.msra.mxu0 0.0
      %2651 = vmatprep.subr.mxu0 0.0
      %2652 = vmatpush2.msra.mxu0 0.0
      %2653 = vmatprep.subr.mxu0 0.0
      %2654 = vmatpush2.msra.mxu0 0.0
      %2655 = vmatprep.subr.mxu0 0.0
      %2656 = vmatpush2.msra.mxu0 0.0
      %2657 = vmatprep.subr.mxu0 0.0
      %2658 = vmatpush2.msra.mxu0 0.0
      %2659 = vmatprep.subr.mxu0 0.0
      %2660 = vmatpush2.msra.mxu0 0.0
      %2661 = vmatprep.subr.mxu0 0.0
      %2662 = vmatpush2.msra.mxu0 0.0
      %2663 = vmatprep.subr.mxu0 0.0
      %2664 = vmatpush2.msra.mxu0 0.0
      %2665 = vmatprep.subr.mxu0 0.0
      %2666 = vmatpush2.msra.mxu0 0.0
      %2667 = vmatprep.subr.mxu0 0.0
      %2668 = vmatpush2.msra.mxu0 0.0
      %2669 = vmatprep.subr.mxu0 0.0
      %2670 = vmatpush2.msra.mxu0 0.0
      %2671 = vmatprep.subr.mxu0 0.0
      %2672 = vmatpush2.msra.mxu0 0.0
      %2673 = vmatprep.subr.mxu0 0.0
      %2674 = vmatpush2.msra.mxu0 0.0
      %2675 = vmatprep.subr.mxu0 0.0
      %2676 = vmatpush2.msra.mxu0 0.0
      %2677 = vmatprep.mubr.f32.mxu0 0.0
      %2678 = vmatmul.mubr.f32.gmra.mxu0 %v1716
      %v2679 = vpop.f32.mrf.mxu0
      %v2680 = vadd.f32 0.0, %v2679
      %v2681 = vpop.f32.mrf.mxu0
      %2682 = vmatprep.mubr.f32.mxu0 0.0
      %2683 = vmatmul.mubr.f32.gmra.mxu0 %v1718
      %v2684 = vpop.f32.mrf.mxu0
      %v2685 = vadd.f32 0.0, %v2684
      %v2686 = vpop.f32.mrf.mxu0
      %2687 = vmatprep.mubr.f32.mxu0 0.0
      %2688 = vmatmul.mubr.f32.gmra.mxu0 %v1720
      %v2689 = vpop.f32.mrf.mxu0
      %v2690 = vadd.f32 0.0, %v2689
      %v2691 = vpop.f32.mrf.mxu0
      %2692 = vmatprep.mubr.f32.mxu0 0.0
      %2693 = vmatmul.mubr.f32.gmra.mxu0 %v1722
      %v2694 = vpop.f32.mrf.mxu0
      %v2695 = vadd.f32 0.0, %v2694
      %v2696 = vpop.f32.mrf.mxu0
      %2697 = vmatprep.mubr.f32.mxu0 0.0
      %2698 = vmatmul.mubr.f32.gmra.mxu0 %v1724
      %v2699 = vpop.f32.mrf.mxu0
      %v2700 = vadd.f32 0.0, %v2699
      %v2701 = vpop.f32.mrf.mxu0
      %2702 = vmatprep.mubr.f32.mxu0 0.0
      %2703 = vmatmul.mubr.f32.gmra.mxu0 %v1726
      %v2704 = vpop.f32.mrf.mxu0
      %v2705 = vadd.f32 0.0, %v2704
      %v2706 = vpop.f32.mrf.mxu0
      %2707 = vmatprep.mubr.f32.mxu0 0.0
      %2708 = vmatmul.mubr.f32.gmra.mxu0 %v2243
      %v2709 = vpop.f32.mrf.mxu0
      %v2710 = vadd.f32 0.0, %v2709
      %v2711 = vpop.f32.mrf.mxu0
      %2712 = vmatprep.mubr.f32.mxu0 0.0
      %2713 = vmatmul.mubr.f32.gmra.mxu0 %v2611
      %v2714 = vpop.f32.mrf.mxu0
      %v2715 = vadd.f32 0.0, %v2714
      %v2716 = vpop.f32.mrf.mxu0
      %2717 = vdwg.mxu0
      %v2718 = vadd.f32 %v2594, %v2680
      %v2719 = vadd.f32 %v2595, %v2685
      %v2720 = vadd.f32 %v2596, %v2690
      %v2721 = vadd.f32 %v2597, %v2695
      %v2722 = vadd.f32 %v2598, %v2700
      %v2723 = vadd.f32 %v2599, %v2705
      %v2724 = vadd.f32 %v2600, %v2710
      %v2725 = vadd.f32 %v2601, %v2715
      %v2726 = vrot.slane %v1661, 2
      %v2727 = vrot.slane %v1662, 2
      %v2728 = vsel %vm1954, %v2726, %v2727
      %s2729 = scalar_lea.vmem %s3, 256
      %v2730 = vld [vmem:[%s2729] sm:$0xff]
      %v2731 = vld [vmem:[%s2729 + $0x8] sm:$0xff]
      %v2732 = vld [vmem:[%s2729 + $0x10] sm:$0xff]
      %v2733 = vld [vmem:[%s2729 + $0x18] sm:$0xff]
      %v2734 = vsel %vm1612, %v2728, 0
      %2736 = vmatprep.subr.mxu0 0.0
      %2737 = vmatpush1.msra.mxu0 0.0
      %2738 = vmatprep.subr.mxu0 0.0
      %2739 = vmatpush1.msra.mxu0 0.0
      %2740 = vmatprep.subr.mxu0 0.0
      %2741 = vmatpush1.msra.mxu0 0.0
      %2742 = vmatprep.subr.mxu0 0.0
      %2743 = vmatpush1.msra.mxu0 0.0
      %2744 = vmatprep.subr.mxu0 0.0
      %2745 = vmatpush1.msra.mxu0 0.0
      %2746 = vmatprep.subr.mxu0 0.0
      %2747 = vmatpush1.msra.mxu0 0.0
      %2748 = vmatprep.subr.mxu0 0.0
      %2749 = vmatpush1.msra.mxu0 0.0
      %2750 = vmatprep.subr.mxu0 0.0
      %2751 = vmatpush1.msra.mxu0 0.0
      %2752 = vmatprep.subr.mxu0 0.0
      %2753 = vmatpush1.msra.mxu0 0.0
      %2754 = vmatprep.subr.mxu0 0.0
      %2755 = vmatpush1.msra.mxu0 0.0
      %2756 = vmatprep.subr.mxu0 0.0
      %2757 = vmatpush1.msra.mxu0 0.0
      %2758 = vmatprep.subr.mxu0 0.0
      %2759 = vmatpush1.msra.mxu0 0.0
      %2760 = vmatprep.subr.mxu0 0.0
      %2761 = vmatpush1.msra.mxu0 %v2733
      %2762 = vmatprep.subr.mxu0 0.0
      %2763 = vmatpush1.msra.mxu0 %v2732
      %2764 = vmatprep.subr.mxu0 0.0
      %2765 = vmatpush1.msra.mxu0 %v2731
      %2766 = vmatprep.subr.mxu0 0.0
      %2767 = vmatpush1.msra.mxu0 %v2730
      %2768 = vmatprep.subr.mxu0 0.0
      %2769 = vmatpush2.msra.mxu0 0.0
      %2770 = vmatprep.subr.mxu0 0.0
      %2771 = vmatpush2.msra.mxu0 0.0
      %2772 = vmatprep.subr.mxu0 0.0
      %2773 = vmatpush2.msra.mxu0 0.0
      %2774 = vmatprep.subr.mxu0 0.0
      %2775 = vmatpush2.msra.mxu0 0.0
      %2776 = vmatprep.subr.mxu0 0.0
      %2777 = vmatpush2.msra.mxu0 0.0
      %2778 = vmatprep.subr.mxu0 0.0
      %2779 = vmatpush2.msra.mxu0 0.0
      %2780 = vmatprep.subr.mxu0 0.0
      %2781 = vmatpush2.msra.mxu0 0.0
      %2782 = vmatprep.subr.mxu0 0.0
      %2783 = vmatpush2.msra.mxu0 0.0
      %2784 = vmatprep.subr.mxu0 0.0
      %2785 = vmatpush2.msra.mxu0 0.0
      %2786 = vmatprep.subr.mxu0 0.0
      %2787 = vmatpush2.msra.mxu0 0.0
      %2788 = vmatprep.subr.mxu0 0.0
      %2789 = vmatpush2.msra.mxu0 0.0
      %2790 = vmatprep.subr.mxu0 0.0
      %2791 = vmatpush2.msra.mxu0 0.0
      %2792 = vmatprep.subr.mxu0 0.0
      %2793 = vmatpush2.msra.mxu0 0.0
      %2794 = vmatprep.subr.mxu0 0.0
      %2795 = vmatpush2.msra.mxu0 0.0
      %2796 = vmatprep.subr.mxu0 0.0
      %2797 = vmatpush2.msra.mxu0 0.0
      %2798 = vmatprep.subr.mxu0 0.0
      %2799 = vmatpush2.msra.mxu0 0.0
      %2800 = vmatprep.mubr.f32.mxu0 0.0
      %2801 = vmatmul.mubr.f32.gmra.mxu0 %v1988
      %v2802 = vpop.f32.mrf.mxu0
      %v2803 = vadd.f32 0.0, %v2802
      %v2804 = vpop.f32.mrf.mxu0
      %2805 = vmatprep.mubr.f32.mxu0 0.0
      %2806 = vmatmul.mubr.f32.gmra.mxu0 %v1990
      %v2807 = vpop.f32.mrf.mxu0
      %v2808 = vadd.f32 0.0, %v2807
      %v2809 = vpop.f32.mrf.mxu0
      %2810 = vmatprep.mubr.f32.mxu0 0.0
      %2811 = vmatmul.mubr.f32.gmra.mxu0 %v1992
      %v2812 = vpop.f32.mrf.mxu0
      %v2813 = vadd.f32 0.0, %v2812
      %v2814 = vpop.f32.mrf.mxu0
      %2815 = vmatprep.mubr.f32.mxu0 0.0
      %2816 = vmatmul.mubr.f32.gmra.mxu0 %v1994
      %v2817 = vpop.f32.mrf.mxu0
      %v2818 = vadd.f32 0.0, %v2817
      %v2819 = vpop.f32.mrf.mxu0
      %2820 = vmatprep.mubr.f32.mxu0 0.0
      %2821 = vmatmul.mubr.f32.gmra.mxu0 %v1996
      %v2822 = vpop.f32.mrf.mxu0
      %v2823 = vadd.f32 0.0, %v2822
      %v2824 = vpop.f32.mrf.mxu0
      %2825 = vmatprep.mubr.f32.mxu0 0.0
      %2826 = vmatmul.mubr.f32.gmra.mxu0 %v1998
      %v2827 = vpop.f32.mrf.mxu0
      %v2828 = vadd.f32 0.0, %v2827
      %v2829 = vpop.f32.mrf.mxu0
      %2830 = vmatprep.mubr.f32.mxu0 0.0
      %2831 = vmatmul.mubr.f32.gmra.mxu0 %v2366
      %v2832 = vpop.f32.mrf.mxu0
      %v2833 = vadd.f32 0.0, %v2832
      %v2834 = vpop.f32.mrf.mxu0
      %2835 = vmatprep.mubr.f32.mxu0 0.0
      %2836 = vmatmul.mubr.f32.gmra.mxu0 %v2734
      %v2837 = vpop.f32.mrf.mxu0
      %v2838 = vadd.f32 0.0, %v2837
      %v2839 = vpop.f32.mrf.mxu0
      %2840 = vdwg.mxu0
      %v2841 = vadd.f32 %v2718, %v2803
      %v2842 = vadd.f32 %v2719, %v2808
      %v2843 = vadd.f32 %v2720, %v2813
      %v2844 = vadd.f32 %v2721, %v2818
      %v2845 = vadd.f32 %v2722, %v2823
      %v2846 = vadd.f32 %v2723, %v2828
      %v2847 = vadd.f32 %v2724, %v2833
      %v2848 = vadd.f32 %v2725, %v2838
      %v2849 = vld [vmem:[%s4] sm:$0x1]
      %v2851 = vlaneseq
      %v2852 = vshrl.u32 %v2851, 7
      %v2853 = vsub.s32 0, %v2852
      %v2854 = vrot.slane %v2849, %v2853
      %v2856 = vadd.f32 %v2841, %v2854
      %v2857 = vadd.f32 %v2842, %v2854
      %v2858 = vadd.f32 %v2843, %v2854
      %v2859 = vadd.f32 %v2844, %v2854
      %v2860 = vadd.f32 %v2845, %v2854
      %v2861 = vadd.f32 %v2846, %v2854
      %v2862 = vadd.f32 %v2847, %v2854
      %v2863 = vadd.f32 %v2848, %v2854
      %v2864 = vmax.f32 %v2856, 0.0
      %v2865 = vmax.f32 %v2857, 0.0
      %v2866 = vmax.f32 %v2858, 0.0
      %v2867 = vmax.f32 %v2859, 0.0
      %v2868 = vmax.f32 %v2860, 0.0
      %v2869 = vmax.f32 %v2861, 0.0
      %v2870 = vmax.f32 %v2862, 0.0
      %v2871 = vmax.f32 %v2863, 0.0
      %v2872 = vld [vmem:[%s5] sm:$0xff]
      %v2873 = vld [vmem:[%s5 + $0x8] sm:$0xff]
      %v2874 = vld [vmem:[%s5 + $0x10] sm:$0xff]
      %v2875 = vld [vmem:[%s5 + $0x18] sm:$0xff]
      %v2876 = vld [vmem:[%s5 + $0x20] sm:$0xff]
      %v2877 = vld [vmem:[%s5 + $0x28] sm:$0xff]
      %v2878 = vld [vmem:[%s5 + $0x30] sm:$0x1]
      %vm2879 = vcmask 523264
      %v2881 = vsel %vm2879, %v2872, 0
      %v2884 = vsel %vm2879, %v2873, 0
      %v2887 = vsel %vm2879, %v2874, 0
      %v2890 = vsel %vm2879, %v2875, 0
      %v2893 = vsel %vm2879, %v2876, 0
      %v2896 = vsel %vm2879, %v2877, 0
      %v2899 = vsel %vm2879, %v2878, 0
      %2901 = vmatprep.subr.mxu0 0.0
      %2902 = vmatpush1.msra.mxu0 0.0
      %2903 = vmatprep.subr.mxu0 0.0
      %2904 = vmatpush1.msra.mxu0 0.0
      %2905 = vmatprep.subr.mxu0 0.0
      %2906 = vmatpush1.msra.mxu0 0.0
      %2907 = vmatprep.subr.mxu0 0.0
      %2908 = vmatpush1.msra.mxu0 0.0
      %2909 = vmatprep.subr.mxu0 0.0
      %2910 = vmatpush1.msra.mxu0 0.0
      %2911 = vmatprep.subr.mxu0 0.0
      %2912 = vmatpush1.msra.mxu0 0.0
      %2913 = vmatprep.subr.mxu0 0.0
      %2914 = vmatpush1.msra.mxu0 0.0
      %2915 = vmatprep.subr.mxu0 0.0
      %2916 = vmatpush1.msra.mxu0 0.0
      %2917 = vmatprep.subr.mxu0 0.0
      %2918 = vmatpush1.msra.mxu0 %v2871
      %2919 = vmatprep.subr.mxu0 0.0
      %2920 = vmatpush1.msra.mxu0 %v2870
      %2921 = vmatprep.subr.mxu0 0.0
      %2922 = vmatpush1.msra.mxu0 %v2869
      %2923 = vmatprep.subr.mxu0 0.0
      %2924 = vmatpush1.msra.mxu0 %v2868
      %2925 = vmatprep.subr.mxu0 0.0
      %2926 = vmatpush1.msra.mxu0 %v2867
      %2927 = vmatprep.subr.mxu0 0.0
      %2928 = vmatpush1.msra.mxu0 %v2866
      %2929 = vmatprep.subr.mxu0 0.0
      %2930 = vmatpush1.msra.mxu0 %v2865
      %2931 = vmatprep.subr.mxu0 0.0
      %2932 = vmatpush1.msra.mxu0 %v2864
      %2933 = vmatprep.subr.mxu0 0.0
      %2934 = vmatpush2.msra.mxu0 0.0
      %2935 = vmatprep.subr.mxu0 0.0
      %2936 = vmatpush2.msra.mxu0 0.0
      %2937 = vmatprep.subr.mxu0 0.0
      %2938 = vmatpush2.msra.mxu0 0.0
      %2939 = vmatprep.subr.mxu0 0.0
      %2940 = vmatpush2.msra.mxu0 0.0
      %2941 = vmatprep.subr.mxu0 0.0
      %2942 = vmatpush2.msra.mxu0 0.0
      %2943 = vmatprep.subr.mxu0 0.0
      %2944 = vmatpush2.msra.mxu0 0.0
      %2945 = vmatprep.subr.mxu0 0.0
      %2946 = vmatpush2.msra.mxu0 0.0
      %2947 = vmatprep.subr.mxu0 0.0
      %2948 = vmatpush2.msra.mxu0 0.0
      %2949 = vmatprep.subr.mxu0 0.0
      %2950 = vmatpush2.msra.mxu0 0.0
      %2951 = vmatprep.subr.mxu0 0.0
      %2952 = vmatpush2.msra.mxu0 0.0
      %2953 = vmatprep.subr.mxu0 0.0
      %2954 = vmatpush2.msra.mxu0 0.0
      %2955 = vmatprep.subr.mxu0 0.0
      %2956 = vmatpush2.msra.mxu0 0.0
      %2957 = vmatprep.subr.mxu0 0.0
      %2958 = vmatpush2.msra.mxu0 0.0
      %2959 = vmatprep.subr.mxu0 0.0
      %2960 = vmatpush2.msra.mxu0 0.0
      %2961 = vmatprep.subr.mxu0 0.0
      %2962 = vmatpush2.msra.mxu0 0.0
      %2963 = vmatprep.subr.mxu0 0.0
      %2964 = vmatpush2.msra.mxu0 0.0
      %2965 = vmatprep.mubr.f32.mxu0 0.0
      %2966 = vmatmul.mubr.f32.gmra.mxu0 %v2881
      %v2967 = vpop.f32.mrf.mxu0
      %v2968 = vadd.f32 0.0, %v2967
      %v2969 = vpop.f32.mrf.mxu0
      %2970 = vmatprep.mubr.f32.mxu0 0.0
      %2971 = vmatmul.mubr.f32.gmra.mxu0 %v2884
      %v2972 = vpop.f32.mrf.mxu0
      %v2973 = vadd.f32 0.0, %v2972
      %v2974 = vpop.f32.mrf.mxu0
      %2975 = vmatprep.mubr.f32.mxu0 0.0
      %2976 = vmatmul.mubr.f32.gmra.mxu0 %v2887
      %v2977 = vpop.f32.mrf.mxu0
      %v2978 = vadd.f32 0.0, %v2977
      %v2979 = vpop.f32.mrf.mxu0
      %2980 = vmatprep.mubr.f32.mxu0 0.0
      %2981 = vmatmul.mubr.f32.gmra.mxu0 %v2890
      %v2982 = vpop.f32.mrf.mxu0
      %v2983 = vadd.f32 0.0, %v2982
      %v2984 = vpop.f32.mrf.mxu0
      %2985 = vmatprep.mubr.f32.mxu0 0.0
      %2986 = vmatmul.mubr.f32.gmra.mxu0 %v2893
      %v2987 = vpop.f32.mrf.mxu0
      %v2988 = vadd.f32 0.0, %v2987
      %v2989 = vpop.f32.mrf.mxu0
      %2990 = vmatprep.mubr.f32.mxu0 0.0
      %2991 = vmatmul.mubr.f32.gmra.mxu0 %v2896
      %v2992 = vpop.f32.mrf.mxu0
      %v2993 = vadd.f32 0.0, %v2992
      %v2994 = vpop.f32.mrf.mxu0
      %2995 = vmatprep.mubr.f32.mxu0 0.0
      %2996 = vmatmul.mubr.f32.gmra.mxu0 %v2899
      %v2997 = vpop.f32.mrf.mxu0
      %v2998 = vadd.f32 0.0, %v2997
      %v2999 = vpop.f32.mrf.mxu0
      %3000 = vdwg.mxu0
      %v3001 = vpack.c.bf16 %v2973, %v2968
      %v3002 = vpack.c.bf16 %v2983, %v2978
      %v3003 = vpack.c.bf16 %v2993, %v2988
      %v3004 = vpack.c.bf16 %v2998, %v2998
      %v3009 = vunpack.c.l.b16 %v3001
      %v3010 = vunpack.c.h.b16 %v3001
      %v3011 = vunpack.c.l.b16 %v3002
      %v3012 = vunpack.c.h.b16 %v3002
      %v3013 = vunpack.c.l.b16 %v3003
      %v3014 = vunpack.c.h.b16 %v3003
      %v3015 = vunpack.c.l.b16 %v3004
      %v3016 = vpack.c.b16 %v3009, %v3009
      %v3017 = vpack.c.b16 %v3010, %v3010
      %v3018 = vpack.c.b16 %v3011, %v3011
      %v3019 = vpack.c.b16 %v3012, %v3012
      %v3020 = vpack.c.b16 %v3013, %v3013
      %v3021 = vpack.c.b16 %v3014, %v3014
      %v3022 = vpack.c.b16 %v3015, %v3015
      %vm3030 = vcmask 519168
      %3031 = vst.msk [vmem:[%s251] sm:$0xf] %vm3030, %v3016
      %3032 = vst.msk [vmem:[%s251 + $0x4] sm:$0xf] %vm3030, %v3017
      %3033 = vst.msk [vmem:[%s251 + $0x8] sm:$0xf] %vm3030, %v3018
      %3034 = vst.msk [vmem:[%s251 + $0xc] sm:$0xf] %vm3030, %v3019
      %3035 = vst.msk [vmem:[%s251 + $0x10] sm:$0xf] %vm3030, %v3020
      %3036 = vst.msk [vmem:[%s251 + $0x14] sm:$0xf] %vm3030, %v3021
      %vm3037 = vcmask 516096
      %vm3038 = vsmask.f32 256
      %vm3039 = vmand %vm3037, %vm3038
      %v3040 = vld [vmem:[%s251 + $0x18] sm:$0x1]
      %v3041 = vsel %vm3039, %v3022, %v3040
      %3042 = vst [vmem:[%s251 + $0x18] sm:$0x1] %v3041
      %p3043 = scmp.lt.s32.totalorder %s17, 1
      %s3044 = scalar_select %p3043, %s17, 1
      %s3045 = smul.addr %s3044, 7
      %s3046 = smul.addr %s3045, 4
      %s3047 = scalar_lea.vmem %s6, %s3046
      // Predicated region
      $region45: #{vgg_dwt_forward.2} parent=43 // pred_check
        %p3048 = pneg %p166
      $region46: #{vgg_dwt_forward.2} parent=43 // pred_check_branch
        %3050 = sbr.rel (%p3048) target = $region48
      $region47: #{vgg_dwt_forward.2} parent=43 // pred_region
        _
      $region48: #{vgg_dwt_forward.2} parent=43 // pred_fallthru
        _
    $region44: #{vgg_dwt_forward.2} parent=5 // pred_fallthru
      _
    %p3051 = scmp.le.s32.totalorder 2, %s12
    // Predicated region
    $region49: #{vgg_dwt_forward.2} parent=5 // pred_check
      %p3052 = pneg %p3051
    $region50: #{vgg_dwt_forward.2} parent=5 // pred_check_branch
      %3054 = sbr.rel (%p3052) target = $region52
    $region51: #{vgg_dwt_forward.2} parent=5 // pred_region
      %s3055 = ssub.s32 %s12, 2
      // Predicated region
      $region53: #{vgg_dwt_forward.2} parent=51 // pred_check
        %p3056 = pneg %p172
      $region54: #{vgg_dwt_forward.2} parent=51 // pred_check_branch
        %3058 = sbr.rel (%p3056) target = $region56
      $region55: #{vgg_dwt_forward.2} parent=51 // pred_region
        %p3059 = scmp.lt.s32.totalorder %s18, 1
        %s3060 = scalar_select %p3059, %s18, 1
        %s3061 = smul.addr %s3060, 7
        %s3062 = smul.addr %s3061, 4
        %s3063 = scalar_lea.vmem %s6, %s3062
      $region56: #{vgg_dwt_forward.2} parent=51 // pred_fallthru
        _
    $region52: #{vgg_dwt_forward.2} parent=5 // pred_fallthru
      _
  $region6: #{vgg_dwt_forward.2} parent=0 // loop_footer
    %s16 = sadd.s32 1, %s12
  $region7: #{vgg_dwt_forward.2} parent=0 // loop_footer_branch
    %11 = sbr.rel target = $region3
  $region8: #{vgg_dwt_forward.2} parent=0 // loop_exit
    _

// kernel: vgg_dwt_forward.3
$region0: #{vgg_dwt_forward.3}
  #allocation0 [shape = 'u32[]', space=smem, size = 0x4, offset = 0x4, fixed_abs, tag = 'smem constant byte address 0x4 - core index']
  #allocation1 [shape = 'u32[144,128]{1,0:T(1,128)}', space=vmem, size = 0x12000, scoped, tag = 'internal scratch']
  %s0 = inlined_call_operand.vmem [shape: bf16[2,3136], index: 0, kind: input, shape index: {}]
  %s1 = inlined_call_operand.vmem [shape: bf16[3136,128], index: 1, kind: input, shape index: {}]
  %s2 = inlined_call_operand.vmem [shape: f32[1,128], index: 2, kind: input, shape index: {}]
  %s3 = inlined_call_operand.vmem [shape: bf16[128,128], index: 3, kind: input, shape index: {}]
  %s4 = inlined_call_operand.vmem [shape: f32[1,128], index: 4, kind: input, shape index: {}]
  %s5 = inlined_call_operand.vmem [shape: bf16[128,128], index: 5, kind: input, shape index: {}]
  %s6 = inlined_call_operand.vmem [shape: f32[1,128], index: 6, kind: input, shape index: {}]
  %s7 = inlined_call_operand.hbm [shape: f32[2,128], index: 7, kind: output, shape index: {}]
  %s8 = sld [smem:[#allocation0]]
  $region38: #{vgg_dwt_forward.3} parent=0
    _
  %s10 = ssub.s32 1, %s8
  %s11 = scalar_select 0, %s10, %s8
  $region1: #{vgg_dwt_forward.3} parent=0
    #allocation2 [shape = 'u8[1024]{0}', space=vmem, size = 0x400, scoped, tag = 'output window, operand 0, single buffered']
    #allocation3 [shape = 's32[1]{0}', space=sflag, size = 0x4, scoped, tag = 'scoped memory for vgg_dwt_forward.3']
    %12 = vsyncpa [#allocation3], 0
    // Predicated region
    $region2: #{vgg_dwt_forward.3} parent=1 // pred_check
      _
    $region3: #{vgg_dwt_forward.3} parent=1 // pred_check_branch
      %14 = sbr.rel (0) target = $region5
    $region4: #{vgg_dwt_forward.3} parent=1 // pred_region
      _
    $region5: #{vgg_dwt_forward.3} parent=1 // pred_fallthru
      _
    // Predicated region
    $region6: #{vgg_dwt_forward.3} parent=1 // pred_check
      _
    $region7: #{vgg_dwt_forward.3} parent=1 // pred_check_branch
      %16 = sbr.rel (0) target = $region9
    $region8: #{vgg_dwt_forward.3} parent=1 // pred_region
      _
    $region9: #{vgg_dwt_forward.3} parent=1 // pred_fallthru
      _
    // Predicated region
    $region10: #{vgg_dwt_forward.3} parent=1 // pred_check
      _
    $region11: #{vgg_dwt_forward.3} parent=1 // pred_check_branch
      %18 = sbr.rel (0) target = $region13
    $region12: #{vgg_dwt_forward.3} parent=1 // pred_region
      _
    $region13: #{vgg_dwt_forward.3} parent=1 // pred_fallthru
      _
    // Predicated region
    $region14: #{vgg_dwt_forward.3} parent=1 // pred_check
      _
    $region15: #{vgg_dwt_forward.3} parent=1 // pred_check_branch
      %20 = sbr.rel (0) target = $region17
    $region16: #{vgg_dwt_forward.3} parent=1 // pred_region
      _
    $region17: #{vgg_dwt_forward.3} parent=1 // pred_fallthru
      _
    // Predicated region
    $region18: #{vgg_dwt_forward.3} parent=1 // pred_check
      _
    $region19: #{vgg_dwt_forward.3} parent=1 // pred_check_branch
      %22 = sbr.rel (0) target = $region21
    $region20: #{vgg_dwt_forward.3} parent=1 // pred_region
      _
    $region21: #{vgg_dwt_forward.3} parent=1 // pred_fallthru
      _
    // Predicated region
    $region22: #{vgg_dwt_forward.3} parent=1 // pred_check
      _
    $region23: #{vgg_dwt_forward.3} parent=1 // pred_check_branch
      %24 = sbr.rel (0) target = $region25
    $region24: #{vgg_dwt_forward.3} parent=1 // pred_region
      _
    $region25: #{vgg_dwt_forward.3} parent=1 // pred_fallthru
      _
    // Predicated region
    $region26: #{vgg_dwt_forward.3} parent=1 // pred_check
      _
    $region27: #{vgg_dwt_forward.3} parent=1 // pred_check_branch
      %26 = sbr.rel (0) target = $region29
    $region28: #{vgg_dwt_forward.3} parent=1 // pred_region
      _
    $region29: #{vgg_dwt_forward.3} parent=1 // pred_fallthru
      _
    %v28 = vld [vmem:[%s0] sm:$0xff]
    %v29 = vld [vmem:[%s0 + $0x8] sm:$0xff]
    %v30 = vld [vmem:[%s0 + $0x10] sm:$0xff]
    %v31 = vld [vmem:[%s0 + $0x18] sm:$0x1]
    %v32 = vld [vmem:[%s1] sm:$0xf]
    %v33 = vld [vmem:[%s1 + $0x4] sm:$0xf]
    %v34 = vld [vmem:[%s1 + $0x8] sm:$0xf]
    %v35 = vld [vmem:[%s1 + $0xc] sm:$0xf]
    %v36 = vld [vmem:[%s1 + $0x10] sm:$0xf]
    %v37 = vld [vmem:[%s1 + $0x14] sm:$0xf]
    %v38 = vld [vmem:[%s1 + $0x18] sm:$0xf]
    %v39 = vld [vmem:[%s1 + $0x1c] sm:$0xf]
    %v40 = vld [vmem:[%s1 + $0x20] sm:$0xf]
    %v41 = vld [vmem:[%s1 + $0x24] sm:$0xf]
    %v42 = vld [vmem:[%s1 + $0x28] sm:$0xf]
    %v43 = vld [vmem:[%s1 + $0x2c] sm:$0xf]
    %v44 = vld [vmem:[%s1 + $0x30] sm:$0xf]
    %v45 = vld [vmem:[%s1 + $0x34] sm:$0xf]
    %v46 = vld [vmem:[%s1 + $0x38] sm:$0xf]
    %v47 = vld [vmem:[%s1 + $0x3c] sm:$0xf]
    %v48 = vld [vmem:[%s1 + $0x40] sm:$0xf]
    %v49 = vld [vmem:[%s1 + $0x44] sm:$0xf]
    %v50 = vld [vmem:[%s1 + $0x48] sm:$0xf]
    %v51 = vld [vmem:[%s1 + $0x4c] sm:$0xf]
    %v52 = vld [vmem:[%s1 + $0x50] sm:$0xf]
    %v53 = vld [vmem:[%s1 + $0x54] sm:$0xf]
    %v54 = vld [vmem:[%s1 + $0x58] sm:$0xf]
    %v55 = vld [vmem:[%s1 + $0x5c] sm:$0xf]
    %v56 = vld [vmem:[%s1 + $0x60] sm:$0xf]
    %v57 = vld [vmem:[%s1 + $0x64] sm:$0xf]
    %v58 = vld [vmem:[%s1 + $0x68] sm:$0xf]
    %v59 = vld [vmem:[%s1 + $0x6c] sm:$0xf]
    %v60 = vld [vmem:[%s1 + $0x70] sm:$0xf]
    %v61 = vld [vmem:[%s1 + $0x74] sm:$0xf]
    %v62 = vld [vmem:[%s1 + $0x78] sm:$0xf]
    %v63 = vld [vmem:[%s1 + $0x7c] sm:$0xf]
    %v64 = vld [vmem:[%s1 + $0x80] sm:$0xf]
    %v65 = vld [vmem:[%s1 + $0x84] sm:$0xf]
    %v66 = vld [vmem:[%s1 + $0x88] sm:$0xf]
    %v67 = vld [vmem:[%s1 + $0x8c] sm:$0xf]
    %v68 = vld [vmem:[%s1 + $0x90] sm:$0xf]
    %v69 = vld [vmem:[%s1 + $0x94] sm:$0xf]
    %v70 = vld [vmem:[%s1 + $0x98] sm:$0xf]
    %v71 = vld [vmem:[%s1 + $0x9c] sm:$0xf]
    %v72 = vld [vmem:[%s1 + $0xa0] sm:$0xf]
    %v73 = vld [vmem:[%s1 + $0xa4] sm:$0xf]
    %v74 = vld [vmem:[%s1 + $0xa8] sm:$0xf]
    %v75 = vld [vmem:[%s1 + $0xac] sm:$0xf]
    %v76 = vld [vmem:[%s1 + $0xb0] sm:$0xf]
    %v77 = vld [vmem:[%s1 + $0xb4] sm:$0xf]
    %v78 = vld [vmem:[%s1 + $0xb8] sm:$0xf]
    %v79 = vld [vmem:[%s1 + $0xbc] sm:$0xf]
    %v80 = vld [vmem:[%s1 + $0xc0] sm:$0xf]
    %v81 = vld [vmem:[%s1 + $0xc4] sm:$0xf]
    %v82 = vld [vmem:[%s1 + $0xc8] sm:$0xf]
    %v83 = vld [vmem:[%s1 + $0xcc] sm:$0xf]
    %v84 = vld [vmem:[%s1 + $0xd0] sm:$0xf]
    %v85 = vld [vmem:[%s1 + $0xd4] sm:$0xf]
    %v86 = vld [vmem:[%s1 + $0xd8] sm:$0xf]
    %v87 = vld [vmem:[%s1 + $0xdc] sm:$0xf]
    %v88 = vld [vmem:[%s1 + $0xe0] sm:$0xf]
    %v89 = vld [vmem:[%s1 + $0xe4] sm:$0xf]
    %v90 = vld [vmem:[%s1 + $0xe8] sm:$0xf]
    %v91 = vld [vmem:[%s1 + $0xec] sm:$0xf]
    %v92 = vld [vmem:[%s1 + $0xf0] sm:$0xf]
    %v93 = vld [vmem:[%s1 + $0xf4] sm:$0xf]
    %v94 = vld [vmem:[%s1 + $0xf8] sm:$0xf]
    %v95 = vld [vmem:[%s1 + $0xfc] sm:$0xf]
    %v96 = vld [vmem:[%s1 + $0x100] sm:$0xf]
    %v97 = vld [vmem:[%s1 + $0x104] sm:$0xf]
    %v98 = vld [vmem:[%s1 + $0x108] sm:$0xf]
    %v99 = vld [vmem:[%s1 + $0x10c] sm:$0xf]
    %v100 = vld [vmem:[%s1 + $0x110] sm:$0xf]
    %v101 = vld [vmem:[%s1 + $0x114] sm:$0xf]
    %v102 = vld [vmem:[%s1 + $0x118] sm:$0xf]
    %v103 = vld [vmem:[%s1 + $0x11c] sm:$0xf]
    %v104 = vld [vmem:[%s1 + $0x120] sm:$0xf]
    %v105 = vld [vmem:[%s1 + $0x124] sm:$0xf]
    %v106 = vld [vmem:[%s1 + $0x128] sm:$0xf]
    %v107 = vld [vmem:[%s1 + $0x12c] sm:$0xf]
    %v108 = vld [vmem:[%s1 + $0x130] sm:$0xf]
    %v109 = vld [vmem:[%s1 + $0x134] sm:$0xf]
    %v110 = vld [vmem:[%s1 + $0x138] sm:$0xf]
    %v111 = vld [vmem:[%s1 + $0x13c] sm:$0xf]
    %v112 = vld [vmem:[%s1 + $0x140] sm:$0xf]
    %v113 = vld [vmem:[%s1 + $0x144] sm:$0xf]
    %v114 = vld [vmem:[%s1 + $0x148] sm:$0xf]
    %v115 = vld [vmem:[%s1 + $0x14c] sm:$0xf]
    %v116 = vld [vmem:[%s1 + $0x150] sm:$0xf]
    %v117 = vld [vmem:[%s1 + $0x154] sm:$0xf]
    %v118 = vld [vmem:[%s1 + $0x158] sm:$0xf]
    %v119 = vld [vmem:[%s1 + $0x15c] sm:$0xf]
    %v120 = vld [vmem:[%s1 + $0x160] sm:$0xf]
    %v121 = vld [vmem:[%s1 + $0x164] sm:$0xf]
    %v122 = vld [vmem:[%s1 + $0x168] sm:$0xf]
    %v123 = vld [vmem:[%s1 + $0x16c] sm:$0xf]
    %v124 = vld [vmem:[%s1 + $0x170] sm:$0xf]
    %v125 = vld [vmem:[%s1 + $0x174] sm:$0xf]
    %v126 = vld [vmem:[%s1 + $0x178] sm:$0xf]
    %v127 = vld [vmem:[%s1 + $0x17c] sm:$0xf]
    %v128 = vld [vmem:[%s1 + $0x180] sm:$0xf]
    %v129 = vld [vmem:[%s1 + $0x184] sm:$0xf]
    %v130 = vld [vmem:[%s1 + $0x188] sm:$0xf]
    %v131 = vld [vmem:[%s1 + $0x18c] sm:$0xf]
    %v132 = vld [vmem:[%s1 + $0x190] sm:$0xf]
    %v133 = vld [vmem:[%s1 + $0x194] sm:$0xf]
    %v134 = vld [vmem:[%s1 + $0x198] sm:$0xf]
    %v135 = vld [vmem:[%s1 + $0x19c] sm:$0xf]
    %v136 = vld [vmem:[%s1 + $0x1a0] sm:$0xf]
    %v137 = vld [vmem:[%s1 + $0x1a4] sm:$0xf]
    %v138 = vld [vmem:[%s1 + $0x1a8] sm:$0xf]
    %v139 = vld [vmem:[%s1 + $0x1ac] sm:$0xf]
    %v140 = vld [vmem:[%s1 + $0x1b0] sm:$0xf]
    %v141 = vld [vmem:[%s1 + $0x1b4] sm:$0xf]
    %v142 = vld [vmem:[%s1 + $0x1b8] sm:$0xf]
    %v143 = vld [vmem:[%s1 + $0x1bc] sm:$0xf]
    %v144 = vld [vmem:[%s1 + $0x1c0] sm:$0xf]
    %v145 = vld [vmem:[%s1 + $0x1c4] sm:$0xf]
    %v146 = vld [vmem:[%s1 + $0x1c8] sm:$0xf]
    %v147 = vld [vmem:[%s1 + $0x1cc] sm:$0xf]
    %v148 = vld [vmem:[%s1 + $0x1d0] sm:$0xf]
    %v149 = vld [vmem:[%s1 + $0x1d4] sm:$0xf]
    %v150 = vld [vmem:[%s1 + $0x1d8] sm:$0xf]
    %v151 = vld [vmem:[%s1 + $0x1dc] sm:$0xf]
    %v152 = vld [vmem:[%s1 + $0x1e0] sm:$0xf]
    %v153 = vld [vmem:[%s1 + $0x1e4] sm:$0xf]
    %v154 = vld [vmem:[%s1 + $0x1e8] sm:$0xf]
    %v155 = vld [vmem:[%s1 + $0x1ec] sm:$0xf]
    %v156 = vld [vmem:[%s1 + $0x1f0] sm:$0xf]
    %v157 = vld [vmem:[%s1 + $0x1f4] sm:$0xf]
    %v158 = vld [vmem:[%s1 + $0x1f8] sm:$0xf]
    %v159 = vld [vmem:[%s1 + $0x1fc] sm:$0xf]
    %v160 = vld [vmem:[%s1 + $0x200] sm:$0xf]
    %v161 = vld [vmem:[%s1 + $0x204] sm:$0xf]
    %v162 = vld [vmem:[%s1 + $0x208] sm:$0xf]
    %v163 = vld [vmem:[%s1 + $0x20c] sm:$0xf]
    %v164 = vld [vmem:[%s1 + $0x210] sm:$0xf]
    %v165 = vld [vmem:[%s1 + $0x214] sm:$0xf]
    %v166 = vld [vmem:[%s1 + $0x218] sm:$0xf]
    %v167 = vld [vmem:[%s1 + $0x21c] sm:$0xf]
    %v168 = vld [vmem:[%s1 + $0x220] sm:$0xf]
    %v169 = vld [vmem:[%s1 + $0x224] sm:$0xf]
    %v170 = vld [vmem:[%s1 + $0x228] sm:$0xf]
    %v171 = vld [vmem:[%s1 + $0x22c] sm:$0xf]
    %v172 = vld [vmem:[%s1 + $0x230] sm:$0xf]
    %v173 = vld [vmem:[%s1 + $0x234] sm:$0xf]
    %v174 = vld [vmem:[%s1 + $0x238] sm:$0xf]
    %v175 = vld [vmem:[%s1 + $0x23c] sm:$0xf]
    %v176 = vld [vmem:[%s1 + $0x240] sm:$0xf]
    %v177 = vld [vmem:[%s1 + $0x244] sm:$0xf]
    %v178 = vld [vmem:[%s1 + $0x248] sm:$0xf]
    %v179 = vld [vmem:[%s1 + $0x24c] sm:$0xf]
    %v180 = vld [vmem:[%s1 + $0x250] sm:$0xf]
    %v181 = vld [vmem:[%s1 + $0x254] sm:$0xf]
    %v182 = vld [vmem:[%s1 + $0x258] sm:$0xf]
    %v183 = vld [vmem:[%s1 + $0x25c] sm:$0xf]
    %v184 = vld [vmem:[%s1 + $0x260] sm:$0xf]
    %v185 = vld [vmem:[%s1 + $0x264] sm:$0xf]
    %v186 = vld [vmem:[%s1 + $0x268] sm:$0xf]
    %v187 = vld [vmem:[%s1 + $0x26c] sm:$0xf]
    %v188 = vld [vmem:[%s1 + $0x270] sm:$0xf]
    %v189 = vld [vmem:[%s1 + $0x274] sm:$0xf]
    %v190 = vld [vmem:[%s1 + $0x278] sm:$0xf]
    %v191 = vld [vmem:[%s1 + $0x27c] sm:$0xf]
    %v192 = vld [vmem:[%s1 + $0x280] sm:$0xf]
    %v193 = vld [vmem:[%s1 + $0x284] sm:$0xf]
    %v194 = vld [vmem:[%s1 + $0x288] sm:$0xf]
    %v195 = vld [vmem:[%s1 + $0x28c] sm:$0xf]
    %v196 = vld [vmem:[%s1 + $0x290] sm:$0xf]
    %v197 = vld [vmem:[%s1 + $0x294] sm:$0xf]
    %v198 = vld [vmem:[%s1 + $0x298] sm:$0xf]
    %v199 = vld [vmem:[%s1 + $0x29c] sm:$0xf]
    %v200 = vld [vmem:[%s1 + $0x2a0] sm:$0xf]
    %v201 = vld [vmem:[%s1 + $0x2a4] sm:$0xf]
    %v202 = vld [vmem:[%s1 + $0x2a8] sm:$0xf]
    %v203 = vld [vmem:[%s1 + $0x2ac] sm:$0xf]
    %v204 = vld [vmem:[%s1 + $0x2b0] sm:$0xf]
    %v205 = vld [vmem:[%s1 + $0x2b4] sm:$0xf]
    %v206 = vld [vmem:[%s1 + $0x2b8] sm:$0xf]
    %v207 = vld [vmem:[%s1 + $0x2bc] sm:$0xf]
    %v208 = vld [vmem:[%s1 + $0x2c0] sm:$0xf]
    %v209 = vld [vmem:[%s1 + $0x2c4] sm:$0xf]
    %v210 = vld [vmem:[%s1 + $0x2c8] sm:$0xf]
    %v211 = vld [vmem:[%s1 + $0x2cc] sm:$0xf]
    %v212 = vld [vmem:[%s1 + $0x2d0] sm:$0xf]
    %v213 = vld [vmem:[%s1 + $0x2d4] sm:$0xf]
    %v214 = vld [vmem:[%s1 + $0x2d8] sm:$0xf]
    %v215 = vld [vmem:[%s1 + $0x2dc] sm:$0xf]
    %v216 = vld [vmem:[%s1 + $0x2e0] sm:$0xf]
    %v217 = vld [vmem:[%s1 + $0x2e4] sm:$0xf]
    %v218 = vld [vmem:[%s1 + $0x2e8] sm:$0xf]
    %v219 = vld [vmem:[%s1 + $0x2ec] sm:$0xf]
    %v220 = vld [vmem:[%s1 + $0x2f0] sm:$0xf]
    %v221 = vld [vmem:[%s1 + $0x2f4] sm:$0xf]
    %v222 = vld [vmem:[%s1 + $0x2f8] sm:$0xf]
    %v223 = vld [vmem:[%s1 + $0x2fc] sm:$0xf]
    %v224 = vld [vmem:[%s1 + $0x300] sm:$0xf]
    %v225 = vld [vmem:[%s1 + $0x304] sm:$0xf]
    %v226 = vld [vmem:[%s1 + $0x308] sm:$0xf]
    %v227 = vld [vmem:[%s1 + $0x30c] sm:$0xf]
    %v228 = vld [vmem:[%s1 + $0x310] sm:$0xf]
    %v229 = vld [vmem:[%s1 + $0x314] sm:$0xf]
    %v230 = vld [vmem:[%s1 + $0x318] sm:$0xf]
    %v231 = vld [vmem:[%s1 + $0x31c] sm:$0xf]
    %v232 = vld [vmem:[%s1 + $0x320] sm:$0xf]
    %v233 = vld [vmem:[%s1 + $0x324] sm:$0xf]
    %v234 = vld [vmem:[%s1 + $0x328] sm:$0xf]
    %v235 = vld [vmem:[%s1 + $0x32c] sm:$0xf]
    %v236 = vld [vmem:[%s1 + $0x330] sm:$0xf]
    %v237 = vld [vmem:[%s1 + $0x334] sm:$0xf]
    %v238 = vld [vmem:[%s1 + $0x338] sm:$0xf]
    %v239 = vld [vmem:[%s1 + $0x33c] sm:$0xf]
    %v240 = vld [vmem:[%s1 + $0x340] sm:$0xf]
    %v241 = vld [vmem:[%s1 + $0x344] sm:$0xf]
    %v242 = vld [vmem:[%s1 + $0x348] sm:$0xf]
    %v243 = vld [vmem:[%s1 + $0x34c] sm:$0xf]
    %v244 = vld [vmem:[%s1 + $0x350] sm:$0xf]
    %v245 = vld [vmem:[%s1 + $0x354] sm:$0xf]
    %v246 = vld [vmem:[%s1 + $0x358] sm:$0xf]
    %v247 = vld [vmem:[%s1 + $0x35c] sm:$0xf]
    %v248 = vld [vmem:[%s1 + $0x360] sm:$0xf]
    %v249 = vld [vmem:[%s1 + $0x364] sm:$0xf]
    %v250 = vld [vmem:[%s1 + $0x368] sm:$0xf]
    %v251 = vld [vmem:[%s1 + $0x36c] sm:$0xf]
    %v252 = vld [vmem:[%s1 + $0x370] sm:$0xf]
    %v253 = vld [vmem:[%s1 + $0x374] sm:$0xf]
    %v254 = vld [vmem:[%s1 + $0x378] sm:$0xf]
    %v255 = vld [vmem:[%s1 + $0x37c] sm:$0xf]
    %v256 = vld [vmem:[%s1 + $0x380] sm:$0xf]
    %v257 = vld [vmem:[%s1 + $0x384] sm:$0xf]
    %v258 = vld [vmem:[%s1 + $0x388] sm:$0xf]
    %v259 = vld [vmem:[%s1 + $0x38c] sm:$0xf]
    %v260 = vld [vmem:[%s1 + $0x390] sm:$0xf]
    %v261 = vld [vmem:[%s1 + $0x394] sm:$0xf]
    %v262 = vld [vmem:[%s1 + $0x398] sm:$0xf]
    %v263 = vld [vmem:[%s1 + $0x39c] sm:$0xf]
    %v264 = vld [vmem:[%s1 + $0x3a0] sm:$0xf]
    %v265 = vld [vmem:[%s1 + $0x3a4] sm:$0xf]
    %v266 = vld [vmem:[%s1 + $0x3a8] sm:$0xf]
    %v267 = vld [vmem:[%s1 + $0x3ac] sm:$0xf]
    %v268 = vld [vmem:[%s1 + $0x3b0] sm:$0xf]
    %v269 = vld [vmem:[%s1 + $0x3b4] sm:$0xf]
    %v270 = vld [vmem:[%s1 + $0x3b8] sm:$0xf]
    %v271 = vld [vmem:[%s1 + $0x3bc] sm:$0xf]
    %v272 = vld [vmem:[%s1 + $0x3c0] sm:$0xf]
    %v273 = vld [vmem:[%s1 + $0x3c4] sm:$0xf]
    %v274 = vld [vmem:[%s1 + $0x3c8] sm:$0xf]
    %v275 = vld [vmem:[%s1 + $0x3cc] sm:$0xf]
    %v276 = vld [vmem:[%s1 + $0x3d0] sm:$0xf]
    %v277 = vld [vmem:[%s1 + $0x3d4] sm:$0xf]
    %v278 = vld [vmem:[%s1 + $0x3d8] sm:$0xf]
    %v279 = vld [vmem:[%s1 + $0x3dc] sm:$0xf]
    %v280 = vld [vmem:[%s1 + $0x3e0] sm:$0xf]
    %v281 = vld [vmem:[%s1 + $0x3e4] sm:$0xf]
    %v282 = vld [vmem:[%s1 + $0x3e8] sm:$0xf]
    %v283 = vld [vmem:[%s1 + $0x3ec] sm:$0xf]
    %v284 = vld [vmem:[%s1 + $0x3f0] sm:$0xf]
    %v285 = vld [vmem:[%s1 + $0x3f4] sm:$0xf]
    %v286 = vld [vmem:[%s1 + $0x3f8] sm:$0xf]
    %v287 = vld [vmem:[%s1 + $0x3fc] sm:$0xf]
    %v288 = vld [vmem:[%s1 + $0x400] sm:$0xf]
    %v289 = vld [vmem:[%s1 + $0x404] sm:$0xf]
    %v290 = vld [vmem:[%s1 + $0x408] sm:$0xf]
    %v291 = vld [vmem:[%s1 + $0x40c] sm:$0xf]
    %v292 = vld [vmem:[%s1 + $0x410] sm:$0xf]
    %v293 = vld [vmem:[%s1 + $0x414] sm:$0xf]
    %v294 = vld [vmem:[%s1 + $0x418] sm:$0xf]
    %v295 = vld [vmem:[%s1 + $0x41c] sm:$0xf]
    %v296 = vld [vmem:[%s1 + $0x420] sm:$0xf]
    %v297 = vld [vmem:[%s1 + $0x424] sm:$0xf]
    %v298 = vld [vmem:[%s1 + $0x428] sm:$0xf]
    %v299 = vld [vmem:[%s1 + $0x42c] sm:$0xf]
    %v300 = vld [vmem:[%s1 + $0x430] sm:$0xf]
    %v301 = vld [vmem:[%s1 + $0x434] sm:$0xf]
    %v302 = vld [vmem:[%s1 + $0x438] sm:$0xf]
    %v303 = vld [vmem:[%s1 + $0x43c] sm:$0xf]
    %v304 = vld [vmem:[%s1 + $0x440] sm:$0xf]
    %v305 = vld [vmem:[%s1 + $0x444] sm:$0xf]
    %v306 = vld [vmem:[%s1 + $0x448] sm:$0xf]
    %v307 = vld [vmem:[%s1 + $0x44c] sm:$0xf]
    %v308 = vld [vmem:[%s1 + $0x450] sm:$0xf]
    %v309 = vld [vmem:[%s1 + $0x454] sm:$0xf]
    %v310 = vld [vmem:[%s1 + $0x458] sm:$0xf]
    %v311 = vld [vmem:[%s1 + $0x45c] sm:$0xf]
    %v312 = vld [vmem:[%s1 + $0x460] sm:$0xf]
    %v313 = vld [vmem:[%s1 + $0x464] sm:$0xf]
    %v314 = vld [vmem:[%s1 + $0x468] sm:$0xf]
    %v315 = vld [vmem:[%s1 + $0x46c] sm:$0xf]
    %v316 = vld [vmem:[%s1 + $0x470] sm:$0xf]
    %v317 = vld [vmem:[%s1 + $0x474] sm:$0xf]
    %v318 = vld [vmem:[%s1 + $0x478] sm:$0xf]
    %v319 = vld [vmem:[%s1 + $0x47c] sm:$0xf]
    %v320 = vld [vmem:[%s1 + $0x480] sm:$0xf]
    %v321 = vld [vmem:[%s1 + $0x484] sm:$0xf]
    %v322 = vld [vmem:[%s1 + $0x488] sm:$0xf]
    %v323 = vld [vmem:[%s1 + $0x48c] sm:$0xf]
    %v324 = vld [vmem:[%s1 + $0x490] sm:$0xf]
    %v325 = vld [vmem:[%s1 + $0x494] sm:$0xf]
    %v326 = vld [vmem:[%s1 + $0x498] sm:$0xf]
    %v327 = vld [vmem:[%s1 + $0x49c] sm:$0xf]
    %v328 = vld [vmem:[%s1 + $0x4a0] sm:$0xf]
    %v329 = vld [vmem:[%s1 + $0x4a4] sm:$0xf]
    %v330 = vld [vmem:[%s1 + $0x4a8] sm:$0xf]
    %v331 = vld [vmem:[%s1 + $0x4ac] sm:$0xf]
    %v332 = vld [vmem:[%s1 + $0x4b0] sm:$0xf]
    %v333 = vld [vmem:[%s1 + $0x4b4] sm:$0xf]
    %v334 = vld [vmem:[%s1 + $0x4b8] sm:$0xf]
    %v335 = vld [vmem:[%s1 + $0x4bc] sm:$0xf]
    %v336 = vld [vmem:[%s1 + $0x4c0] sm:$0xf]
    %v337 = vld [vmem:[%s1 + $0x4c4] sm:$0xf]
    %v338 = vld [vmem:[%s1 + $0x4c8] sm:$0xf]
    %v339 = vld [vmem:[%s1 + $0x4cc] sm:$0xf]
    %v340 = vld [vmem:[%s1 + $0x4d0] sm:$0xf]
    %v341 = vld [vmem:[%s1 + $0x4d4] sm:$0xf]
    %v342 = vld [vmem:[%s1 + $0x4d8] sm:$0xf]
    %v343 = vld [vmem:[%s1 + $0x4dc] sm:$0xf]
    %v344 = vld [vmem:[%s1 + $0x4e0] sm:$0xf]
    %v345 = vld [vmem:[%s1 + $0x4e4] sm:$0xf]
    %v346 = vld [vmem:[%s1 + $0x4e8] sm:$0xf]
    %v347 = vld [vmem:[%s1 + $0x4ec] sm:$0xf]
    %v348 = vld [vmem:[%s1 + $0x4f0] sm:$0xf]
    %v349 = vld [vmem:[%s1 + $0x4f4] sm:$0xf]
    %v350 = vld [vmem:[%s1 + $0x4f8] sm:$0xf]
    %v351 = vld [vmem:[%s1 + $0x4fc] sm:$0xf]
    %v352 = vld [vmem:[%s1 + $0x500] sm:$0xf]
    %v353 = vld [vmem:[%s1 + $0x504] sm:$0xf]
    %v354 = vld [vmem:[%s1 + $0x508] sm:$0xf]
    %v355 = vld [vmem:[%s1 + $0x50c] sm:$0xf]
    %v356 = vld [vmem:[%s1 + $0x510] sm:$0xf]
    %v357 = vld [vmem:[%s1 + $0x514] sm:$0xf]
    %v358 = vld [vmem:[%s1 + $0x518] sm:$0xf]
    %v359 = vld [vmem:[%s1 + $0x51c] sm:$0xf]
    %v360 = vld [vmem:[%s1 + $0x520] sm:$0xf]
    %v361 = vld [vmem:[%s1 + $0x524] sm:$0xf]
    %v362 = vld [vmem:[%s1 + $0x528] sm:$0xf]
    %v363 = vld [vmem:[%s1 + $0x52c] sm:$0xf]
    %v364 = vld [vmem:[%s1 + $0x530] sm:$0xf]
    %v365 = vld [vmem:[%s1 + $0x534] sm:$0xf]
    %v366 = vld [vmem:[%s1 + $0x538] sm:$0xf]
    %v367 = vld [vmem:[%s1 + $0x53c] sm:$0xf]
    %v368 = vld [vmem:[%s1 + $0x540] sm:$0xf]
    %v369 = vld [vmem:[%s1 + $0x544] sm:$0xf]
    %v370 = vld [vmem:[%s1 + $0x548] sm:$0xf]
    %v371 = vld [vmem:[%s1 + $0x54c] sm:$0xf]
    %v372 = vld [vmem:[%s1 + $0x550] sm:$0xf]
    %v373 = vld [vmem:[%s1 + $0x554] sm:$0xf]
    %v374 = vld [vmem:[%s1 + $0x558] sm:$0xf]
    %v375 = vld [vmem:[%s1 + $0x55c] sm:$0xf]
    %v376 = vld [vmem:[%s1 + $0x560] sm:$0xf]
    %v377 = vld [vmem:[%s1 + $0x564] sm:$0xf]
    %v378 = vld [vmem:[%s1 + $0x568] sm:$0xf]
    %v379 = vld [vmem:[%s1 + $0x56c] sm:$0xf]
    %v380 = vld [vmem:[%s1 + $0x570] sm:$0xf]
    %v381 = vld [vmem:[%s1 + $0x574] sm:$0xf]
    %v382 = vld [vmem:[%s1 + $0x578] sm:$0xf]
    %v383 = vld [vmem:[%s1 + $0x57c] sm:$0xf]
    %v384 = vld [vmem:[%s1 + $0x580] sm:$0xf]
    %v385 = vld [vmem:[%s1 + $0x584] sm:$0xf]
    %v386 = vld [vmem:[%s1 + $0x588] sm:$0xf]
    %v387 = vld [vmem:[%s1 + $0x58c] sm:$0xf]
    %v388 = vld [vmem:[%s1 + $0x590] sm:$0xf]
    %v389 = vld [vmem:[%s1 + $0x594] sm:$0xf]
    %v390 = vld [vmem:[%s1 + $0x598] sm:$0xf]
    %v391 = vld [vmem:[%s1 + $0x59c] sm:$0xf]
    %v392 = vld [vmem:[%s1 + $0x5a0] sm:$0xf]
    %v393 = vld [vmem:[%s1 + $0x5a4] sm:$0xf]
    %v394 = vld [vmem:[%s1 + $0x5a8] sm:$0xf]
    %v395 = vld [vmem:[%s1 + $0x5ac] sm:$0xf]
    %v396 = vld [vmem:[%s1 + $0x5b0] sm:$0xf]
    %v397 = vld [vmem:[%s1 + $0x5b4] sm:$0xf]
    %v398 = vld [vmem:[%s1 + $0x5b8] sm:$0xf]
    %v399 = vld [vmem:[%s1 + $0x5bc] sm:$0xf]
    %v400 = vld [vmem:[%s1 + $0x5c0] sm:$0xf]
    %v401 = vld [vmem:[%s1 + $0x5c4] sm:$0xf]
    %v402 = vld [vmem:[%s1 + $0x5c8] sm:$0xf]
    %v403 = vld [vmem:[%s1 + $0x5cc] sm:$0xf]
    %v404 = vld [vmem:[%s1 + $0x5d0] sm:$0xf]
    %v405 = vld [vmem:[%s1 + $0x5d4] sm:$0xf]
    %v406 = vld [vmem:[%s1 + $0x5d8] sm:$0xf]
    %v407 = vld [vmem:[%s1 + $0x5dc] sm:$0xf]
    %v408 = vld [vmem:[%s1 + $0x5e0] sm:$0xf]
    %v409 = vld [vmem:[%s1 + $0x5e4] sm:$0xf]
    %v410 = vld [vmem:[%s1 + $0x5e8] sm:$0xf]
    %v411 = vld [vmem:[%s1 + $0x5ec] sm:$0xf]
    %v412 = vld [vmem:[%s1 + $0x5f0] sm:$0xf]
    %v413 = vld [vmem:[%s1 + $0x5f4] sm:$0xf]
    %v414 = vld [vmem:[%s1 + $0x5f8] sm:$0xf]
    %v415 = vld [vmem:[%s1 + $0x5fc] sm:$0xf]
    %v416 = vld [vmem:[%s1 + $0x600] sm:$0xf]
    %v417 = vld [vmem:[%s1 + $0x604] sm:$0xf]
    %v418 = vld [vmem:[%s1 + $0x608] sm:$0xf]
    %v419 = vld [vmem:[%s1 + $0x60c] sm:$0xf]
    %v420 = vld [vmem:[%s1 + $0x610] sm:$0xf]
    %v421 = vld [vmem:[%s1 + $0x614] sm:$0xf]
    %v422 = vld [vmem:[%s1 + $0x618] sm:$0xf]
    %v423 = vld [vmem:[%s1 + $0x61c] sm:$0xf]
    %v424 = vld [vmem:[%s2] sm:$0x1]
    %v426 = vlaneseq
    %v427 = vshrl.u32 %v426, 7
    %v428 = vsub.s32 0, %v427
    %v429 = vrot.slane %v424, %v428
    %v435 = vcombine.high %v28, %v28
    %v437 = vunpack.c.l.s4 1966171168
    %v438 = vunpack.c.0.s8 %v437
    %v439 = vlaneseq
    %v440 = vshrl.u32 %v439, 7
    %v441 = vsub.s32 %v438, %v440
    %v442 = vrot.slane %v28, %v441
    %v444 = vunpack.c.l.s4 1966171168
    %v445 = vunpack.c.0.s8 %v444
    %v446 = vlaneseq
    %v447 = vshrl.u32 %v446, 7
    %v448 = vsub.s32 %v445, %v447
    %v449 = vrot.slane %v435, %v448
    %v450 = vcombine.high %v442, %v442
    %v451 = vcombine.high %v449, %v449
    %v453 = vunpack.c.l.s4 1966171168
    %v454 = vunpack.c.0.s8 %v453
    %v455 = vlaneseq
    %v456 = vshrl.u32 %v455, 7
    %v457 = vsub.s32 %v454, %v456
    %v458 = vrot.slane %v442, %v457
    %v460 = vunpack.c.l.s4 1966171168
    %v461 = vunpack.c.0.s8 %v460
    %v462 = vlaneseq
    %v463 = vshrl.u32 %v462, 7
    %v464 = vsub.s32 %v461, %v463
    %v465 = vrot.slane %v449, %v464
    %v467 = vunpack.c.l.s4 1966171168
    %v468 = vunpack.c.0.s8 %v467
    %v469 = vlaneseq
    %v470 = vshrl.u32 %v469, 7
    %v471 = vsub.s32 %v468, %v470
    %v472 = vrot.slane %v450, %v471
    %v474 = vunpack.c.l.s4 1966171168
    %v475 = vunpack.c.0.s8 %v474
    %v476 = vlaneseq
    %v477 = vshrl.u32 %v476, 7
    %v478 = vsub.s32 %v475, %v477
    %v479 = vrot.slane %v451, %v478
    %v480 = vcombine.high %v458, %v458
    %v481 = vcombine.high %v465, %v465
    %v482 = vcombine.high %v472, %v472
    %v483 = vcombine.high %v479, %v479
    %v484 = vcombine.high %v29, %v29
    %v486 = vunpack.c.l.s4 1966171168
    %v487 = vunpack.c.0.s8 %v486
    %v488 = vlaneseq
    %v489 = vshrl.u32 %v488, 7
    %v490 = vsub.s32 %v487, %v489
    %v491 = vrot.slane %v29, %v490
    %v493 = vunpack.c.l.s4 1966171168
    %v494 = vunpack.c.0.s8 %v493
    %v495 = vlaneseq
    %v496 = vshrl.u32 %v495, 7
    %v497 = vsub.s32 %v494, %v496
    %v498 = vrot.slane %v484, %v497
    %v499 = vcombine.high %v491, %v491
    %v500 = vcombine.high %v498, %v498
    %v502 = vunpack.c.l.s4 1966171168
    %v503 = vunpack.c.0.s8 %v502
    %v504 = vlaneseq
    %v505 = vshrl.u32 %v504, 7
    %v506 = vsub.s32 %v503, %v505
    %v507 = vrot.slane %v491, %v506
    %v509 = vunpack.c.l.s4 1966171168
    %v510 = vunpack.c.0.s8 %v509
    %v511 = vlaneseq
    %v512 = vshrl.u32 %v511, 7
    %v513 = vsub.s32 %v510, %v512
    %v514 = vrot.slane %v498, %v513
    %v516 = vunpack.c.l.s4 1966171168
    %v517 = vunpack.c.0.s8 %v516
    %v518 = vlaneseq
    %v519 = vshrl.u32 %v518, 7
    %v520 = vsub.s32 %v517, %v519
    %v521 = vrot.slane %v499, %v520
    %v523 = vunpack.c.l.s4 1966171168
    %v524 = vunpack.c.0.s8 %v523
    %v525 = vlaneseq
    %v526 = vshrl.u32 %v525, 7
    %v527 = vsub.s32 %v524, %v526
    %v528 = vrot.slane %v500, %v527
    %v529 = vcombine.high %v507, %v507
    %v530 = vcombine.high %v514, %v514
    %v531 = vcombine.high %v521, %v521
    %v532 = vcombine.high %v528, %v528
    %v533 = vcombine.high %v30, %v30
    %v535 = vunpack.c.l.s4 1966171168
    %v536 = vunpack.c.0.s8 %v535
    %v537 = vlaneseq
    %v538 = vshrl.u32 %v537, 7
    %v539 = vsub.s32 %v536, %v538
    %v540 = vrot.slane %v30, %v539
    %v542 = vunpack.c.l.s4 1966171168
    %v543 = vunpack.c.0.s8 %v542
    %v544 = vlaneseq
    %v545 = vshrl.u32 %v544, 7
    %v546 = vsub.s32 %v543, %v545
    %v547 = vrot.slane %v533, %v546
    %v548 = vcombine.high %v540, %v540
    %v549 = vcombine.high %v547, %v547
    %v551 = vunpack.c.l.s4 1966171168
    %v552 = vunpack.c.0.s8 %v551
    %v553 = vlaneseq
    %v554 = vshrl.u32 %v553, 7
    %v555 = vsub.s32 %v552, %v554
    %v556 = vrot.slane %v540, %v555
    %v558 = vunpack.c.l.s4 1966171168
    %v559 = vunpack.c.0.s8 %v558
    %v560 = vlaneseq
    %v561 = vshrl.u32 %v560, 7
    %v562 = vsub.s32 %v559, %v561
    %v563 = vrot.slane %v547, %v562
    %v565 = vunpack.c.l.s4 1966171168
    %v566 = vunpack.c.0.s8 %v565
    %v567 = vlaneseq
    %v568 = vshrl.u32 %v567, 7
    %v569 = vsub.s32 %v566, %v568
    %v570 = vrot.slane %v548, %v569
    %v572 = vunpack.c.l.s4 1966171168
    %v573 = vunpack.c.0.s8 %v572
    %v574 = vlaneseq
    %v575 = vshrl.u32 %v574, 7
    %v576 = vsub.s32 %v573, %v575
    %v577 = vrot.slane %v549, %v576
    %v578 = vcombine.high %v556, %v556
    %v579 = vcombine.high %v563, %v563
    %v580 = vcombine.high %v570, %v570
    %v581 = vcombine.high %v577, %v577
    %v583 = vunpack.c.l.s4 1966171168
    %v584 = vunpack.c.0.s8 %v583
    %v585 = vlaneseq
    %v586 = vshrl.u32 %v585, 7
    %v587 = vsub.s32 %v584, %v586
    %v588 = vrot.slane %v31, %v587
    %v590 = vunpack.c.l.s4 1966171168
    %v591 = vunpack.c.0.s8 %v590
    %v592 = vlaneseq
    %v593 = vshrl.u32 %v592, 7
    %v594 = vsub.s32 %v591, %v593
    %v595 = vrot.slane %v588, %v594
    %v1012 = vunpack.c.l.b16 %v32
    %v1013 = vunpack.c.l.b16 %v33
    %v1014 = vunpack.c.l.b16 %v34
    %v1015 = vunpack.c.l.b16 %v35
    %v1016 = vunpack.c.l.b16 %v36
    %v1017 = vunpack.c.l.b16 %v37
    %v1018 = vunpack.c.l.b16 %v38
    %v1019 = vunpack.c.l.b16 %v39
    %v1020 = vunpack.c.l.b16 %v40
    %v1021 = vunpack.c.l.b16 %v41
    %v1022 = vunpack.c.l.b16 %v42
    %v1023 = vunpack.c.l.b16 %v43
    %v1024 = vunpack.c.l.b16 %v44
    %v1025 = vunpack.c.l.b16 %v45
    %v1026 = vunpack.c.l.b16 %v46
    %v1027 = vunpack.c.l.b16 %v47
    %v1028 = vunpack.c.l.b16 %v48
    %v1029 = vunpack.c.l.b16 %v49
    %v1030 = vunpack.c.l.b16 %v50
    %v1031 = vunpack.c.l.b16 %v51
    %v1032 = vunpack.c.l.b16 %v52
    %v1033 = vunpack.c.l.b16 %v53
    %v1034 = vunpack.c.l.b16 %v54
    %v1035 = vunpack.c.l.b16 %v55
    %v1036 = vunpack.c.l.b16 %v56
    %v1037 = vunpack.c.l.b16 %v57
    %v1038 = vunpack.c.l.b16 %v58
    %v1039 = vunpack.c.l.b16 %v59
    %v1040 = vunpack.c.l.b16 %v60
    %v1041 = vunpack.c.l.b16 %v61
    %v1042 = vunpack.c.l.b16 %v62
    %v1043 = vunpack.c.l.b16 %v63
    %v1044 = vunpack.c.l.b16 %v64
    %v1045 = vunpack.c.l.b16 %v65
    %v1046 = vunpack.c.l.b16 %v66
    %v1047 = vunpack.c.l.b16 %v67
    %v1048 = vunpack.c.l.b16 %v68
    %v1049 = vunpack.c.l.b16 %v69
    %v1050 = vunpack.c.l.b16 %v70
    %v1051 = vunpack.c.l.b16 %v71
    %v1052 = vunpack.c.l.b16 %v72
    %v1053 = vunpack.c.l.b16 %v73
    %v1054 = vunpack.c.l.b16 %v74
    %v1055 = vunpack.c.l.b16 %v75
    %v1056 = vunpack.c.l.b16 %v76
    %v1057 = vunpack.c.l.b16 %v77
    %v1058 = vunpack.c.l.b16 %v78
    %v1059 = vunpack.c.l.b16 %v79
    %v1060 = vunpack.c.l.b16 %v80
    %v1061 = vunpack.c.l.b16 %v81
    %v1062 = vunpack.c.l.b16 %v82
    %v1063 = vunpack.c.l.b16 %v83
    %v1064 = vunpack.c.l.b16 %v84
    %v1065 = vunpack.c.l.b16 %v85
    %v1066 = vunpack.c.l.b16 %v86
    %v1067 = vunpack.c.l.b16 %v87
    %v1068 = vunpack.c.l.b16 %v88
    %v1069 = vunpack.c.l.b16 %v89
    %v1070 = vunpack.c.l.b16 %v90
    %v1071 = vunpack.c.l.b16 %v91
    %v1072 = vunpack.c.l.b16 %v92
    %v1073 = vunpack.c.l.b16 %v93
    %v1074 = vunpack.c.l.b16 %v94
    %v1075 = vunpack.c.l.b16 %v95
    %v1076 = vunpack.c.l.b16 %v96
    %v1077 = vunpack.c.l.b16 %v97
    %v1078 = vunpack.c.l.b16 %v98
    %v1079 = vunpack.c.l.b16 %v99
    %v1080 = vunpack.c.l.b16 %v100
    %v1081 = vunpack.c.l.b16 %v101
    %v1082 = vunpack.c.l.b16 %v102
    %v1083 = vunpack.c.l.b16 %v103
    %v1084 = vunpack.c.l.b16 %v104
    %v1085 = vunpack.c.l.b16 %v105
    %v1086 = vunpack.c.l.b16 %v106
    %v1087 = vunpack.c.l.b16 %v107
    %v1088 = vunpack.c.l.b16 %v108
    %v1089 = vunpack.c.l.b16 %v109
    %v1090 = vunpack.c.l.b16 %v110
    %v1091 = vunpack.c.l.b16 %v111
    %v1092 = vunpack.c.l.b16 %v112
    %v1093 = vunpack.c.l.b16 %v113
    %v1094 = vunpack.c.l.b16 %v114
    %v1095 = vunpack.c.l.b16 %v115
    %v1096 = vunpack.c.l.b16 %v116
    %v1097 = vunpack.c.l.b16 %v117
    %v1098 = vunpack.c.l.b16 %v118
    %v1099 = vunpack.c.l.b16 %v119
    %v1100 = vunpack.c.l.b16 %v120
    %v1101 = vunpack.c.l.b16 %v121
    %v1102 = vunpack.c.l.b16 %v122
    %v1103 = vunpack.c.l.b16 %v123
    %v1104 = vunpack.c.l.b16 %v124
    %v1105 = vunpack.c.l.b16 %v125
    %v1106 = vunpack.c.l.b16 %v126
    %v1107 = vunpack.c.l.b16 %v127
    %v1108 = vunpack.c.l.b16 %v128
    %v1109 = vunpack.c.l.b16 %v129
    %v1110 = vunpack.c.l.b16 %v130
    %v1111 = vunpack.c.l.b16 %v131
    %v1112 = vunpack.c.l.b16 %v132
    %v1113 = vunpack.c.l.b16 %v133
    %v1114 = vunpack.c.l.b16 %v134
    %v1115 = vunpack.c.l.b16 %v135
    %v1116 = vunpack.c.l.b16 %v136
    %v1117 = vunpack.c.l.b16 %v137
    %v1118 = vunpack.c.l.b16 %v138
    %v1119 = vunpack.c.l.b16 %v139
    %v1120 = vunpack.c.l.b16 %v140
    %v1121 = vunpack.c.l.b16 %v141
    %v1122 = vunpack.c.l.b16 %v142
    %v1123 = vunpack.c.l.b16 %v143
    %v1124 = vunpack.c.l.b16 %v144
    %v1125 = vunpack.c.l.b16 %v145
    %v1126 = vunpack.c.l.b16 %v146
    %v1127 = vunpack.c.l.b16 %v147
    %v1128 = vunpack.c.l.b16 %v148
    %v1129 = vunpack.c.l.b16 %v149
    %v1130 = vunpack.c.l.b16 %v150
    %v1131 = vunpack.c.l.b16 %v151
    %v1132 = vunpack.c.l.b16 %v152
    %v1133 = vunpack.c.l.b16 %v153
    %v1134 = vunpack.c.l.b16 %v154
    %v1135 = vunpack.c.l.b16 %v155
    %v1136 = vunpack.c.l.b16 %v156
    %v1137 = vunpack.c.l.b16 %v157
    %v1138 = vunpack.c.l.b16 %v158
    %v1139 = vunpack.c.l.b16 %v159
    %v1140 = vunpack.c.l.b16 %v160
    %v1141 = vunpack.c.l.b16 %v161
    %v1142 = vunpack.c.l.b16 %v162
    %v1143 = vunpack.c.l.b16 %v163
    %v1144 = vunpack.c.l.b16 %v164
    %v1145 = vunpack.c.l.b16 %v165
    %v1146 = vunpack.c.l.b16 %v166
    %v1147 = vunpack.c.l.b16 %v167
    %v1148 = vunpack.c.l.b16 %v168
    %v1149 = vunpack.c.l.b16 %v169
    %v1150 = vunpack.c.l.b16 %v170
    %v1151 = vunpack.c.l.b16 %v171
    %v1152 = vunpack.c.l.b16 %v172
    %v1153 = vunpack.c.l.b16 %v173
    %v1154 = vunpack.c.l.b16 %v174
    %v1155 = vunpack.c.l.b16 %v175
    %v1156 = vunpack.c.l.b16 %v176
    %v1157 = vunpack.c.l.b16 %v177
    %v1158 = vunpack.c.l.b16 %v178
    %v1159 = vunpack.c.l.b16 %v179
    %v1160 = vunpack.c.l.b16 %v180
    %v1161 = vunpack.c.l.b16 %v181
    %v1162 = vunpack.c.l.b16 %v182
    %v1163 = vunpack.c.l.b16 %v183
    %v1164 = vunpack.c.l.b16 %v184
    %v1165 = vunpack.c.l.b16 %v185
    %v1166 = vunpack.c.l.b16 %v186
    %v1167 = vunpack.c.l.b16 %v187
    %v1168 = vunpack.c.l.b16 %v188
    %v1169 = vunpack.c.l.b16 %v189
    %v1170 = vunpack.c.l.b16 %v190
    %v1171 = vunpack.c.l.b16 %v191
    %v1172 = vunpack.c.l.b16 %v192
    %v1173 = vunpack.c.l.b16 %v193
    %v1174 = vunpack.c.l.b16 %v194
    %v1175 = vunpack.c.l.b16 %v195
    %v1176 = vunpack.c.l.b16 %v196
    %v1177 = vunpack.c.l.b16 %v197
    %v1178 = vunpack.c.l.b16 %v198
    %v1179 = vunpack.c.l.b16 %v199
    %v1180 = vunpack.c.l.b16 %v200
    %v1181 = vunpack.c.l.b16 %v201
    %v1182 = vunpack.c.l.b16 %v202
    %v1183 = vunpack.c.l.b16 %v203
    %v1184 = vunpack.c.l.b16 %v204
    %v1185 = vunpack.c.l.b16 %v205
    %v1186 = vunpack.c.l.b16 %v206
    %v1187 = vunpack.c.l.b16 %v207
    %v1188 = vunpack.c.l.b16 %v208
    %v1189 = vunpack.c.l.b16 %v209
    %v1190 = vunpack.c.l.b16 %v210
    %v1191 = vunpack.c.l.b16 %v211
    %v1192 = vunpack.c.l.b16 %v212
    %v1193 = vunpack.c.l.b16 %v213
    %v1194 = vunpack.c.l.b16 %v214
    %v1195 = vunpack.c.l.b16 %v215
    %v1196 = vunpack.c.l.b16 %v216
    %v1197 = vunpack.c.l.b16 %v217
    %v1198 = vunpack.c.l.b16 %v218
    %v1199 = vunpack.c.l.b16 %v219
    %v1200 = vunpack.c.l.b16 %v220
    %v1201 = vunpack.c.l.b16 %v221
    %v1202 = vunpack.c.l.b16 %v222
    %v1203 = vunpack.c.l.b16 %v223
    %v1204 = vunpack.c.l.b16 %v224
    %v1205 = vunpack.c.l.b16 %v225
    %v1206 = vunpack.c.l.b16 %v226
    %v1207 = vunpack.c.l.b16 %v227
    %v1208 = vunpack.c.l.b16 %v228
    %v1209 = vunpack.c.l.b16 %v229
    %v1210 = vunpack.c.l.b16 %v230
    %v1211 = vunpack.c.l.b16 %v231
    %v1212 = vunpack.c.l.b16 %v232
    %v1213 = vunpack.c.l.b16 %v233
    %v1214 = vunpack.c.l.b16 %v234
    %v1215 = vunpack.c.l.b16 %v235
    %v1216 = vunpack.c.l.b16 %v236
    %v1217 = vunpack.c.l.b16 %v237
    %v1218 = vunpack.c.l.b16 %v238
    %v1219 = vunpack.c.l.b16 %v239
    %v1220 = vunpack.c.l.b16 %v240
    %v1221 = vunpack.c.l.b16 %v241
    %v1222 = vunpack.c.l.b16 %v242
    %v1223 = vunpack.c.l.b16 %v243
    %v1224 = vunpack.c.l.b16 %v244
    %v1225 = vunpack.c.l.b16 %v245
    %v1226 = vunpack.c.l.b16 %v246
    %v1227 = vunpack.c.l.b16 %v247
    %v1228 = vunpack.c.l.b16 %v248
    %v1229 = vunpack.c.l.b16 %v249
    %v1230 = vunpack.c.l.b16 %v250
    %v1231 = vunpack.c.l.b16 %v251
    %v1232 = vunpack.c.l.b16 %v252
    %v1233 = vunpack.c.l.b16 %v253
    %v1234 = vunpack.c.l.b16 %v254
    %v1235 = vunpack.c.l.b16 %v255
    %v1236 = vunpack.c.l.b16 %v256
    %v1237 = vunpack.c.l.b16 %v257
    %v1238 = vunpack.c.l.b16 %v258
    %v1239 = vunpack.c.l.b16 %v259
    %v1240 = vunpack.c.l.b16 %v260
    %v1241 = vunpack.c.l.b16 %v261
    %v1242 = vunpack.c.l.b16 %v262
    %v1243 = vunpack.c.l.b16 %v263
    %v1244 = vunpack.c.l.b16 %v264
    %v1245 = vunpack.c.l.b16 %v265
    %v1246 = vunpack.c.l.b16 %v266
    %v1247 = vunpack.c.l.b16 %v267
    %v1248 = vunpack.c.l.b16 %v268
    %v1249 = vunpack.c.l.b16 %v269
    %v1250 = vunpack.c.l.b16 %v270
    %v1251 = vunpack.c.l.b16 %v271
    %v1252 = vunpack.c.l.b16 %v272
    %v1253 = vunpack.c.l.b16 %v273
    %v1254 = vunpack.c.l.b16 %v274
    %v1255 = vunpack.c.l.b16 %v275
    %v1256 = vunpack.c.l.b16 %v276
    %v1257 = vunpack.c.l.b16 %v277
    %v1258 = vunpack.c.l.b16 %v278
    %v1259 = vunpack.c.l.b16 %v279
    %v1260 = vunpack.c.l.b16 %v280
    %v1261 = vunpack.c.l.b16 %v281
    %v1262 = vunpack.c.l.b16 %v282
    %v1263 = vunpack.c.l.b16 %v283
    %v1264 = vunpack.c.l.b16 %v284
    %v1265 = vunpack.c.l.b16 %v285
    %v1266 = vunpack.c.l.b16 %v286
    %v1267 = vunpack.c.l.b16 %v287
    %v1268 = vunpack.c.l.b16 %v288
    %v1269 = vunpack.c.l.b16 %v289
    %v1270 = vunpack.c.l.b16 %v290
    %v1271 = vunpack.c.l.b16 %v291
    %v1272 = vunpack.c.l.b16 %v292
    %v1273 = vunpack.c.l.b16 %v293
    %v1274 = vunpack.c.l.b16 %v294
    %v1275 = vunpack.c.l.b16 %v295
    %v1276 = vunpack.c.l.b16 %v296
    %v1277 = vunpack.c.l.b16 %v297
    %v1278 = vunpack.c.l.b16 %v298
    %v1279 = vunpack.c.l.b16 %v299
    %v1280 = vunpack.c.l.b16 %v300
    %v1281 = vunpack.c.l.b16 %v301
    %v1282 = vunpack.c.l.b16 %v302
    %v1283 = vunpack.c.l.b16 %v303
    %v1284 = vunpack.c.l.b16 %v304
    %v1285 = vunpack.c.l.b16 %v305
    %v1286 = vunpack.c.l.b16 %v306
    %v1287 = vunpack.c.l.b16 %v307
    %v1288 = vunpack.c.l.b16 %v308
    %v1289 = vunpack.c.l.b16 %v309
    %v1290 = vunpack.c.l.b16 %v310
    %v1291 = vunpack.c.l.b16 %v311
    %v1292 = vunpack.c.l.b16 %v312
    %v1293 = vunpack.c.l.b16 %v313
    %v1294 = vunpack.c.l.b16 %v314
    %v1295 = vunpack.c.l.b16 %v315
    %v1296 = vunpack.c.l.b16 %v316
    %v1297 = vunpack.c.l.b16 %v317
    %v1298 = vunpack.c.l.b16 %v318
    %v1299 = vunpack.c.l.b16 %v319
    %v1300 = vunpack.c.l.b16 %v320
    %v1301 = vunpack.c.l.b16 %v321
    %v1302 = vunpack.c.l.b16 %v322
    %v1303 = vunpack.c.l.b16 %v323
    %v1304 = vunpack.c.l.b16 %v324
    %v1305 = vunpack.c.l.b16 %v325
    %v1306 = vunpack.c.l.b16 %v326
    %v1307 = vunpack.c.l.b16 %v327
    %v1308 = vunpack.c.l.b16 %v328
    %v1309 = vunpack.c.l.b16 %v329
    %v1310 = vunpack.c.l.b16 %v330
    %v1311 = vunpack.c.l.b16 %v331
    %v1312 = vunpack.c.l.b16 %v332
    %v1313 = vunpack.c.l.b16 %v333
    %v1314 = vunpack.c.l.b16 %v334
    %v1315 = vunpack.c.l.b16 %v335
    %v1316 = vunpack.c.l.b16 %v336
    %v1317 = vunpack.c.l.b16 %v337
    %v1318 = vunpack.c.l.b16 %v338
    %v1319 = vunpack.c.l.b16 %v339
    %v1320 = vunpack.c.l.b16 %v340
    %v1321 = vunpack.c.l.b16 %v341
    %v1322 = vunpack.c.l.b16 %v342
    %v1323 = vunpack.c.l.b16 %v343
    %v1324 = vunpack.c.l.b16 %v344
    %v1325 = vunpack.c.l.b16 %v345
    %v1326 = vunpack.c.l.b16 %v346
    %v1327 = vunpack.c.l.b16 %v347
    %v1328 = vunpack.c.l.b16 %v348
    %v1329 = vunpack.c.l.b16 %v349
    %v1330 = vunpack.c.l.b16 %v350
    %v1331 = vunpack.c.l.b16 %v351
    %v1332 = vunpack.c.l.b16 %v352
    %v1333 = vunpack.c.l.b16 %v353
    %v1334 = vunpack.c.l.b16 %v354
    %v1335 = vunpack.c.l.b16 %v355
    %v1336 = vunpack.c.l.b16 %v356
    %v1337 = vunpack.c.l.b16 %v357
    %v1338 = vunpack.c.l.b16 %v358
    %v1339 = vunpack.c.l.b16 %v359
    %v1340 = vunpack.c.l.b16 %v360
    %v1341 = vunpack.c.l.b16 %v361
    %v1342 = vunpack.c.l.b16 %v362
    %v1343 = vunpack.c.l.b16 %v363
    %v1344 = vunpack.c.l.b16 %v364
    %v1345 = vunpack.c.l.b16 %v365
    %v1346 = vunpack.c.l.b16 %v366
    %v1347 = vunpack.c.l.b16 %v367
    %v1348 = vunpack.c.l.b16 %v368
    %v1349 = vunpack.c.l.b16 %v369
    %v1350 = vunpack.c.l.b16 %v370
    %v1351 = vunpack.c.l.b16 %v371
    %v1352 = vunpack.c.l.b16 %v372
    %v1353 = vunpack.c.l.b16 %v373
    %v1354 = vunpack.c.l.b16 %v374
    %v1355 = vunpack.c.l.b16 %v375
    %v1356 = vunpack.c.l.b16 %v376
    %v1357 = vunpack.c.l.b16 %v377
    %v1358 = vunpack.c.l.b16 %v378
    %v1359 = vunpack.c.l.b16 %v379
    %v1360 = vunpack.c.l.b16 %v380
    %v1361 = vunpack.c.l.b16 %v381
    %v1362 = vunpack.c.l.b16 %v382
    %v1363 = vunpack.c.l.b16 %v383
    %v1364 = vunpack.c.l.b16 %v384
    %v1365 = vunpack.c.l.b16 %v385
    %v1366 = vunpack.c.l.b16 %v386
    %v1367 = vunpack.c.l.b16 %v387
    %v1368 = vunpack.c.l.b16 %v388
    %v1369 = vunpack.c.l.b16 %v389
    %v1370 = vunpack.c.l.b16 %v390
    %v1371 = vunpack.c.l.b16 %v391
    %v1372 = vunpack.c.l.b16 %v392
    %v1373 = vunpack.c.l.b16 %v393
    %v1374 = vunpack.c.l.b16 %v394
    %v1375 = vunpack.c.l.b16 %v395
    %v1376 = vunpack.c.l.b16 %v396
    %v1377 = vunpack.c.l.b16 %v397
    %v1378 = vunpack.c.l.b16 %v398
    %v1379 = vunpack.c.l.b16 %v399
    %v1380 = vunpack.c.l.b16 %v400
    %v1381 = vunpack.c.l.b16 %v401
    %v1382 = vunpack.c.l.b16 %v402
    %v1383 = vunpack.c.l.b16 %v403
    %v1384 = vunpack.c.l.b16 %v404
    %v1385 = vunpack.c.l.b16 %v405
    %v1386 = vunpack.c.l.b16 %v406
    %v1387 = vunpack.c.l.b16 %v407
    %v1388 = vunpack.c.l.b16 %v408
    %v1389 = vunpack.c.l.b16 %v409
    %v1390 = vunpack.c.l.b16 %v410
    %v1391 = vunpack.c.l.b16 %v411
    %v1392 = vunpack.c.l.b16 %v412
    %v1393 = vunpack.c.l.b16 %v413
    %v1394 = vunpack.c.l.b16 %v414
    %v1395 = vunpack.c.l.b16 %v415
    %v1396 = vunpack.c.l.b16 %v416
    %v1397 = vunpack.c.l.b16 %v417
    %v1398 = vunpack.c.l.b16 %v418
    %v1399 = vunpack.c.l.b16 %v419
    %v1400 = vunpack.c.l.b16 %v420
    %v1401 = vunpack.c.l.b16 %v421
    %v1402 = vunpack.c.l.b16 %v422
    %v1403 = vunpack.c.l.b16 %v423
    %v1404 = vpack.c.b16 %v1013, %v1012
    %v1405 = vpack.c.b16 %v1015, %v1014
    %v1406 = vpack.c.b16 %v1017, %v1016
    %v1407 = vpack.c.b16 %v1019, %v1018
    %v1408 = vpack.c.b16 %v1021, %v1020
    %v1409 = vpack.c.b16 %v1023, %v1022
    %v1410 = vpack.c.b16 %v1025, %v1024
    %v1411 = vpack.c.b16 %v1027, %v1026
    %v1412 = vpack.c.b16 %v1029, %v1028
    %v1413 = vpack.c.b16 %v1031, %v1030
    %v1414 = vpack.c.b16 %v1033, %v1032
    %v1415 = vpack.c.b16 %v1035, %v1034
    %v1416 = vpack.c.b16 %v1037, %v1036
    %v1417 = vpack.c.b16 %v1039, %v1038
    %v1418 = vpack.c.b16 %v1041, %v1040
    %v1419 = vpack.c.b16 %v1043, %v1042
    %v1420 = vpack.c.b16 %v1045, %v1044
    %v1421 = vpack.c.b16 %v1047, %v1046
    %v1422 = vpack.c.b16 %v1049, %v1048
    %v1423 = vpack.c.b16 %v1051, %v1050
    %v1424 = vpack.c.b16 %v1053, %v1052
    %v1425 = vpack.c.b16 %v1055, %v1054
    %v1426 = vpack.c.b16 %v1057, %v1056
    %v1427 = vpack.c.b16 %v1059, %v1058
    %v1428 = vpack.c.b16 %v1061, %v1060
    %v1429 = vpack.c.b16 %v1063, %v1062
    %v1430 = vpack.c.b16 %v1065, %v1064
    %v1431 = vpack.c.b16 %v1067, %v1066
    %v1432 = vpack.c.b16 %v1069, %v1068
    %v1433 = vpack.c.b16 %v1071, %v1070
    %v1434 = vpack.c.b16 %v1073, %v1072
    %v1435 = vpack.c.b16 %v1075, %v1074
    %v1436 = vpack.c.b16 %v1077, %v1076
    %v1437 = vpack.c.b16 %v1079, %v1078
    %v1438 = vpack.c.b16 %v1081, %v1080
    %v1439 = vpack.c.b16 %v1083, %v1082
    %v1440 = vpack.c.b16 %v1085, %v1084
    %v1441 = vpack.c.b16 %v1087, %v1086
    %v1442 = vpack.c.b16 %v1089, %v1088
    %v1443 = vpack.c.b16 %v1091, %v1090
    %v1444 = vpack.c.b16 %v1093, %v1092
    %v1445 = vpack.c.b16 %v1095, %v1094
    %v1446 = vpack.c.b16 %v1097, %v1096
    %v1447 = vpack.c.b16 %v1099, %v1098
    %v1448 = vpack.c.b16 %v1101, %v1100
    %v1449 = vpack.c.b16 %v1103, %v1102
    %v1450 = vpack.c.b16 %v1105, %v1104
    %v1451 = vpack.c.b16 %v1107, %v1106
    %v1452 = vpack.c.b16 %v1109, %v1108
    %v1453 = vpack.c.b16 %v1111, %v1110
    %v1454 = vpack.c.b16 %v1113, %v1112
    %v1455 = vpack.c.b16 %v1115, %v1114
    %v1456 = vpack.c.b16 %v1117, %v1116
    %v1457 = vpack.c.b16 %v1119, %v1118
    %v1458 = vpack.c.b16 %v1121, %v1120
    %v1459 = vpack.c.b16 %v1123, %v1122
    %v1460 = vpack.c.b16 %v1125, %v1124
    %v1461 = vpack.c.b16 %v1127, %v1126
    %v1462 = vpack.c.b16 %v1129, %v1128
    %v1463 = vpack.c.b16 %v1131, %v1130
    %v1464 = vpack.c.b16 %v1133, %v1132
    %v1465 = vpack.c.b16 %v1135, %v1134
    %v1466 = vpack.c.b16 %v1137, %v1136
    %v1467 = vpack.c.b16 %v1139, %v1138
    %v1468 = vpack.c.b16 %v1141, %v1140
    %v1469 = vpack.c.b16 %v1143, %v1142
    %v1470 = vpack.c.b16 %v1145, %v1144
    %v1471 = vpack.c.b16 %v1147, %v1146
    %v1472 = vpack.c.b16 %v1149, %v1148
    %v1473 = vpack.c.b16 %v1151, %v1150
    %v1474 = vpack.c.b16 %v1153, %v1152
    %v1475 = vpack.c.b16 %v1155, %v1154
    %v1476 = vpack.c.b16 %v1157, %v1156
    %v1477 = vpack.c.b16 %v1159, %v1158
    %v1478 = vpack.c.b16 %v1161, %v1160
    %v1479 = vpack.c.b16 %v1163, %v1162
    %v1480 = vpack.c.b16 %v1165, %v1164
    %v1481 = vpack.c.b16 %v1167, %v1166
    %v1482 = vpack.c.b16 %v1169, %v1168
    %v1483 = vpack.c.b16 %v1171, %v1170
    %v1484 = vpack.c.b16 %v1173, %v1172
    %v1485 = vpack.c.b16 %v1175, %v1174
    %v1486 = vpack.c.b16 %v1177, %v1176
    %v1487 = vpack.c.b16 %v1179, %v1178
    %v1488 = vpack.c.b16 %v1181, %v1180
    %v1489 = vpack.c.b16 %v1183, %v1182
    %v1490 = vpack.c.b16 %v1185, %v1184
    %v1491 = vpack.c.b16 %v1187, %v1186
    %v1492 = vpack.c.b16 %v1189, %v1188
    %v1493 = vpack.c.b16 %v1191, %v1190
    %v1494 = vpack.c.b16 %v1193, %v1192
    %v1495 = vpack.c.b16 %v1195, %v1194
    %v1496 = vpack.c.b16 %v1197, %v1196
    %v1497 = vpack.c.b16 %v1199, %v1198
    %v1498 = vpack.c.b16 %v1201, %v1200
    %v1499 = vpack.c.b16 %v1203, %v1202
    %v1500 = vpack.c.b16 %v1205, %v1204
    %v1501 = vpack.c.b16 %v1207, %v1206
    %v1502 = vpack.c.b16 %v1209, %v1208
    %v1503 = vpack.c.b16 %v1211, %v1210
    %v1504 = vpack.c.b16 %v1213, %v1212
    %v1505 = vpack.c.b16 %v1215, %v1214
    %v1506 = vpack.c.b16 %v1217, %v1216
    %v1507 = vpack.c.b16 %v1219, %v1218
    %v1508 = vpack.c.b16 %v1221, %v1220
    %v1509 = vpack.c.b16 %v1223, %v1222
    %v1510 = vpack.c.b16 %v1225, %v1224
    %v1511 = vpack.c.b16 %v1227, %v1226
    %v1512 = vpack.c.b16 %v1229, %v1228
    %v1513 = vpack.c.b16 %v1231, %v1230
    %v1514 = vpack.c.b16 %v1233, %v1232
    %v1515 = vpack.c.b16 %v1235, %v1234
    %v1516 = vpack.c.b16 %v1237, %v1236
    %v1517 = vpack.c.b16 %v1239, %v1238
    %v1518 = vpack.c.b16 %v1241, %v1240
    %v1519 = vpack.c.b16 %v1243, %v1242
    %v1520 = vpack.c.b16 %v1245, %v1244
    %v1521 = vpack.c.b16 %v1247, %v1246
    %v1522 = vpack.c.b16 %v1249, %v1248
    %v1523 = vpack.c.b16 %v1251, %v1250
    %v1524 = vpack.c.b16 %v1253, %v1252
    %v1525 = vpack.c.b16 %v1255, %v1254
    %v1526 = vpack.c.b16 %v1257, %v1256
    %v1527 = vpack.c.b16 %v1259, %v1258
    %v1528 = vpack.c.b16 %v1261, %v1260
    %v1529 = vpack.c.b16 %v1263, %v1262
    %v1530 = vpack.c.b16 %v1265, %v1264
    %v1531 = vpack.c.b16 %v1267, %v1266
    %v1532 = vpack.c.b16 %v1269, %v1268
    %v1533 = vpack.c.b16 %v1271, %v1270
    %v1534 = vpack.c.b16 %v1273, %v1272
    %v1535 = vpack.c.b16 %v1275, %v1274
    %v1536 = vpack.c.b16 %v1277, %v1276
    %v1537 = vpack.c.b16 %v1279, %v1278
    %v1538 = vpack.c.b16 %v1281, %v1280
    %v1539 = vpack.c.b16 %v1283, %v1282
    %v1540 = vpack.c.b16 %v1285, %v1284
    %v1541 = vpack.c.b16 %v1287, %v1286
    %v1542 = vpack.c.b16 %v1289, %v1288
    %v1543 = vpack.c.b16 %v1291, %v1290
    %v1544 = vpack.c.b16 %v1293, %v1292
    %v1545 = vpack.c.b16 %v1295, %v1294
    %v1546 = vpack.c.b16 %v1297, %v1296
    %v1547 = vpack.c.b16 %v1299, %v1298
    %v1548 = vpack.c.b16 %v1301, %v1300
    %v1549 = vpack.c.b16 %v1303, %v1302
    %v1550 = vpack.c.b16 %v1305, %v1304
    %v1551 = vpack.c.b16 %v1307, %v1306
    %v1552 = vpack.c.b16 %v1309, %v1308
    %v1553 = vpack.c.b16 %v1311, %v1310
    %v1554 = vpack.c.b16 %v1313, %v1312
    %v1555 = vpack.c.b16 %v1315, %v1314
    %v1556 = vpack.c.b16 %v1317, %v1316
    %v1557 = vpack.c.b16 %v1319, %v1318
    %v1558 = vpack.c.b16 %v1321, %v1320
    %v1559 = vpack.c.b16 %v1323, %v1322
    %v1560 = vpack.c.b16 %v1325, %v1324
    %v1561 = vpack.c.b16 %v1327, %v1326
    %v1562 = vpack.c.b16 %v1329, %v1328
    %v1563 = vpack.c.b16 %v1331, %v1330
    %v1564 = vpack.c.b16 %v1333, %v1332
    %v1565 = vpack.c.b16 %v1335, %v1334
    %v1566 = vpack.c.b16 %v1337, %v1336
    %v1567 = vpack.c.b16 %v1339, %v1338
    %v1568 = vpack.c.b16 %v1341, %v1340
    %v1569 = vpack.c.b16 %v1343, %v1342
    %v1570 = vpack.c.b16 %v1345, %v1344
    %v1571 = vpack.c.b16 %v1347, %v1346
    %v1572 = vpack.c.b16 %v1349, %v1348
    %v1573 = vpack.c.b16 %v1351, %v1350
    %v1574 = vpack.c.b16 %v1353, %v1352
    %v1575 = vpack.c.b16 %v1355, %v1354
    %v1576 = vpack.c.b16 %v1357, %v1356
    %v1577 = vpack.c.b16 %v1359, %v1358
    %v1578 = vpack.c.b16 %v1361, %v1360
    %v1579 = vpack.c.b16 %v1363, %v1362
    %v1580 = vpack.c.b16 %v1365, %v1364
    %v1581 = vpack.c.b16 %v1367, %v1366
    %v1582 = vpack.c.b16 %v1369, %v1368
    %v1583 = vpack.c.b16 %v1371, %v1370
    %v1584 = vpack.c.b16 %v1373, %v1372
    %v1585 = vpack.c.b16 %v1375, %v1374
    %v1586 = vpack.c.b16 %v1377, %v1376
    %v1587 = vpack.c.b16 %v1379, %v1378
    %v1588 = vpack.c.b16 %v1381, %v1380
    %v1589 = vpack.c.b16 %v1383, %v1382
    %v1590 = vpack.c.b16 %v1385, %v1384
    %v1591 = vpack.c.b16 %v1387, %v1386
    %v1592 = vpack.c.b16 %v1389, %v1388
    %v1593 = vpack.c.b16 %v1391, %v1390
    %v1594 = vpack.c.b16 %v1393, %v1392
    %v1595 = vpack.c.b16 %v1395, %v1394
    %v1596 = vpack.c.b16 %v1397, %v1396
    %v1597 = vpack.c.b16 %v1399, %v1398
    %v1598 = vpack.c.b16 %v1401, %v1400
    %v1599 = vpack.c.b16 %v1403, %v1402
    %vm1796 = vcmask 523264
    %v1798 = vsel %vm1796, %v595, 0
    %1800 = vmatprep.subr.bf16.mxu0 0
    %1801 = vmatpush1.bf16.msra.mxu0 %v1411
    %1802 = vmatprep.subr.bf16.mxu0 0
    %1803 = vmatpush1.bf16.msra.mxu0 %v1410
    %1804 = vmatprep.subr.bf16.mxu0 0
    %1805 = vmatpush1.bf16.msra.mxu0 %v1409
    %1806 = vmatprep.subr.bf16.mxu0 0
    %1807 = vmatpush1.bf16.msra.mxu0 %v1408
    %1808 = vmatprep.subr.bf16.mxu0 0
    %1809 = vmatpush1.bf16.msra.mxu0 %v1407
    %1810 = vmatprep.subr.bf16.mxu0 0
    %1811 = vmatpush1.bf16.msra.mxu0 %v1406
    %1812 = vmatprep.subr.bf16.mxu0 0
    %1813 = vmatpush1.bf16.msra.mxu0 %v1405
    %1814 = vmatprep.subr.bf16.mxu0 0
    %1815 = vmatpush1.bf16.msra.mxu0 %v1404
    %1816 = vmatprep.subr.bf16.mxu0 0
    %1817 = vmatpush2.bf16.msra.mxu0 %v1419
    %1818 = vmatprep.subr.bf16.mxu0 0
    %1819 = vmatpush2.bf16.msra.mxu0 %v1418
    %1820 = vmatprep.subr.bf16.mxu0 0
    %1821 = vmatpush2.bf16.msra.mxu0 %v1417
    %1822 = vmatprep.subr.bf16.mxu0 0
    %1823 = vmatpush2.bf16.msra.mxu0 %v1416
    %1824 = vmatprep.subr.bf16.mxu0 0
    %1825 = vmatpush2.bf16.msra.mxu0 %v1415
    %1826 = vmatprep.subr.bf16.mxu0 0
    %1827 = vmatpush2.bf16.msra.mxu0 %v1414
    %1828 = vmatprep.subr.bf16.mxu0 0
    %1829 = vmatpush2.bf16.msra.mxu0 %v1413
    %1830 = vmatprep.subr.bf16.mxu0 0
    %1831 = vmatpush2.bf16.msra.mxu0 %v1412
    %1832 = vmatprep.mubr.bf16.mxu0 %v472
    %1833 = vmatmul.mubr.bf16.gmra.mxu0 %v458
    %v1834 = vpop.f32.mrf.mxu0
    %v1835 = vadd.f32 %v429, %v1834
    %v1836 = vpop.f32.mrf.mxu0
    %v1837 = vpop.f32.mrf.mxu0
    %v1838 = vpop.f32.mrf.mxu0
    %1839 = vdwg.mxu0
    %1840 = vmatprep.subr.bf16.mxu0 0
    %1841 = vmatpush1.bf16.msra.mxu0 %v1427
    %1842 = vmatprep.subr.bf16.mxu0 0
    %1843 = vmatpush1.bf16.msra.mxu0 %v1426
    %1844 = vmatprep.subr.bf16.mxu0 0
    %1845 = vmatpush1.bf16.msra.mxu0 %v1425
    %1846 = vmatprep.subr.bf16.mxu0 0
    %1847 = vmatpush1.bf16.msra.mxu0 %v1424
    %1848 = vmatprep.subr.bf16.mxu0 0
    %1849 = vmatpush1.bf16.msra.mxu0 %v1423
    %1850 = vmatprep.subr.bf16.mxu0 0
    %1851 = vmatpush1.bf16.msra.mxu0 %v1422
    %1852 = vmatprep.subr.bf16.mxu0 0
    %1853 = vmatpush1.bf16.msra.mxu0 %v1421
    %1854 = vmatprep.subr.bf16.mxu0 0
    %1855 = vmatpush1.bf16.msra.mxu0 %v1420
    %1856 = vmatprep.subr.bf16.mxu0 0
    %1857 = vmatpush2.bf16.msra.mxu0 %v1435
    %1858 = vmatprep.subr.bf16.mxu0 0
    %1859 = vmatpush2.bf16.msra.mxu0 %v1434
    %1860 = vmatprep.subr.bf16.mxu0 0
    %1861 = vmatpush2.bf16.msra.mxu0 %v1433
    %1862 = vmatprep.subr.bf16.mxu0 0
    %1863 = vmatpush2.bf16.msra.mxu0 %v1432
    %1864 = vmatprep.subr.bf16.mxu0 0
    %1865 = vmatpush2.bf16.msra.mxu0 %v1431
    %1866 = vmatprep.subr.bf16.mxu0 0
    %1867 = vmatpush2.bf16.msra.mxu0 %v1430
    %1868 = vmatprep.subr.bf16.mxu0 0
    %1869 = vmatpush2.bf16.msra.mxu0 %v1429
    %1870 = vmatprep.subr.bf16.mxu0 0
    %1871 = vmatpush2.bf16.msra.mxu0 %v1428
    %1872 = vmatprep.mubr.bf16.mxu0 %v482
    %1873 = vmatmul.mubr.bf16.gmra.mxu0 %v480
    %v1874 = vpop.f32.mrf.mxu0
    %v1875 = vadd.f32 %v1835, %v1874
    %v1876 = vpop.f32.mrf.mxu0
    %v1877 = vpop.f32.mrf.mxu0
    %v1878 = vpop.f32.mrf.mxu0
    %1879 = vdwg.mxu0
    %1880 = vmatprep.subr.bf16.mxu0 0
    %1881 = vmatpush1.bf16.msra.mxu0 %v1443
    %1882 = vmatprep.subr.bf16.mxu0 0
    %1883 = vmatpush1.bf16.msra.mxu0 %v1442
    %1884 = vmatprep.subr.bf16.mxu0 0
    %1885 = vmatpush1.bf16.msra.mxu0 %v1441
    %1886 = vmatprep.subr.bf16.mxu0 0
    %1887 = vmatpush1.bf16.msra.mxu0 %v1440
    %1888 = vmatprep.subr.bf16.mxu0 0
    %1889 = vmatpush1.bf16.msra.mxu0 %v1439
    %1890 = vmatprep.subr.bf16.mxu0 0
    %1891 = vmatpush1.bf16.msra.mxu0 %v1438
    %1892 = vmatprep.subr.bf16.mxu0 0
    %1893 = vmatpush1.bf16.msra.mxu0 %v1437
    %1894 = vmatprep.subr.bf16.mxu0 0
    %1895 = vmatpush1.bf16.msra.mxu0 %v1436
    %1896 = vmatprep.subr.bf16.mxu0 0
    %1897 = vmatpush2.bf16.msra.mxu0 %v1451
    %1898 = vmatprep.subr.bf16.mxu0 0
    %1899 = vmatpush2.bf16.msra.mxu0 %v1450
    %1900 = vmatprep.subr.bf16.mxu0 0
    %1901 = vmatpush2.bf16.msra.mxu0 %v1449
    %1902 = vmatprep.subr.bf16.mxu0 0
    %1903 = vmatpush2.bf16.msra.mxu0 %v1448
    %1904 = vmatprep.subr.bf16.mxu0 0
    %1905 = vmatpush2.bf16.msra.mxu0 %v1447
    %1906 = vmatprep.subr.bf16.mxu0 0
    %1907 = vmatpush2.bf16.msra.mxu0 %v1446
    %1908 = vmatprep.subr.bf16.mxu0 0
    %1909 = vmatpush2.bf16.msra.mxu0 %v1445
    %1910 = vmatprep.subr.bf16.mxu0 0
    %1911 = vmatpush2.bf16.msra.mxu0 %v1444
    %1912 = vmatprep.mubr.bf16.mxu0 %v479
    %1913 = vmatmul.mubr.bf16.gmra.mxu0 %v465
    %v1914 = vpop.f32.mrf.mxu0
    %v1915 = vadd.f32 %v1875, %v1914
    %v1916 = vpop.f32.mrf.mxu0
    %v1917 = vpop.f32.mrf.mxu0
    %v1918 = vpop.f32.mrf.mxu0
    %1919 = vdwg.mxu0
    %1920 = vmatprep.subr.bf16.mxu0 0
    %1921 = vmatpush1.bf16.msra.mxu0 %v1459
    %1922 = vmatprep.subr.bf16.mxu0 0
    %1923 = vmatpush1.bf16.msra.mxu0 %v1458
    %1924 = vmatprep.subr.bf16.mxu0 0
    %1925 = vmatpush1.bf16.msra.mxu0 %v1457
    %1926 = vmatprep.subr.bf16.mxu0 0
    %1927 = vmatpush1.bf16.msra.mxu0 %v1456
    %1928 = vmatprep.subr.bf16.mxu0 0
    %1929 = vmatpush1.bf16.msra.mxu0 %v1455
    %1930 = vmatprep.subr.bf16.mxu0 0
    %1931 = vmatpush1.bf16.msra.mxu0 %v1454
    %1932 = vmatprep.subr.bf16.mxu0 0
    %1933 = vmatpush1.bf16.msra.mxu0 %v1453
    %1934 = vmatprep.subr.bf16.mxu0 0
    %1935 = vmatpush1.bf16.msra.mxu0 %v1452
    %1936 = vmatprep.subr.bf16.mxu0 0
    %1937 = vmatpush2.bf16.msra.mxu0 %v1467
    %1938 = vmatprep.subr.bf16.mxu0 0
    %1939 = vmatpush2.bf16.msra.mxu0 %v1466
    %1940 = vmatprep.subr.bf16.mxu0 0
    %1941 = vmatpush2.bf16.msra.mxu0 %v1465
    %1942 = vmatprep.subr.bf16.mxu0 0
    %1943 = vmatpush2.bf16.msra.mxu0 %v1464
    %1944 = vmatprep.subr.bf16.mxu0 0
    %1945 = vmatpush2.bf16.msra.mxu0 %v1463
    %1946 = vmatprep.subr.bf16.mxu0 0
    %1947 = vmatpush2.bf16.msra.mxu0 %v1462
    %1948 = vmatprep.subr.bf16.mxu0 0
    %1949 = vmatpush2.bf16.msra.mxu0 %v1461
    %1950 = vmatprep.subr.bf16.mxu0 0
    %1951 = vmatpush2.bf16.msra.mxu0 %v1460
    %1952 = vmatprep.mubr.bf16.mxu0 %v483
    %1953 = vmatmul.mubr.bf16.gmra.mxu0 %v481
    %v1954 = vpop.f32.mrf.mxu0
    %v1955 = vadd.f32 %v1915, %v1954
    %v1956 = vpop.f32.mrf.mxu0
    %v1957 = vpop.f32.mrf.mxu0
    %v1958 = vpop.f32.mrf.mxu0
    %1959 = vdwg.mxu0
    %1960 = vmatprep.subr.bf16.mxu0 0
    %1961 = vmatpush1.bf16.msra.mxu0 %v1475
    %1962 = vmatprep.subr.bf16.mxu0 0
    %1963 = vmatpush1.bf16.msra.mxu0 %v1474
    %1964 = vmatprep.subr.bf16.mxu0 0
    %1965 = vmatpush1.bf16.msra.mxu0 %v1473
    %1966 = vmatprep.subr.bf16.mxu0 0
    %1967 = vmatpush1.bf16.msra.mxu0 %v1472
    %1968 = vmatprep.subr.bf16.mxu0 0
    %1969 = vmatpush1.bf16.msra.mxu0 %v1471
    %1970 = vmatprep.subr.bf16.mxu0 0
    %1971 = vmatpush1.bf16.msra.mxu0 %v1470
    %1972 = vmatprep.subr.bf16.mxu0 0
    %1973 = vmatpush1.bf16.msra.mxu0 %v1469
    %1974 = vmatprep.subr.bf16.mxu0 0
    %1975 = vmatpush1.bf16.msra.mxu0 %v1468
    %1976 = vmatprep.subr.bf16.mxu0 0
    %1977 = vmatpush2.bf16.msra.mxu0 %v1483
    %1978 = vmatprep.subr.bf16.mxu0 0
    %1979 = vmatpush2.bf16.msra.mxu0 %v1482
    %1980 = vmatprep.subr.bf16.mxu0 0
    %1981 = vmatpush2.bf16.msra.mxu0 %v1481
    %1982 = vmatprep.subr.bf16.mxu0 0
    %1983 = vmatpush2.bf16.msra.mxu0 %v1480
    %1984 = vmatprep.subr.bf16.mxu0 0
    %1985 = vmatpush2.bf16.msra.mxu0 %v1479
    %1986 = vmatprep.subr.bf16.mxu0 0
    %1987 = vmatpush2.bf16.msra.mxu0 %v1478
    %1988 = vmatprep.subr.bf16.mxu0 0
    %1989 = vmatpush2.bf16.msra.mxu0 %v1477
    %1990 = vmatprep.subr.bf16.mxu0 0
    %1991 = vmatpush2.bf16.msra.mxu0 %v1476
    %1992 = vmatprep.mubr.bf16.mxu0 %v521
    %1993 = vmatmul.mubr.bf16.gmra.mxu0 %v507
    %v1994 = vpop.f32.mrf.mxu0
    %v1995 = vadd.f32 %v1955, %v1994
    %v1996 = vpop.f32.mrf.mxu0
    %v1997 = vpop.f32.mrf.mxu0
    %v1998 = vpop.f32.mrf.mxu0
    %1999 = vdwg.mxu0
    %2000 = vmatprep.subr.bf16.mxu0 0
    %2001 = vmatpush1.bf16.msra.mxu0 %v1491
    %2002 = vmatprep.subr.bf16.mxu0 0
    %2003 = vmatpush1.bf16.msra.mxu0 %v1490
    %2004 = vmatprep.subr.bf16.mxu0 0
    %2005 = vmatpush1.bf16.msra.mxu0 %v1489
    %2006 = vmatprep.subr.bf16.mxu0 0
    %2007 = vmatpush1.bf16.msra.mxu0 %v1488
    %2008 = vmatprep.subr.bf16.mxu0 0
    %2009 = vmatpush1.bf16.msra.mxu0 %v1487
    %2010 = vmatprep.subr.bf16.mxu0 0
    %2011 = vmatpush1.bf16.msra.mxu0 %v1486
    %2012 = vmatprep.subr.bf16.mxu0 0
    %2013 = vmatpush1.bf16.msra.mxu0 %v1485
    %2014 = vmatprep.subr.bf16.mxu0 0
    %2015 = vmatpush1.bf16.msra.mxu0 %v1484
    %2016 = vmatprep.subr.bf16.mxu0 0
    %2017 = vmatpush2.bf16.msra.mxu0 %v1499
    %2018 = vmatprep.subr.bf16.mxu0 0
    %2019 = vmatpush2.bf16.msra.mxu0 %v1498
    %2020 = vmatprep.subr.bf16.mxu0 0
    %2021 = vmatpush2.bf16.msra.mxu0 %v1497
    %2022 = vmatprep.subr.bf16.mxu0 0
    %2023 = vmatpush2.bf16.msra.mxu0 %v1496
    %2024 = vmatprep.subr.bf16.mxu0 0
    %2025 = vmatpush2.bf16.msra.mxu0 %v1495
    %2026 = vmatprep.subr.bf16.mxu0 0
    %2027 = vmatpush2.bf16.msra.mxu0 %v1494
    %2028 = vmatprep.subr.bf16.mxu0 0
    %2029 = vmatpush2.bf16.msra.mxu0 %v1493
    %2030 = vmatprep.subr.bf16.mxu0 0
    %2031 = vmatpush2.bf16.msra.mxu0 %v1492
    %2032 = vmatprep.mubr.bf16.mxu0 %v531
    %2033 = vmatmul.mubr.bf16.gmra.mxu0 %v529
    %v2034 = vpop.f32.mrf.mxu0
    %v2035 = vadd.f32 %v1995, %v2034
    %v2036 = vpop.f32.mrf.mxu0
    %v2037 = vpop.f32.mrf.mxu0
    %v2038 = vpop.f32.mrf.mxu0
    %2039 = vdwg.mxu0
    %2040 = vmatprep.subr.bf16.mxu0 0
    %2041 = vmatpush1.bf16.msra.mxu0 %v1507
    %2042 = vmatprep.subr.bf16.mxu0 0
    %2043 = vmatpush1.bf16.msra.mxu0 %v1506
    %2044 = vmatprep.subr.bf16.mxu0 0
    %2045 = vmatpush1.bf16.msra.mxu0 %v1505
    %2046 = vmatprep.subr.bf16.mxu0 0
    %2047 = vmatpush1.bf16.msra.mxu0 %v1504
    %2048 = vmatprep.subr.bf16.mxu0 0
    %2049 = vmatpush1.bf16.msra.mxu0 %v1503
    %2050 = vmatprep.subr.bf16.mxu0 0
    %2051 = vmatpush1.bf16.msra.mxu0 %v1502
    %2052 = vmatprep.subr.bf16.mxu0 0
    %2053 = vmatpush1.bf16.msra.mxu0 %v1501
    %2054 = vmatprep.subr.bf16.mxu0 0
    %2055 = vmatpush1.bf16.msra.mxu0 %v1500
    %2056 = vmatprep.subr.bf16.mxu0 0
    %2057 = vmatpush2.bf16.msra.mxu0 %v1515
    %2058 = vmatprep.subr.bf16.mxu0 0
    %2059 = vmatpush2.bf16.msra.mxu0 %v1514
    %2060 = vmatprep.subr.bf16.mxu0 0
    %2061 = vmatpush2.bf16.msra.mxu0 %v1513
    %2062 = vmatprep.subr.bf16.mxu0 0
    %2063 = vmatpush2.bf16.msra.mxu0 %v1512
    %2064 = vmatprep.subr.bf16.mxu0 0
    %2065 = vmatpush2.bf16.msra.mxu0 %v1511
    %2066 = vmatprep.subr.bf16.mxu0 0
    %2067 = vmatpush2.bf16.msra.mxu0 %v1510
    %2068 = vmatprep.subr.bf16.mxu0 0
    %2069 = vmatpush2.bf16.msra.mxu0 %v1509
    %2070 = vmatprep.subr.bf16.mxu0 0
    %2071 = vmatpush2.bf16.msra.mxu0 %v1508
    %2072 = vmatprep.mubr.bf16.mxu0 %v528
    %2073 = vmatmul.mubr.bf16.gmra.mxu0 %v514
    %v2074 = vpop.f32.mrf.mxu0
    %v2075 = vadd.f32 %v2035, %v2074
    %v2076 = vpop.f32.mrf.mxu0
    %v2077 = vpop.f32.mrf.mxu0
    %v2078 = vpop.f32.mrf.mxu0
    %2079 = vdwg.mxu0
    %2080 = vmatprep.subr.bf16.mxu0 0
    %2081 = vmatpush1.bf16.msra.mxu0 %v1523
    %2082 = vmatprep.subr.bf16.mxu0 0
    %2083 = vmatpush1.bf16.msra.mxu0 %v1522
    %2084 = vmatprep.subr.bf16.mxu0 0
    %2085 = vmatpush1.bf16.msra.mxu0 %v1521
    %2086 = vmatprep.subr.bf16.mxu0 0
    %2087 = vmatpush1.bf16.msra.mxu0 %v1520
    %2088 = vmatprep.subr.bf16.mxu0 0
    %2089 = vmatpush1.bf16.msra.mxu0 %v1519
    %2090 = vmatprep.subr.bf16.mxu0 0
    %2091 = vmatpush1.bf16.msra.mxu0 %v1518
    %2092 = vmatprep.subr.bf16.mxu0 0
    %2093 = vmatpush1.bf16.msra.mxu0 %v1517
    %2094 = vmatprep.subr.bf16.mxu0 0
    %2095 = vmatpush1.bf16.msra.mxu0 %v1516
    %2096 = vmatprep.subr.bf16.mxu0 0
    %2097 = vmatpush2.bf16.msra.mxu0 %v1531
    %2098 = vmatprep.subr.bf16.mxu0 0
    %2099 = vmatpush2.bf16.msra.mxu0 %v1530
    %2100 = vmatprep.subr.bf16.mxu0 0
    %2101 = vmatpush2.bf16.msra.mxu0 %v1529
    %2102 = vmatprep.subr.bf16.mxu0 0
    %2103 = vmatpush2.bf16.msra.mxu0 %v1528
    %2104 = vmatprep.subr.bf16.mxu0 0
    %2105 = vmatpush2.bf16.msra.mxu0 %v1527
    %2106 = vmatprep.subr.bf16.mxu0 0
    %2107 = vmatpush2.bf16.msra.mxu0 %v1526
    %2108 = vmatprep.subr.bf16.mxu0 0
    %2109 = vmatpush2.bf16.msra.mxu0 %v1525
    %2110 = vmatprep.subr.bf16.mxu0 0
    %2111 = vmatpush2.bf16.msra.mxu0 %v1524
    %2112 = vmatprep.mubr.bf16.mxu0 %v532
    %2113 = vmatmul.mubr.bf16.gmra.mxu0 %v530
    %v2114 = vpop.f32.mrf.mxu0
    %v2115 = vadd.f32 %v2075, %v2114
    %v2116 = vpop.f32.mrf.mxu0
    %v2117 = vpop.f32.mrf.mxu0
    %v2118 = vpop.f32.mrf.mxu0
    %2119 = vdwg.mxu0
    %2120 = vmatprep.subr.bf16.mxu0 0
    %2121 = vmatpush1.bf16.msra.mxu0 %v1539
    %2122 = vmatprep.subr.bf16.mxu0 0
    %2123 = vmatpush1.bf16.msra.mxu0 %v1538
    %2124 = vmatprep.subr.bf16.mxu0 0
    %2125 = vmatpush1.bf16.msra.mxu0 %v1537
    %2126 = vmatprep.subr.bf16.mxu0 0
    %2127 = vmatpush1.bf16.msra.mxu0 %v1536
    %2128 = vmatprep.subr.bf16.mxu0 0
    %2129 = vmatpush1.bf16.msra.mxu0 %v1535
    %2130 = vmatprep.subr.bf16.mxu0 0
    %2131 = vmatpush1.bf16.msra.mxu0 %v1534
    %2132 = vmatprep.subr.bf16.mxu0 0
    %2133 = vmatpush1.bf16.msra.mxu0 %v1533
    %2134 = vmatprep.subr.bf16.mxu0 0
    %2135 = vmatpush1.bf16.msra.mxu0 %v1532
    %2136 = vmatprep.subr.bf16.mxu0 0
    %2137 = vmatpush2.bf16.msra.mxu0 %v1547
    %2138 = vmatprep.subr.bf16.mxu0 0
    %2139 = vmatpush2.bf16.msra.mxu0 %v1546
    %2140 = vmatprep.subr.bf16.mxu0 0
    %2141 = vmatpush2.bf16.msra.mxu0 %v1545
    %2142 = vmatprep.subr.bf16.mxu0 0
    %2143 = vmatpush2.bf16.msra.mxu0 %v1544
    %2144 = vmatprep.subr.bf16.mxu0 0
    %2145 = vmatpush2.bf16.msra.mxu0 %v1543
    %2146 = vmatprep.subr.bf16.mxu0 0
    %2147 = vmatpush2.bf16.msra.mxu0 %v1542
    %2148 = vmatprep.subr.bf16.mxu0 0
    %2149 = vmatpush2.bf16.msra.mxu0 %v1541
    %2150 = vmatprep.subr.bf16.mxu0 0
    %2151 = vmatpush2.bf16.msra.mxu0 %v1540
    %2152 = vmatprep.mubr.bf16.mxu0 %v570
    %2153 = vmatmul.mubr.bf16.gmra.mxu0 %v556
    %v2154 = vpop.f32.mrf.mxu0
    %v2155 = vadd.f32 %v2115, %v2154
    %v2156 = vpop.f32.mrf.mxu0
    %v2157 = vpop.f32.mrf.mxu0
    %v2158 = vpop.f32.mrf.mxu0
    %2159 = vdwg.mxu0
    %2160 = vmatprep.subr.bf16.mxu0 0
    %2161 = vmatpush1.bf16.msra.mxu0 %v1555
    %2162 = vmatprep.subr.bf16.mxu0 0
    %2163 = vmatpush1.bf16.msra.mxu0 %v1554
    %2164 = vmatprep.subr.bf16.mxu0 0
    %2165 = vmatpush1.bf16.msra.mxu0 %v1553
    %2166 = vmatprep.subr.bf16.mxu0 0
    %2167 = vmatpush1.bf16.msra.mxu0 %v1552
    %2168 = vmatprep.subr.bf16.mxu0 0
    %2169 = vmatpush1.bf16.msra.mxu0 %v1551
    %2170 = vmatprep.subr.bf16.mxu0 0
    %2171 = vmatpush1.bf16.msra.mxu0 %v1550
    %2172 = vmatprep.subr.bf16.mxu0 0
    %2173 = vmatpush1.bf16.msra.mxu0 %v1549
    %2174 = vmatprep.subr.bf16.mxu0 0
    %2175 = vmatpush1.bf16.msra.mxu0 %v1548
    %2176 = vmatprep.subr.bf16.mxu0 0
    %2177 = vmatpush2.bf16.msra.mxu0 %v1563
    %2178 = vmatprep.subr.bf16.mxu0 0
    %2179 = vmatpush2.bf16.msra.mxu0 %v1562
    %2180 = vmatprep.subr.bf16.mxu0 0
    %2181 = vmatpush2.bf16.msra.mxu0 %v1561
    %2182 = vmatprep.subr.bf16.mxu0 0
    %2183 = vmatpush2.bf16.msra.mxu0 %v1560
    %2184 = vmatprep.subr.bf16.mxu0 0
    %2185 = vmatpush2.bf16.msra.mxu0 %v1559
    %2186 = vmatprep.subr.bf16.mxu0 0
    %2187 = vmatpush2.bf16.msra.mxu0 %v1558
    %2188 = vmatprep.subr.bf16.mxu0 0
    %2189 = vmatpush2.bf16.msra.mxu0 %v1557
    %2190 = vmatprep.subr.bf16.mxu0 0
    %2191 = vmatpush2.bf16.msra.mxu0 %v1556
    %2192 = vmatprep.mubr.bf16.mxu0 %v580
    %2193 = vmatmul.mubr.bf16.gmra.mxu0 %v578
    %v2194 = vpop.f32.mrf.mxu0
    %v2195 = vadd.f32 %v2155, %v2194
    %v2196 = vpop.f32.mrf.mxu0
    %v2197 = vpop.f32.mrf.mxu0
    %v2198 = vpop.f32.mrf.mxu0
    %2199 = vdwg.mxu0
    %2200 = vmatprep.subr.bf16.mxu0 0
    %2201 = vmatpush1.bf16.msra.mxu0 %v1571
    %2202 = vmatprep.subr.bf16.mxu0 0
    %2203 = vmatpush1.bf16.msra.mxu0 %v1570
    %2204 = vmatprep.subr.bf16.mxu0 0
    %2205 = vmatpush1.bf16.msra.mxu0 %v1569
    %2206 = vmatprep.subr.bf16.mxu0 0
    %2207 = vmatpush1.bf16.msra.mxu0 %v1568
    %2208 = vmatprep.subr.bf16.mxu0 0
    %2209 = vmatpush1.bf16.msra.mxu0 %v1567
    %2210 = vmatprep.subr.bf16.mxu0 0
    %2211 = vmatpush1.bf16.msra.mxu0 %v1566
    %2212 = vmatprep.subr.bf16.mxu0 0
    %2213 = vmatpush1.bf16.msra.mxu0 %v1565
    %2214 = vmatprep.subr.bf16.mxu0 0
    %2215 = vmatpush1.bf16.msra.mxu0 %v1564
    %2216 = vmatprep.subr.bf16.mxu0 0
    %2217 = vmatpush2.bf16.msra.mxu0 %v1579
    %2218 = vmatprep.subr.bf16.mxu0 0
    %2219 = vmatpush2.bf16.msra.mxu0 %v1578
    %2220 = vmatprep.subr.bf16.mxu0 0
    %2221 = vmatpush2.bf16.msra.mxu0 %v1577
    %2222 = vmatprep.subr.bf16.mxu0 0
    %2223 = vmatpush2.bf16.msra.mxu0 %v1576
    %2224 = vmatprep.subr.bf16.mxu0 0
    %2225 = vmatpush2.bf16.msra.mxu0 %v1575
    %2226 = vmatprep.subr.bf16.mxu0 0
    %2227 = vmatpush2.bf16.msra.mxu0 %v1574
    %2228 = vmatprep.subr.bf16.mxu0 0
    %2229 = vmatpush2.bf16.msra.mxu0 %v1573
    %2230 = vmatprep.subr.bf16.mxu0 0
    %2231 = vmatpush2.bf16.msra.mxu0 %v1572
    %2232 = vmatprep.mubr.bf16.mxu0 %v577
    %2233 = vmatmul.mubr.bf16.gmra.mxu0 %v563
    %v2234 = vpop.f32.mrf.mxu0
    %v2235 = vadd.f32 %v2195, %v2234
    %v2236 = vpop.f32.mrf.mxu0
    %v2237 = vpop.f32.mrf.mxu0
    %v2238 = vpop.f32.mrf.mxu0
    %2239 = vdwg.mxu0
    %2240 = vmatprep.subr.bf16.mxu0 0
    %2241 = vmatpush1.bf16.msra.mxu0 %v1587
    %2242 = vmatprep.subr.bf16.mxu0 0
    %2243 = vmatpush1.bf16.msra.mxu0 %v1586
    %2244 = vmatprep.subr.bf16.mxu0 0
    %2245 = vmatpush1.bf16.msra.mxu0 %v1585
    %2246 = vmatprep.subr.bf16.mxu0 0
    %2247 = vmatpush1.bf16.msra.mxu0 %v1584
    %2248 = vmatprep.subr.bf16.mxu0 0
    %2249 = vmatpush1.bf16.msra.mxu0 %v1583
    %2250 = vmatprep.subr.bf16.mxu0 0
    %2251 = vmatpush1.bf16.msra.mxu0 %v1582
    %2252 = vmatprep.subr.bf16.mxu0 0
    %2253 = vmatpush1.bf16.msra.mxu0 %v1581
    %2254 = vmatprep.subr.bf16.mxu0 0
    %2255 = vmatpush1.bf16.msra.mxu0 %v1580
    %2256 = vmatprep.subr.bf16.mxu0 0
    %2257 = vmatpush2.bf16.msra.mxu0 %v1595
    %2258 = vmatprep.subr.bf16.mxu0 0
    %2259 = vmatpush2.bf16.msra.mxu0 %v1594
    %2260 = vmatprep.subr.bf16.mxu0 0
    %2261 = vmatpush2.bf16.msra.mxu0 %v1593
    %2262 = vmatprep.subr.bf16.mxu0 0
    %2263 = vmatpush2.bf16.msra.mxu0 %v1592
    %2264 = vmatprep.subr.bf16.mxu0 0
    %2265 = vmatpush2.bf16.msra.mxu0 %v1591
    %2266 = vmatprep.subr.bf16.mxu0 0
    %2267 = vmatpush2.bf16.msra.mxu0 %v1590
    %2268 = vmatprep.subr.bf16.mxu0 0
    %2269 = vmatpush2.bf16.msra.mxu0 %v1589
    %2270 = vmatprep.subr.bf16.mxu0 0
    %2271 = vmatpush2.bf16.msra.mxu0 %v1588
    %2272 = vmatprep.mubr.bf16.mxu0 %v581
    %2273 = vmatmul.mubr.bf16.gmra.mxu0 %v579
    %v2274 = vpop.f32.mrf.mxu0
    %v2275 = vadd.f32 %v2235, %v2274
    %v2276 = vpop.f32.mrf.mxu0
    %v2277 = vpop.f32.mrf.mxu0
    %v2278 = vpop.f32.mrf.mxu0
    %2279 = vdwg.mxu0
    %2280 = vmatprep.subr.bf16.mxu0 0
    %2281 = vmatpush1.bf16.msra.mxu0 0
    %2282 = vmatprep.subr.bf16.mxu0 0
    %2283 = vmatpush1.bf16.msra.mxu0 0
    %2284 = vmatprep.subr.bf16.mxu0 0
    %2285 = vmatpush1.bf16.msra.mxu0 0
    %2286 = vmatprep.subr.bf16.mxu0 0
    %2287 = vmatpush1.bf16.msra.mxu0 0
    %2288 = vmatprep.subr.bf16.mxu0 0
    %2289 = vmatpush1.bf16.msra.mxu0 %v1599
    %2290 = vmatprep.subr.bf16.mxu0 0
    %2291 = vmatpush1.bf16.msra.mxu0 %v1598
    %2292 = vmatprep.subr.bf16.mxu0 0
    %2293 = vmatpush1.bf16.msra.mxu0 %v1597
    %2294 = vmatprep.subr.bf16.mxu0 0
    %2295 = vmatpush1.bf16.msra.mxu0 %v1596
    %2296 = vmatprep.subr.bf16.mxu0 0
    %2297 = vmatpush2.bf16.msra.mxu0 0
    %2298 = vmatprep.subr.bf16.mxu0 0
    %2299 = vmatpush2.bf16.msra.mxu0 0
    %2300 = vmatprep.subr.bf16.mxu0 0
    %2301 = vmatpush2.bf16.msra.mxu0 0
    %2302 = vmatprep.subr.bf16.mxu0 0
    %2303 = vmatpush2.bf16.msra.mxu0 0
    %2304 = vmatprep.subr.bf16.mxu0 0
    %2305 = vmatpush2.bf16.msra.mxu0 0
    %2306 = vmatprep.subr.bf16.mxu0 0
    %2307 = vmatpush2.bf16.msra.mxu0 0
    %2308 = vmatprep.subr.bf16.mxu0 0
    %2309 = vmatpush2.bf16.msra.mxu0 0
    %2310 = vmatprep.subr.bf16.mxu0 0
    %2311 = vmatpush2.bf16.msra.mxu0 0
    %2312 = vmatprep.mubr.bf16.mxu0 0
    %2313 = vmatmul.mubr.bf16.gmra.mxu0 %v1798
    %v2314 = vpop.f32.mrf.mxu0
    %v2315 = vadd.f32 %v2275, %v2314
    %v2316 = vpop.f32.mrf.mxu0
    %v2317 = vpop.f32.mrf.mxu0
    %v2318 = vpop.f32.mrf.mxu0
    %2319 = vdwg.mxu0
    %v2320 = vmax.f32 %v2315, 0.0
    %v2321 = vpack.c.bf16 %v2320, %v2320
    %v2322 = vld [vmem:[%s3] sm:$0xf]
    %v2323 = vld [vmem:[%s3 + $0x4] sm:$0xf]
    %v2324 = vld [vmem:[%s3 + $0x8] sm:$0xf]
    %v2325 = vld [vmem:[%s3 + $0xc] sm:$0xf]
    %v2326 = vld [vmem:[%s3 + $0x10] sm:$0xf]
    %v2327 = vld [vmem:[%s3 + $0x14] sm:$0xf]
    %v2328 = vld [vmem:[%s3 + $0x18] sm:$0xf]
    %v2329 = vld [vmem:[%s3 + $0x1c] sm:$0xf]
    %v2330 = vld [vmem:[%s3 + $0x20] sm:$0xf]
    %v2331 = vld [vmem:[%s3 + $0x24] sm:$0xf]
    %v2332 = vld [vmem:[%s3 + $0x28] sm:$0xf]
    %v2333 = vld [vmem:[%s3 + $0x2c] sm:$0xf]
    %v2334 = vld [vmem:[%s3 + $0x30] sm:$0xf]
    %v2335 = vld [vmem:[%s3 + $0x34] sm:$0xf]
    %v2336 = vld [vmem:[%s3 + $0x38] sm:$0xf]
    %v2337 = vld [vmem:[%s3 + $0x3c] sm:$0xf]
    %v2338 = vld [vmem:[%s4] sm:$0x1]
    %v2340 = vlaneseq
    %v2341 = vshrl.u32 %v2340, 7
    %v2342 = vsub.s32 0, %v2341
    %v2343 = vrot.slane %v2338, %v2342
    %v2361 = vunpack.c.l.b16 %v2322
    %v2362 = vunpack.c.l.b16 %v2323
    %v2363 = vunpack.c.l.b16 %v2324
    %v2364 = vunpack.c.l.b16 %v2325
    %v2365 = vunpack.c.l.b16 %v2326
    %v2366 = vunpack.c.l.b16 %v2327
    %v2367 = vunpack.c.l.b16 %v2328
    %v2368 = vunpack.c.l.b16 %v2329
    %v2369 = vunpack.c.l.b16 %v2330
    %v2370 = vunpack.c.l.b16 %v2331
    %v2371 = vunpack.c.l.b16 %v2332
    %v2372 = vunpack.c.l.b16 %v2333
    %v2373 = vunpack.c.l.b16 %v2334
    %v2374 = vunpack.c.l.b16 %v2335
    %v2375 = vunpack.c.l.b16 %v2336
    %v2376 = vunpack.c.l.b16 %v2337
    %v2377 = vpack.c.b16 %v2362, %v2361
    %v2378 = vpack.c.b16 %v2364, %v2363
    %v2379 = vpack.c.b16 %v2366, %v2365
    %v2380 = vpack.c.b16 %v2368, %v2367
    %v2381 = vpack.c.b16 %v2370, %v2369
    %v2382 = vpack.c.b16 %v2372, %v2371
    %v2383 = vpack.c.b16 %v2374, %v2373
    %v2384 = vpack.c.b16 %v2376, %v2375
    %2393 = vmatprep.subr.bf16.mxu0 0
    %2394 = vmatpush1.bf16.msra.mxu0 %v2384
    %2395 = vmatprep.subr.bf16.mxu0 0
    %2396 = vmatpush1.bf16.msra.mxu0 %v2383
    %2397 = vmatprep.subr.bf16.mxu0 0
    %2398 = vmatpush1.bf16.msra.mxu0 %v2382
    %2399 = vmatprep.subr.bf16.mxu0 0
    %2400 = vmatpush1.bf16.msra.mxu0 %v2381
    %2401 = vmatprep.subr.bf16.mxu0 0
    %2402 = vmatpush1.bf16.msra.mxu0 %v2380
    %2403 = vmatprep.subr.bf16.mxu0 0
    %2404 = vmatpush1.bf16.msra.mxu0 %v2379
    %2405 = vmatprep.subr.bf16.mxu0 0
    %2406 = vmatpush1.bf16.msra.mxu0 %v2378
    %2407 = vmatprep.subr.bf16.mxu0 0
    %2408 = vmatpush1.bf16.msra.mxu0 %v2377
    %2409 = vmatprep.subr.bf16.mxu0 0
    %2410 = vmatpush2.bf16.msra.mxu0 0
    %2411 = vmatprep.subr.bf16.mxu0 0
    %2412 = vmatpush2.bf16.msra.mxu0 0
    %2413 = vmatprep.subr.bf16.mxu0 0
    %2414 = vmatpush2.bf16.msra.mxu0 0
    %2415 = vmatprep.subr.bf16.mxu0 0
    %2416 = vmatpush2.bf16.msra.mxu0 0
    %2417 = vmatprep.subr.bf16.mxu0 0
    %2418 = vmatpush2.bf16.msra.mxu0 0
    %2419 = vmatprep.subr.bf16.mxu0 0
    %2420 = vmatpush2.bf16.msra.mxu0 0
    %2421 = vmatprep.subr.bf16.mxu0 0
    %2422 = vmatpush2.bf16.msra.mxu0 0
    %2423 = vmatprep.subr.bf16.mxu0 0
    %2424 = vmatpush2.bf16.msra.mxu0 0
    %2425 = vmatprep.mubr.bf16.mxu0 0
    %2426 = vmatmul.mubr.bf16.gmra.mxu0 %v2321
    %v2427 = vpop.f32.mrf.mxu0
    %v2428 = vadd.f32 %v2343, %v2427
    %v2429 = vpop.f32.mrf.mxu0
    %v2430 = vpop.f32.mrf.mxu0
    %v2431 = vpop.f32.mrf.mxu0
    %2432 = vdwg.mxu0
    %v2433 = vmax.f32 %v2428, 0.0
    %v2434 = vpack.c.bf16 %v2433, %v2433
    %v2435 = vld [vmem:[%s5] sm:$0xf]
    %v2436 = vld [vmem:[%s5 + $0x4] sm:$0xf]
    %v2437 = vld [vmem:[%s5 + $0x8] sm:$0xf]
    %v2438 = vld [vmem:[%s5 + $0xc] sm:$0xf]
    %v2439 = vld [vmem:[%s5 + $0x10] sm:$0xf]
    %v2440 = vld [vmem:[%s5 + $0x14] sm:$0xf]
    %v2441 = vld [vmem:[%s5 + $0x18] sm:$0xf]
    %v2442 = vld [vmem:[%s5 + $0x1c] sm:$0xf]
    %v2443 = vld [vmem:[%s5 + $0x20] sm:$0xf]
    %v2444 = vld [vmem:[%s5 + $0x24] sm:$0xf]
    %v2445 = vld [vmem:[%s5 + $0x28] sm:$0xf]
    %v2446 = vld [vmem:[%s5 + $0x2c] sm:$0xf]
    %v2447 = vld [vmem:[%s5 + $0x30] sm:$0xf]
    %v2448 = vld [vmem:[%s5 + $0x34] sm:$0xf]
    %v2449 = vld [vmem:[%s5 + $0x38] sm:$0xf]
    %v2450 = vld [vmem:[%s5 + $0x3c] sm:$0xf]
    %v2451 = vld [vmem:[%s6] sm:$0x1]
    %v2453 = vlaneseq
    %v2454 = vshrl.u32 %v2453, 7
    %v2455 = vsub.s32 0, %v2454
    %v2456 = vrot.slane %v2451, %v2455
    %v2474 = vunpack.c.l.b16 %v2435
    %v2475 = vunpack.c.l.b16 %v2436
    %v2476 = vunpack.c.l.b16 %v2437
    %v2477 = vunpack.c.l.b16 %v2438
    %v2478 = vunpack.c.l.b16 %v2439
    %v2479 = vunpack.c.l.b16 %v2440
    %v2480 = vunpack.c.l.b16 %v2441
    %v2481 = vunpack.c.l.b16 %v2442
    %v2482 = vunpack.c.l.b16 %v2443
    %v2483 = vunpack.c.l.b16 %v2444
    %v2484 = vunpack.c.l.b16 %v2445
    %v2485 = vunpack.c.l.b16 %v2446
    %v2486 = vunpack.c.l.b16 %v2447
    %v2487 = vunpack.c.l.b16 %v2448
    %v2488 = vunpack.c.l.b16 %v2449
    %v2489 = vunpack.c.l.b16 %v2450
    %v2490 = vpack.c.b16 %v2475, %v2474
    %v2491 = vpack.c.b16 %v2477, %v2476
    %v2492 = vpack.c.b16 %v2479, %v2478
    %v2493 = vpack.c.b16 %v2481, %v2480
    %v2494 = vpack.c.b16 %v2483, %v2482
    %v2495 = vpack.c.b16 %v2485, %v2484
    %v2496 = vpack.c.b16 %v2487, %v2486
    %v2497 = vpack.c.b16 %v2489, %v2488
    %2506 = vmatprep.subr.bf16.mxu0 0
    %2507 = vmatpush1.bf16.msra.mxu0 %v2497
    %2508 = vmatprep.subr.bf16.mxu0 0
    %2509 = vmatpush1.bf16.msra.mxu0 %v2496
    %2510 = vmatprep.subr.bf16.mxu0 0
    %2511 = vmatpush1.bf16.msra.mxu0 %v2495
    %2512 = vmatprep.subr.bf16.mxu0 0
    %2513 = vmatpush1.bf16.msra.mxu0 %v2494
    %2514 = vmatprep.subr.bf16.mxu0 0
    %2515 = vmatpush1.bf16.msra.mxu0 %v2493
    %2516 = vmatprep.subr.bf16.mxu0 0
    %2517 = vmatpush1.bf16.msra.mxu0 %v2492
    %2518 = vmatprep.subr.bf16.mxu0 0
    %2519 = vmatpush1.bf16.msra.mxu0 %v2491
    %2520 = vmatprep.subr.bf16.mxu0 0
    %2521 = vmatpush1.bf16.msra.mxu0 %v2490
    %2522 = vmatprep.subr.bf16.mxu0 0
    %2523 = vmatpush2.bf16.msra.mxu0 0
    %2524 = vmatprep.subr.bf16.mxu0 0
    %2525 = vmatpush2.bf16.msra.mxu0 0
    %2526 = vmatprep.subr.bf16.mxu0 0
    %2527 = vmatpush2.bf16.msra.mxu0 0
    %2528 = vmatprep.subr.bf16.mxu0 0
    %2529 = vmatpush2.bf16.msra.mxu0 0
    %2530 = vmatprep.subr.bf16.mxu0 0
    %2531 = vmatpush2.bf16.msra.mxu0 0
    %2532 = vmatprep.subr.bf16.mxu0 0
    %2533 = vmatpush2.bf16.msra.mxu0 0
    %2534 = vmatprep.subr.bf16.mxu0 0
    %2535 = vmatpush2.bf16.msra.mxu0 0
    %2536 = vmatprep.subr.bf16.mxu0 0
    %2537 = vmatpush2.bf16.msra.mxu0 0
    %2538 = vmatprep.mubr.bf16.mxu0 0
    %2539 = vmatmul.mubr.bf16.gmra.mxu0 %v2434
    %v2540 = vpop.f32.mrf.mxu0
    %v2541 = vadd.f32 %v2456, %v2540
    %v2542 = vpop.f32.mrf.mxu0
    %v2543 = vpop.f32.mrf.mxu0
    %v2544 = vpop.f32.mrf.mxu0
    %2545 = vdwg.mxu0
    %2546 = vst [vmem:[#allocation2] sm:$0x3] %v2541
    // Predicated region
    $region30: #{vgg_dwt_forward.3} parent=1 // pred_check
      _
    $region31: #{vgg_dwt_forward.3} parent=1 // pred_check_branch
      %2548 = sbr.rel (0) target = $region33
    $region32: #{vgg_dwt_forward.3} parent=1 // pred_region
      %s2550 = ssub.s32 32, 32
      %2551 = vsyncadd [#allocation3], %s2550
      %s2553 = sshll.u32 [#allocation2], 4
      %s2554 = int_to_ptr.vmem [resolvable:$true] %s2553
      %2556 = dma.vmem_to_hbm [thread:$0]  %s2554, 32, %s7, [#allocation3]
    $region33: #{vgg_dwt_forward.3} parent=1 // pred_fallthru
      _
    // Predicated region
    $region34: #{vgg_dwt_forward.3} parent=1 // pred_check
      _
    $region35: #{vgg_dwt_forward.3} parent=1 // pred_check_branch
      %2558 = sbr.rel (0) target = $region37
    $region36: #{vgg_dwt_forward.3} parent=1 // pred_region
      %2559 = dma.done [#allocation3], 32
    $region37: #{vgg_dwt_forward.3} parent=1 // pred_fallthru
      _
    %2560 = vsyncpa [#allocation3], 1

</llo_original>
